<compile_context>
chip_gen: v6e
topology: v6e:2x2x1
jax: 0.10.0
libtpu: 0.0.40
codegen_flags: <defaults>
</compile_context>

<pallas_src>
import functools

import jax
import jax.numpy as jnp
from jax.experimental import pallas as pl
from jax.experimental.pallas import tpu as pltpu

LATENT_DIM = 32
H1, H2, H3 = 128, 256, 512
OUTPUT_DIM = 768

# Per-row cost of the four GEMMs (MACs * 2) and total weight/bias bytes
# (bf16 weights + f32 biases) for the CostEstimate.
_FLOPS_PER_ROW = 2 * (LATENT_DIM * H1 + H1 * H2 + H2 * H3 + H3 * OUTPUT_DIM)
_WEIGHT_BYTES = (2 * (LATENT_DIM * H1 + H1 * H2 + H2 * H3 + H3 * OUTPUT_DIM)
                 + 4 * (H1 + H2 + H3 + OUTPUT_DIM))


def _decoder_kernel(
    x_ref,            # (TB, LATENT_DIM)       bf16
    w1_ref, b1_ref,   # (LATENT_DIM, H1) bf16, (1, H1) f32
    w2_ref, b2_ref,   # (H1, H2) bf16,         (1, H2) f32
    w3_ref, b3_ref,   # (H2, H3) bf16,         (1, H3) f32
    w4_ref, b4_ref,   # (H3, OUTPUT_DIM) bf16, (1, OUTPUT_DIM) f32
    o_ref,            # (TB, OUTPUT_DIM)       f32 (or bf16)
):
    # Layer 1: bf16 operands -> f32 accumulate; bias/ReLU in f32; bf16 for next MXU pass.
    h = jnp.dot(x_ref[...], w1_ref[...], preferred_element_type=jnp.float32)
    h = jnp.maximum(h + b1_ref[...], 0.0).astype(jnp.bfloat16)

    # Layer 2 (K=128 only half-fills the 256-deep MXU, but it is <7% of FLOPs).
    h = jnp.dot(h, w2_ref[...], preferred_element_type=jnp.float32)
    h = jnp.maximum(h + b2_ref[...], 0.0).astype(jnp.bfloat16)

    # Layer 3
    h = jnp.dot(h, w3_ref[...], preferred_element_type=jnp.float32)
    h = jnp.maximum(h + b3_ref[...], 0.0).astype(jnp.bfloat16)

    # Layer 4 (no ReLU) — 70% of total FLOPs, fully fills the MXU.
    h = jnp.dot(h, w4_ref[...], preferred_element_type=jnp.float32) + b4_ref[...]

    o_ref[...] = h.astype(o_ref.dtype)


def _round_up(x, m):
    return ((x + m - 1) // m) * m


@functools.partial(jax.jit, static_argnames=("batch_tile", "out_dtype"))
def semantic_decoder(x, params, *, batch_tile=1024, out_dtype=jnp.float32):
    """x: (B, LATENT_DIM) float32 -> (B, OUTPUT_DIM) out_dtype (default f32)."""
    B, D = x.shape
    assert D == LATENT_DIM

    (w1, b1), (w2, b2), (w3, b3), (w4, b4) = params

    # MXU operands in bf16; biases stay f32 (added on the f32 accumulator).
    w1, w2, w3, w4 = (w.astype(jnp.bfloat16) for w in (w1, w2, w3, w4))
    b1, b2, b3, b4 = (b.reshape(1, -1).astype(jnp.float32)
                      for b in (b1, b2, b3, b4))

    # ---- Adaptive batch tiling (B is static under jit) ----------------------
    #  * don't pad tiny batches up to the full default tile,
    #  * keep tiles a multiple of 256 rows (amortizes the ~0.35us/step overhead
    #    and fills the MXU M dimension),
    #  * force >= 2 grid steps when there is enough real work so megacore
    #    ("parallel" batch axis) can shard across both v7x TensorCores.
    tile = min(batch_tile, _round_up(B, 256))
    if B > 256 and pl.cdiv(B, tile) < 2:
        tile = _round_up(pl.cdiv(B, 2), 256)
    num_tiles = pl.cdiv(B, tile)
    padded_B = num_tiles * tile

    x_in = x.astype(jnp.bfloat16)
    if padded_B != B:
        x_in = jnp.pad(x_in, ((0, padded_B - B), (0, 0)))

    # Weights/biases are grid-invariant (index_map always (0, 0)) -> fetched
    # once and resident in VMEM across all batch tiles.  Their double-buffer
    # waste is ~1 MiB; not worth a Buffered(1) override at this VMEM budget.
    full = lambda shape: pl.BlockSpec(shape, lambda i: (0, 0))

    cost = pl.CostEstimate(
        flops=padded_B * _FLOPS_PER_ROW,
        transcendentals=0,
        bytes_accessed=(padded_B * (LATENT_DIM * 2
                                    + OUTPUT_DIM * jnp.dtype(out_dtype).itemsize)
                        + _WEIGHT_BYTES),
    )

    out = pl.pallas_call(
        _decoder_kernel,
        out_shape=jax.ShapeDtypeStruct((padded_B, OUTPUT_DIM), out_dtype),
        grid_spec=pltpu.PrefetchScalarGridSpec(
            num_scalar_prefetch=0,
            grid=(num_tiles,),
            in_specs=[
                pl.BlockSpec((tile, LATENT_DIM), lambda i: (i, 0)),
                full((LATENT_DIM, H1)), full((1, H1)),
                full((H1, H2)), full((1, H2)),
                full((H2, H3)), full((1, H3)),
                full((H3, OUTPUT_DIM)), full((1, OUTPUT_DIM)),
            ],
            out_specs=pl.BlockSpec((tile, OUTPUT_DIM), lambda i: (i, 0)),
        ),
        compiler_params=pltpu.CompilerParams(
            dimension_semantics=("parallel",),
            # Above v5e's 16 MiB / v6e-v7x's 32 MiB scoped defaults; <= ~56 MiB
            # so it still fits v7x's 64 MiB physical VMEM with scratch headroom.
            vmem_limit_bytes=48 << 20,
        ),
        cost_estimate=cost,
    )(x_in, w1, b1, w2, b2, w3, b3, w4, b4)

    if padded_B != B:
        out = out[:B]
    return out


def init_params(key):
    """Deterministic init mimicking PyTorch nn.Linear default (U[-1/sqrt(fan_in), +])."""
    dims = [(LATENT_DIM, H1), (H1, H2), (H2, H3), (H3, OUTPUT_DIM)]
    params = []
    for (fan_in, fan_out) in dims:
        key, kw, kb = jax.random.split(key, 3)
        bound = 1.0 / jnp.sqrt(fan_in)
        w = jax.random.uniform(kw, (fan_in, fan_out), jnp.float32, -bound, bound)
        b = jax.random.uniform(kb, (fan_out,), jnp.float32, -bound, bound)
        params.append((w, b))
    return params


def reference_forward_bf16(x, params):
    """Pure-JAX reference with the same bf16-operand / f32-accumulate pattern."""
    h = x
    for idx, (w, b) in enumerate(params):
        h = jnp.dot(h.astype(jnp.bfloat16), w.astype(jnp.bfloat16),
                    preferred_element_type=jnp.float32) + b
        if idx < len(params) - 1:
            h = jnp.maximum(h, 0.0)
    return h


def reference_forward_f32(x, params):
    h = x
    for idx, (w, b) in enumerate(params):
        h = h @ w + b
        if idx < len(params) - 1:
            h = jnp.maximum(h, 0.0)
    return h


if __name__ == "__main__":
    key = jax.random.PRNGKey(0)
    key, kx1, kx2 = jax.random.split(key, 3)
    params = init_params(key)

    # Test 1: tiny batch -> adaptive tile picks 256 rows (single grid step),
    # exercising the padding path without wasting a full 1024-row tile.
    batch1 = 8
    x1 = jax.random.normal(kx1, (batch1, LATENT_DIM), jnp.float32)
    out1 = jax.block_until_ready(semantic_decoder(x1, params))
    ref1 = reference_forward_bf16(x1, params)
    assert out1.shape == (batch1, OUTPUT_DIM)
    assert jnp.allclose(out1, ref1, atol=1e-2, rtol=1e-2), "mismatch vs bf16 reference (test 1)"
    ref1_f32 = reference_forward_f32(x1, params)
    assert jnp.allclose(out1, ref1_f32, atol=5e-2, rtol=5e-2), "mismatch vs f32 reference (test 1)"

    # Test 2: non-divisible batch -> adaptive logic forces 2 grid steps of 256
    # rows (megacore-friendly), padded rows sliced away.
    batch2 = 300
    x2 = jax.random.normal(kx2, (batch2, LATENT_DIM), jnp.float32)
    out2 = jax.block_until_ready(semantic_decoder(x2, params))
    ref2 = reference_forward_bf16(x2, params)
    assert out2.shape == (batch2, OUTPUT_DIM)
    assert jnp.allclose(out2, ref2, atol=1e-2, rtol=1e-2), "mismatch vs bf16 reference (test 2)"

    # Test 3: bf16-output variant (v6e bandwidth relief), looser tolerance.
    out3 = jax.block_until_ready(
        semantic_decoder(x2, params, out_dtype=jnp.bfloat16))
    assert out3.dtype == jnp.bfloat16 and out3.shape == (batch2, OUTPUT_DIM)
    assert jnp.allclose(out3.astype(jnp.float32), ref2, atol=5e-2, rtol=5e-2), \
        "mismatch vs bf16 reference (test 3)"

    print("KERNEL_OK")
</pallas_src>

<mosaic_0001>
module attributes {stable_mosaic.version = 11 : i64} {
  func.func @_decoder_kernel(%arg0: i32, %arg1: memref<256x32xbf16, #tpu.memory_space<vmem>>, %arg2: memref<32x128xbf16, #tpu.memory_space<vmem>>, %arg3: memref<1x128xf32, #tpu.memory_space<vmem>>, %arg4: memref<128x256xbf16, #tpu.memory_space<vmem>>, %arg5: memref<1x256xf32, #tpu.memory_space<vmem>>, %arg6: memref<256x512xbf16, #tpu.memory_space<vmem>>, %arg7: memref<1x512xf32, #tpu.memory_space<vmem>>, %arg8: memref<512x768xbf16, #tpu.memory_space<vmem>>, %arg9: memref<1x768xf32, #tpu.memory_space<vmem>>, %arg10: memref<256x768xf32, #tpu.memory_space<vmem>>) attributes {dimension_semantics = [#tpu.dimension_semantics<parallel>], iteration_bounds = array<i64: 1>, scalar_prefetch = 0 : i64, scratch_operands = 0 : i64, tpu.core_type = #tpu.core_type<tc>, window_params = [{transform_indices = @transform_0, window_bounds = array<i64: 256, 32>}, {pipeline_mode = #tpu.pipeline_mode<synchronous>, transform_indices = @transform_1, window_bounds = array<i64: 32, 128>}, {pipeline_mode = #tpu.pipeline_mode<synchronous>, transform_indices = @transform_2, window_bounds = array<i64: 1, 128>}, {pipeline_mode = #tpu.pipeline_mode<synchronous>, transform_indices = @transform_3, window_bounds = array<i64: 128, 256>}, {pipeline_mode = #tpu.pipeline_mode<synchronous>, transform_indices = @transform_4, window_bounds = array<i64: 1, 256>}, {pipeline_mode = #tpu.pipeline_mode<synchronous>, transform_indices = @transform_5, window_bounds = array<i64: 256, 512>}, {pipeline_mode = #tpu.pipeline_mode<synchronous>, transform_indices = @transform_6, window_bounds = array<i64: 1, 512>}, {pipeline_mode = #tpu.pipeline_mode<synchronous>, transform_indices = @transform_7, window_bounds = array<i64: 512, 768>}, {pipeline_mode = #tpu.pipeline_mode<synchronous>, transform_indices = @transform_8, window_bounds = array<i64: 1, 768>}, {transform_indices = @transform_9, window_bounds = array<i64: 256, 768>}]} {
    %c0 = arith.constant 0 : index
    %c0_0 = arith.constant 0 : index
    %0 = vector.load %arg1[%c0, %c0_0] : memref<256x32xbf16, #tpu.memory_space<vmem>>, vector<256x32xbf16>
    %c0_1 = arith.constant 0 : index
    %c0_2 = arith.constant 0 : index
    %1 = vector.load %arg2[%c0_1, %c0_2] : memref<32x128xbf16, #tpu.memory_space<vmem>>, vector<32x128xbf16>
    %cst = arith.constant dense<0.000000e+00> : vector<256x128xf32>
    %2 = tpu.matmul %0, %1, %cst {dimension_numbers = #tpu.dot_dimension_numbers<[1], [0], [0], [1], [0, 0, 1, 1], [], []>} : vector<256x32xbf16>, vector<32x128xbf16>, vector<256x128xf32> -> vector<256x128xf32>
    %c0_3 = arith.constant 0 : index
    %c0_4 = arith.constant 0 : index
    %3 = vector.load %arg3[%c0_3, %c0_4] : memref<1x128xf32, #tpu.memory_space<vmem>>, vector<1x128xf32>
    %4 = vector.broadcast %3 : vector<1x128xf32> to vector<256x128xf32>
    %5 = arith.addf %2, %4 : vector<256x128xf32>
    %cst_5 = arith.constant 0.000000e+00 : f32
    %6 = vector.broadcast %cst_5 : f32 to vector<256x128xf32>
    %7 = arith.maximumf %5, %6 : vector<256x128xf32>
    %8 = arith.truncf %7 : vector<256x128xf32> to vector<256x128xbf16>
    %c0_6 = arith.constant 0 : index
    %c0_7 = arith.constant 0 : index
    %9 = vector.load %arg4[%c0_6, %c0_7] : memref<128x256xbf16, #tpu.memory_space<vmem>>, vector<128x256xbf16>
    %cst_8 = arith.constant dense<0.000000e+00> : vector<256x256xf32>
    %10 = tpu.matmul %8, %9, %cst_8 {dimension_numbers = #tpu.dot_dimension_numbers<[1], [0], [0], [1], [0, 0, 1, 1], [], []>} : vector<256x128xbf16>, vector<128x256xbf16>, vector<256x256xf32> -> vector<256x256xf32>
    %c0_9 = arith.constant 0 : index
    %c0_10 = arith.constant 0 : index
    %11 = vector.load %arg5[%c0_9, %c0_10] : memref<1x256xf32, #tpu.memory_space<vmem>>, vector<1x256xf32>
    %12 = vector.broadcast %11 : vector<1x256xf32> to vector<256x256xf32>
    %13 = arith.addf %10, %12 : vector<256x256xf32>
    %cst_11 = arith.constant 0.000000e+00 : f32
    %14 = vector.broadcast %cst_11 : f32 to vector<256x256xf32>
    %15 = arith.maximumf %13, %14 : vector<256x256xf32>
    %16 = arith.truncf %15 : vector<256x256xf32> to vector<256x256xbf16>
    %c0_12 = arith.constant 0 : index
    %c0_13 = arith.constant 0 : index
    %17 = vector.load %arg6[%c0_12, %c0_13] : memref<256x512xbf16, #tpu.memory_space<vmem>>, vector<256x512xbf16>
    %cst_14 = arith.constant dense<0.000000e+00> : vector<256x512xf32>
    %18 = tpu.matmul %16, %17, %cst_14 {dimension_numbers = #tpu.dot_dimension_numbers<[1], [0], [0], [1], [0, 0, 1, 1], [], []>} : vector<256x256xbf16>, vector<256x512xbf16>, vector<256x512xf32> -> vector<256x512xf32>
    %c0_15 = arith.constant 0 : index
    %c0_16 = arith.constant 0 : index
    %19 = vector.load %arg7[%c0_15, %c0_16] : memref<1x512xf32, #tpu.memory_space<vmem>>, vector<1x512xf32>
    %20 = vector.broadcast %19 : vector<1x512xf32> to vector<256x512xf32>
    %21 = arith.addf %18, %20 : vector<256x512xf32>
    %cst_17 = arith.constant 0.000000e+00 : f32
    %22 = vector.broadcast %cst_17 : f32 to vector<256x512xf32>
    %23 = arith.maximumf %21, %22 : vector<256x512xf32>
    %24 = arith.truncf %23 : vector<256x512xf32> to vector<256x512xbf16>
    %c0_18 = arith.constant 0 : index
    %c0_19 = arith.constant 0 : index
    %25 = vector.load %arg8[%c0_18, %c0_19] : memref<512x768xbf16, #tpu.memory_space<vmem>>, vector<512x768xbf16>
    %cst_20 = arith.constant dense<0.000000e+00> : vector<256x768xf32>
    %26 = tpu.matmul %24, %25, %cst_20 {dimension_numbers = #tpu.dot_dimension_numbers<[1], [0], [0], [1], [0, 0, 1, 1], [], []>} : vector<256x512xbf16>, vector<512x768xbf16>, vector<256x768xf32> -> vector<256x768xf32>
    %c0_21 = arith.constant 0 : index
    %c0_22 = arith.constant 0 : index
    %27 = vector.load %arg9[%c0_21, %c0_22] : memref<1x768xf32, #tpu.memory_space<vmem>>, vector<1x768xf32>
    %28 = vector.broadcast %27 : vector<1x768xf32> to vector<256x768xf32>
    %29 = arith.addf %26, %28 : vector<256x768xf32>
    %c0_23 = arith.constant 0 : index
    %c0_24 = arith.constant 0 : index
    %30 = vector.load %arg10[%c0_23, %c0_24] : memref<256x768xf32, #tpu.memory_space<vmem>>, vector<256x768xf32>
    tpu.vector_store %arg10[%c0_23, %c0_24], %29 {strides = array<i32>} : memref<256x768xf32, #tpu.memory_space<vmem>>, vector<256x768xf32>,
    return
  }
  func.func @transform_0(%arg0: i32) -> (i32, i32) {
    %c0_i32 = arith.constant 0 : i32
    %c0_i32_0 = arith.constant 0 : i32
    return %arg0, %c0_i32 : i32, i32
  }
  func.func @transform_1(%arg0: i32) -> (i32, i32) {
    %c0_i32 = arith.constant 0 : i32
    %c0_i32_0 = arith.constant 0 : i32
    %c0_i32_1 = arith.constant 0 : i32
    return %c0_i32, %c0_i32_0 : i32, i32
  }
  func.func @transform_2(%arg0: i32) -> (i32, i32) {
    %c0_i32 = arith.constant 0 : i32
    %c0_i32_0 = arith.constant 0 : i32
    %c0_i32_1 = arith.constant 0 : i32
    return %c0_i32, %c0_i32_0 : i32, i32
  }
  func.func @transform_3(%arg0: i32) -> (i32, i32) {
    %c0_i32 = arith.constant 0 : i32
    %c0_i32_0 = arith.constant 0 : i32
    %c0_i32_1 = arith.constant 0 : i32
    return %c0_i32, %c0_i32_0 : i32, i32
  }
  func.func @transform_4(%arg0: i32) -> (i32, i32) {
    %c0_i32 = arith.constant 0 : i32
    %c0_i32_0 = arith.constant 0 : i32
    %c0_i32_1 = arith.constant 0 : i32
    return %c0_i32, %c0_i32_0 : i32, i32
  }
  func.func @transform_5(%arg0: i32) -> (i32, i32) {
    %c0_i32 = arith.constant 0 : i32
    %c0_i32_0 = arith.constant 0 : i32
    %c0_i32_1 = arith.constant 0 : i32
    return %c0_i32, %c0_i32_0 : i32, i32
  }
  func.func @transform_6(%arg0: i32) -> (i32, i32) {
    %c0_i32 = arith.constant 0 : i32
    %c0_i32_0 = arith.constant 0 : i32
    %c0_i32_1 = arith.constant 0 : i32
    return %c0_i32, %c0_i32_0 : i32, i32
  }
  func.func @transform_7(%arg0: i32) -> (i32, i32) {
    %c0_i32 = arith.constant 0 : i32
    %c0_i32_0 = arith.constant 0 : i32
    %c0_i32_1 = arith.constant 0 : i32
    return %c0_i32, %c0_i32_0 : i32, i32
  }
  func.func @transform_8(%arg0: i32) -> (i32, i32) {
    %c0_i32 = arith.constant 0 : i32
    %c0_i32_0 = arith.constant 0 : i32
    %c0_i32_1 = arith.constant 0 : i32
    return %c0_i32, %c0_i32_0 : i32, i32
  }
  func.func @transform_9(%arg0: i32) -> (i32, i32) {
    %c0_i32 = arith.constant 0 : i32
    %c0_i32_0 = arith.constant 0 : i32
    return %arg0, %c0_i32 : i32, i32
  }
}

</mosaic_0001>

<llo_original>
// kernel: semantic_decoder.1
$region0: #{semantic_decoder.1}
  #allocation0 [shape = 'u32[]', space=smem, size = 0x4, offset = 0x4, fixed_abs, tag = 'smem constant byte address 0x4 - core index']
  #allocation1 [shape = 'u32[144,128]{1,0:T(1,128)}', space=vmem, size = 0x12000, scoped, tag = 'internal scratch']
  %s0 = inlined_call_operand.vmem [shape: bf16[256,32], index: 0, kind: input, shape index: {}]
  %s1 = inlined_call_operand.vmem [shape: bf16[32,128], index: 1, kind: input, shape index: {}]
  %s2 = inlined_call_operand.vmem [shape: f32[1,128], index: 2, kind: input, shape index: {}]
  %s3 = inlined_call_operand.vmem [shape: bf16[128,256], index: 3, kind: input, shape index: {}]
  %s4 = inlined_call_operand.vmem [shape: f32[1,256], index: 4, kind: input, shape index: {}]
  %s5 = inlined_call_operand.vmem [shape: bf16[256,512], index: 5, kind: input, shape index: {}]
  %s6 = inlined_call_operand.vmem [shape: f32[1,512], index: 6, kind: input, shape index: {}]
  %s7 = inlined_call_operand.vmem [shape: bf16[512,768], index: 7, kind: input, shape index: {}]
  %s8 = inlined_call_operand.vmem [shape: f32[1,768], index: 8, kind: input, shape index: {}]
  %s9 = inlined_call_operand.vmem [shape: f32[256,768], index: 9, kind: output, shape index: {}]
  %s10 = sld [smem:[#allocation0]]
  $region46: #{semantic_decoder.1} parent=0
    _
  %s12 = ssub.s32 1, %s10
  %s13 = scalar_select 0, %s12, %s10
  // Predicated region
  $region2: #{semantic_decoder.1} parent=0 // pred_check
    _
  $region3: #{semantic_decoder.1} parent=0 // pred_check_branch
    %15 = sbr.rel (0) target = $region5
  $region4: #{semantic_decoder.1} parent=0 // pred_region
    _
  $region5: #{semantic_decoder.1} parent=0 // pred_fallthru
    _
  // Predicated region
  $region6: #{semantic_decoder.1} parent=0 // pred_check
    _
  $region7: #{semantic_decoder.1} parent=0 // pred_check_branch
    %17 = sbr.rel (0) target = $region9
  $region8: #{semantic_decoder.1} parent=0 // pred_region
    _
  $region9: #{semantic_decoder.1} parent=0 // pred_fallthru
    _
  // Predicated region
  $region10: #{semantic_decoder.1} parent=0 // pred_check
    _
  $region11: #{semantic_decoder.1} parent=0 // pred_check_branch
    %19 = sbr.rel (0) target = $region13
  $region12: #{semantic_decoder.1} parent=0 // pred_region
    _
  $region13: #{semantic_decoder.1} parent=0 // pred_fallthru
    _
  // Predicated region
  $region14: #{semantic_decoder.1} parent=0 // pred_check
    _
  $region15: #{semantic_decoder.1} parent=0 // pred_check_branch
    %21 = sbr.rel (0) target = $region17
  $region16: #{semantic_decoder.1} parent=0 // pred_region
    _
  $region17: #{semantic_decoder.1} parent=0 // pred_fallthru
    _
  // Predicated region
  $region18: #{semantic_decoder.1} parent=0 // pred_check
    _
  $region19: #{semantic_decoder.1} parent=0 // pred_check_branch
    %23 = sbr.rel (0) target = $region21
  $region20: #{semantic_decoder.1} parent=0 // pred_region
    _
  $region21: #{semantic_decoder.1} parent=0 // pred_fallthru
    _
  // Predicated region
  $region22: #{semantic_decoder.1} parent=0 // pred_check
    _
  $region23: #{semantic_decoder.1} parent=0 // pred_check_branch
    %25 = sbr.rel (0) target = $region25
  $region24: #{semantic_decoder.1} parent=0 // pred_region
    _
  $region25: #{semantic_decoder.1} parent=0 // pred_fallthru
    _
  // Predicated region
  $region26: #{semantic_decoder.1} parent=0 // pred_check
    _
  $region27: #{semantic_decoder.1} parent=0 // pred_check_branch
    %27 = sbr.rel (0) target = $region29
  $region28: #{semantic_decoder.1} parent=0 // pred_region
    _
  $region29: #{semantic_decoder.1} parent=0 // pred_fallthru
    _
  // Predicated region
  $region30: #{semantic_decoder.1} parent=0 // pred_check
    _
  $region31: #{semantic_decoder.1} parent=0 // pred_check_branch
    %29 = sbr.rel (0) target = $region33
  $region32: #{semantic_decoder.1} parent=0 // pred_region
    _
  $region33: #{semantic_decoder.1} parent=0 // pred_fallthru
    _
  // Predicated region
  $region34: #{semantic_decoder.1} parent=0 // pred_check
    _
  $region35: #{semantic_decoder.1} parent=0 // pred_check_branch
    %31 = sbr.rel (0) target = $region37
  $region36: #{semantic_decoder.1} parent=0 // pred_region
    _
  $region37: #{semantic_decoder.1} parent=0 // pred_fallthru
    _
  %v33 = vld [vmem:[%s0] sm:$0xf]
  %v34 = vld [vmem:[%s0 + $0x4] sm:$0xf]
  %v35 = vld [vmem:[%s0 + $0x8] sm:$0xf]
  %v36 = vld [vmem:[%s0 + $0xc] sm:$0xf]
  %v37 = vld [vmem:[%s0 + $0x10] sm:$0xf]
  %v38 = vld [vmem:[%s0 + $0x14] sm:$0xf]
  %v39 = vld [vmem:[%s0 + $0x18] sm:$0xf]
  %v40 = vld [vmem:[%s0 + $0x1c] sm:$0xf]
  %v41 = vld [vmem:[%s0 + $0x20] sm:$0xf]
  %v42 = vld [vmem:[%s0 + $0x24] sm:$0xf]
  %v43 = vld [vmem:[%s0 + $0x28] sm:$0xf]
  %v44 = vld [vmem:[%s0 + $0x2c] sm:$0xf]
  %v45 = vld [vmem:[%s0 + $0x30] sm:$0xf]
  %v46 = vld [vmem:[%s0 + $0x34] sm:$0xf]
  %v47 = vld [vmem:[%s0 + $0x38] sm:$0xf]
  %v48 = vld [vmem:[%s0 + $0x3c] sm:$0xf]
  %v49 = vld [vmem:[%s0 + $0x40] sm:$0xf]
  %v50 = vld [vmem:[%s0 + $0x44] sm:$0xf]
  %v51 = vld [vmem:[%s0 + $0x48] sm:$0xf]
  %v52 = vld [vmem:[%s0 + $0x4c] sm:$0xf]
  %v53 = vld [vmem:[%s0 + $0x50] sm:$0xf]
  %v54 = vld [vmem:[%s0 + $0x54] sm:$0xf]
  %v55 = vld [vmem:[%s0 + $0x58] sm:$0xf]
  %v56 = vld [vmem:[%s0 + $0x5c] sm:$0xf]
  %v57 = vld [vmem:[%s0 + $0x60] sm:$0xf]
  %v58 = vld [vmem:[%s0 + $0x64] sm:$0xf]
  %v59 = vld [vmem:[%s0 + $0x68] sm:$0xf]
  %v60 = vld [vmem:[%s0 + $0x6c] sm:$0xf]
  %v61 = vld [vmem:[%s0 + $0x70] sm:$0xf]
  %v62 = vld [vmem:[%s0 + $0x74] sm:$0xf]
  %v63 = vld [vmem:[%s0 + $0x78] sm:$0xf]
  %v64 = vld [vmem:[%s0 + $0x7c] sm:$0xf]
  %v65 = vld [vmem:[%s1] sm:$0xf]
  %v66 = vld [vmem:[%s1 + $0x4] sm:$0xf]
  %v67 = vld [vmem:[%s1 + $0x8] sm:$0xf]
  %v68 = vld [vmem:[%s1 + $0xc] sm:$0xf]
  %v69 = vld [vmem:[%s2] sm:$0x1]
  %v71 = vlaneseq
  %v72 = vshrl.u32 %v71, 7
  %v73 = vsub.s32 0, %v72
  %v74 = vrot.slane %v69, %v73
  %v108 = vunpack.c.l.b16 %v33
  %v109 = vunpack.c.l.b16 %v34
  %v110 = vunpack.c.l.b16 %v35
  %v111 = vunpack.c.l.b16 %v36
  %v112 = vunpack.c.l.b16 %v37
  %v113 = vunpack.c.l.b16 %v38
  %v114 = vunpack.c.l.b16 %v39
  %v115 = vunpack.c.l.b16 %v40
  %v116 = vunpack.c.l.b16 %v41
  %v117 = vunpack.c.l.b16 %v42
  %v118 = vunpack.c.l.b16 %v43
  %v119 = vunpack.c.l.b16 %v44
  %v120 = vunpack.c.l.b16 %v45
  %v121 = vunpack.c.l.b16 %v46
  %v122 = vunpack.c.l.b16 %v47
  %v123 = vunpack.c.l.b16 %v48
  %v124 = vunpack.c.l.b16 %v49
  %v125 = vunpack.c.l.b16 %v50
  %v126 = vunpack.c.l.b16 %v51
  %v127 = vunpack.c.l.b16 %v52
  %v128 = vunpack.c.l.b16 %v53
  %v129 = vunpack.c.l.b16 %v54
  %v130 = vunpack.c.l.b16 %v55
  %v131 = vunpack.c.l.b16 %v56
  %v132 = vunpack.c.l.b16 %v57
  %v133 = vunpack.c.l.b16 %v58
  %v134 = vunpack.c.l.b16 %v59
  %v135 = vunpack.c.l.b16 %v60
  %v136 = vunpack.c.l.b16 %v61
  %v137 = vunpack.c.l.b16 %v62
  %v138 = vunpack.c.l.b16 %v63
  %v139 = vunpack.c.l.b16 %v64
  %v140 = vpack.c.b16 %v109, %v108
  %v141 = vpack.c.b16 %v111, %v110
  %v142 = vpack.c.b16 %v113, %v112
  %v143 = vpack.c.b16 %v115, %v114
  %v144 = vpack.c.b16 %v117, %v116
  %v145 = vpack.c.b16 %v119, %v118
  %v146 = vpack.c.b16 %v121, %v120
  %v147 = vpack.c.b16 %v123, %v122
  %v148 = vpack.c.b16 %v125, %v124
  %v149 = vpack.c.b16 %v127, %v126
  %v150 = vpack.c.b16 %v129, %v128
  %v151 = vpack.c.b16 %v131, %v130
  %v152 = vpack.c.b16 %v133, %v132
  %v153 = vpack.c.b16 %v135, %v134
  %v154 = vpack.c.b16 %v137, %v136
  %v155 = vpack.c.b16 %v139, %v138
  %v160 = vunpack.c.l.b16 %v65
  %v161 = vunpack.c.l.b16 %v66
  %v162 = vunpack.c.l.b16 %v67
  %v163 = vunpack.c.l.b16 %v68
  %v164 = vpack.c.b16 %v161, %v160
  %v165 = vpack.c.b16 %v163, %v162
  %vm168 = vcmask 261120
  %v170 = vsel %vm168, %v140, 0
  %v173 = vsel %vm168, %v141, 0
  %v176 = vsel %vm168, %v142, 0
  %v179 = vsel %vm168, %v143, 0
  %v182 = vsel %vm168, %v144, 0
  %v185 = vsel %vm168, %v145, 0
  %v188 = vsel %vm168, %v146, 0
  %v191 = vsel %vm168, %v147, 0
  %v194 = vsel %vm168, %v148, 0
  %v197 = vsel %vm168, %v149, 0
  %v200 = vsel %vm168, %v150, 0
  %v203 = vsel %vm168, %v151, 0
  %v206 = vsel %vm168, %v152, 0
  %v209 = vsel %vm168, %v153, 0
  %v212 = vsel %vm168, %v154, 0
  %v215 = vsel %vm168, %v155, 0
  %217 = vmatprep.subr.bf16.mxu0 0
  %218 = vmatpush1.bf16.msra.mxu0 0
  %219 = vmatprep.subr.bf16.mxu0 0
  %220 = vmatpush1.bf16.msra.mxu0 0
  %221 = vmatprep.subr.bf16.mxu0 0
  %222 = vmatpush1.bf16.msra.mxu0 0
  %223 = vmatprep.subr.bf16.mxu0 0
  %224 = vmatpush1.bf16.msra.mxu0 0
  %225 = vmatprep.subr.bf16.mxu0 0
  %226 = vmatpush1.bf16.msra.mxu0 0
  %227 = vmatprep.subr.bf16.mxu0 0
  %228 = vmatpush1.bf16.msra.mxu0 0
  %229 = vmatprep.subr.bf16.mxu0 0
  %230 = vmatpush1.bf16.msra.mxu0 %v165
  %231 = vmatprep.subr.bf16.mxu0 0
  %232 = vmatpush1.bf16.msra.mxu0 %v164
  %233 = vmatprep.subr.bf16.mxu0 0
  %234 = vmatpush2.bf16.msra.mxu0 0
  %235 = vmatprep.subr.bf16.mxu0 0
  %236 = vmatpush2.bf16.msra.mxu0 0
  %237 = vmatprep.subr.bf16.mxu0 0
  %238 = vmatpush2.bf16.msra.mxu0 0
  %239 = vmatprep.subr.bf16.mxu0 0
  %240 = vmatpush2.bf16.msra.mxu0 0
  %241 = vmatprep.subr.bf16.mxu0 0
  %242 = vmatpush2.bf16.msra.mxu0 0
  %243 = vmatprep.subr.bf16.mxu0 0
  %244 = vmatpush2.bf16.msra.mxu0 0
  %245 = vmatprep.subr.bf16.mxu0 0
  %246 = vmatpush2.bf16.msra.mxu0 0
  %247 = vmatprep.subr.bf16.mxu0 0
  %248 = vmatpush2.bf16.msra.mxu0 0
  %249 = vmatprep.mubr.bf16.mxu0 0
  %250 = vmatmul.mubr.bf16.gmra.mxu0 %v170
  %v251 = vpop.f32.mrf.mxu0
  %v252 = vadd.f32 %v74, %v251
  %v253 = vpop.f32.mrf.mxu0
  %v254 = vpop.f32.mrf.mxu0
  %v255 = vadd.f32 %v74, %v254
  %v256 = vpop.f32.mrf.mxu0
  %257 = vmatprep.mubr.bf16.mxu0 0
  %258 = vmatmul.mubr.bf16.gmra.mxu0 %v173
  %v259 = vpop.f32.mrf.mxu0
  %v260 = vadd.f32 %v74, %v259
  %v261 = vpop.f32.mrf.mxu0
  %v262 = vpop.f32.mrf.mxu0
  %v263 = vadd.f32 %v74, %v262
  %v264 = vpop.f32.mrf.mxu0
  %265 = vmatprep.mubr.bf16.mxu0 0
  %266 = vmatmul.mubr.bf16.gmra.mxu0 %v176
  %v267 = vpop.f32.mrf.mxu0
  %v268 = vadd.f32 %v74, %v267
  %v269 = vpop.f32.mrf.mxu0
  %v270 = vpop.f32.mrf.mxu0
  %v271 = vadd.f32 %v74, %v270
  %v272 = vpop.f32.mrf.mxu0
  %273 = vmatprep.mubr.bf16.mxu0 0
  %274 = vmatmul.mubr.bf16.gmra.mxu0 %v179
  %v275 = vpop.f32.mrf.mxu0
  %v276 = vadd.f32 %v74, %v275
  %v277 = vpop.f32.mrf.mxu0
  %v278 = vpop.f32.mrf.mxu0
  %v279 = vadd.f32 %v74, %v278
  %v280 = vpop.f32.mrf.mxu0
  %281 = vmatprep.mubr.bf16.mxu0 0
  %282 = vmatmul.mubr.bf16.gmra.mxu0 %v182
  %v283 = vpop.f32.mrf.mxu0
  %v284 = vadd.f32 %v74, %v283
  %v285 = vpop.f32.mrf.mxu0
  %v286 = vpop.f32.mrf.mxu0
  %v287 = vadd.f32 %v74, %v286
  %v288 = vpop.f32.mrf.mxu0
  %289 = vmatprep.mubr.bf16.mxu0 0
  %290 = vmatmul.mubr.bf16.gmra.mxu0 %v185
  %v291 = vpop.f32.mrf.mxu0
  %v292 = vadd.f32 %v74, %v291
  %v293 = vpop.f32.mrf.mxu0
  %v294 = vpop.f32.mrf.mxu0
  %v295 = vadd.f32 %v74, %v294
  %v296 = vpop.f32.mrf.mxu0
  %297 = vmatprep.mubr.bf16.mxu0 0
  %298 = vmatmul.mubr.bf16.gmra.mxu0 %v188
  %v299 = vpop.f32.mrf.mxu0
  %v300 = vadd.f32 %v74, %v299
  %v301 = vpop.f32.mrf.mxu0
  %v302 = vpop.f32.mrf.mxu0
  %v303 = vadd.f32 %v74, %v302
  %v304 = vpop.f32.mrf.mxu0
  %305 = vmatprep.mubr.bf16.mxu0 0
  %306 = vmatmul.mubr.bf16.gmra.mxu0 %v191
  %v307 = vpop.f32.mrf.mxu0
  %v308 = vadd.f32 %v74, %v307
  %v309 = vpop.f32.mrf.mxu0
  %v310 = vpop.f32.mrf.mxu0
  %v311 = vadd.f32 %v74, %v310
  %v312 = vpop.f32.mrf.mxu0
  %313 = vmatprep.mubr.bf16.mxu0 0
  %314 = vmatmul.mubr.bf16.gmra.mxu0 %v194
  %v315 = vpop.f32.mrf.mxu0
  %v316 = vadd.f32 %v74, %v315
  %v317 = vpop.f32.mrf.mxu0
  %v318 = vpop.f32.mrf.mxu0
  %v319 = vadd.f32 %v74, %v318
  %v320 = vpop.f32.mrf.mxu0
  %321 = vmatprep.mubr.bf16.mxu0 0
  %322 = vmatmul.mubr.bf16.gmra.mxu0 %v197
  %v323 = vpop.f32.mrf.mxu0
  %v324 = vadd.f32 %v74, %v323
  %v325 = vpop.f32.mrf.mxu0
  %v326 = vpop.f32.mrf.mxu0
  %v327 = vadd.f32 %v74, %v326
  %v328 = vpop.f32.mrf.mxu0
  %329 = vmatprep.mubr.bf16.mxu0 0
  %330 = vmatmul.mubr.bf16.gmra.mxu0 %v200
  %v331 = vpop.f32.mrf.mxu0
  %v332 = vadd.f32 %v74, %v331
  %v333 = vpop.f32.mrf.mxu0
  %v334 = vpop.f32.mrf.mxu0
  %v335 = vadd.f32 %v74, %v334
  %v336 = vpop.f32.mrf.mxu0
  %337 = vmatprep.mubr.bf16.mxu0 0
  %338 = vmatmul.mubr.bf16.gmra.mxu0 %v203
  %v339 = vpop.f32.mrf.mxu0
  %v340 = vadd.f32 %v74, %v339
  %v341 = vpop.f32.mrf.mxu0
  %v342 = vpop.f32.mrf.mxu0
  %v343 = vadd.f32 %v74, %v342
  %v344 = vpop.f32.mrf.mxu0
  %345 = vmatprep.mubr.bf16.mxu0 0
  %346 = vmatmul.mubr.bf16.gmra.mxu0 %v206
  %v347 = vpop.f32.mrf.mxu0
  %v348 = vadd.f32 %v74, %v347
  %v349 = vpop.f32.mrf.mxu0
  %v350 = vpop.f32.mrf.mxu0
  %v351 = vadd.f32 %v74, %v350
  %v352 = vpop.f32.mrf.mxu0
  %353 = vmatprep.mubr.bf16.mxu0 0
  %354 = vmatmul.mubr.bf16.gmra.mxu0 %v209
  %v355 = vpop.f32.mrf.mxu0
  %v356 = vadd.f32 %v74, %v355
  %v357 = vpop.f32.mrf.mxu0
  %v358 = vpop.f32.mrf.mxu0
  %v359 = vadd.f32 %v74, %v358
  %v360 = vpop.f32.mrf.mxu0
  %361 = vmatprep.mubr.bf16.mxu0 0
  %362 = vmatmul.mubr.bf16.gmra.mxu0 %v212
  %v363 = vpop.f32.mrf.mxu0
  %v364 = vadd.f32 %v74, %v363
  %v365 = vpop.f32.mrf.mxu0
  %v366 = vpop.f32.mrf.mxu0
  %v367 = vadd.f32 %v74, %v366
  %v368 = vpop.f32.mrf.mxu0
  %369 = vmatprep.mubr.bf16.mxu0 0
  %370 = vmatmul.mubr.bf16.gmra.mxu0 %v215
  %v371 = vpop.f32.mrf.mxu0
  %v372 = vadd.f32 %v74, %v371
  %v373 = vpop.f32.mrf.mxu0
  %v374 = vpop.f32.mrf.mxu0
  %v375 = vadd.f32 %v74, %v374
  %v376 = vpop.f32.mrf.mxu0
  %377 = vdwg.mxu0
  %v378 = vmax.f32 %v252, 0.0
  %v379 = vmax.f32 %v255, 0.0
  %v380 = vmax.f32 %v260, 0.0
  %v381 = vmax.f32 %v263, 0.0
  %v382 = vmax.f32 %v268, 0.0
  %v383 = vmax.f32 %v271, 0.0
  %v384 = vmax.f32 %v276, 0.0
  %v385 = vmax.f32 %v279, 0.0
  %v386 = vmax.f32 %v284, 0.0
  %v387 = vmax.f32 %v287, 0.0
  %v388 = vmax.f32 %v292, 0.0
  %v389 = vmax.f32 %v295, 0.0
  %v390 = vmax.f32 %v300, 0.0
  %v391 = vmax.f32 %v303, 0.0
  %v392 = vmax.f32 %v308, 0.0
  %v393 = vmax.f32 %v311, 0.0
  %v394 = vmax.f32 %v316, 0.0
  %v395 = vmax.f32 %v319, 0.0
  %v396 = vmax.f32 %v324, 0.0
  %v397 = vmax.f32 %v327, 0.0
  %v398 = vmax.f32 %v332, 0.0
  %v399 = vmax.f32 %v335, 0.0
  %v400 = vmax.f32 %v340, 0.0
  %v401 = vmax.f32 %v343, 0.0
  %v402 = vmax.f32 %v348, 0.0
  %v403 = vmax.f32 %v351, 0.0
  %v404 = vmax.f32 %v356, 0.0
  %v405 = vmax.f32 %v359, 0.0
  %v406 = vmax.f32 %v364, 0.0
  %v407 = vmax.f32 %v367, 0.0
  %v408 = vmax.f32 %v372, 0.0
  %v409 = vmax.f32 %v375, 0.0
  %v410 = vpack.c.bf16 %v379, %v378
  %v411 = vpack.c.bf16 %v381, %v380
  %v412 = vpack.c.bf16 %v383, %v382
  %v413 = vpack.c.bf16 %v385, %v384
  %v414 = vpack.c.bf16 %v387, %v386
  %v415 = vpack.c.bf16 %v389, %v388
  %v416 = vpack.c.bf16 %v391, %v390
  %v417 = vpack.c.bf16 %v393, %v392
  %v418 = vpack.c.bf16 %v395, %v394
  %v419 = vpack.c.bf16 %v397, %v396
  %v420 = vpack.c.bf16 %v399, %v398
  %v421 = vpack.c.bf16 %v401, %v400
  %v422 = vpack.c.bf16 %v403, %v402
  %v423 = vpack.c.bf16 %v405, %v404
  %v424 = vpack.c.bf16 %v407, %v406
  %v425 = vpack.c.bf16 %v409, %v408
  %v426 = vld [vmem:[%s3] sm:$0xff]
  %v427 = vld [vmem:[%s3 + $0x8] sm:$0xff]
  %v428 = vld [vmem:[%s3 + $0x10] sm:$0xff]
  %v429 = vld [vmem:[%s3 + $0x18] sm:$0xff]
  %v430 = vld [vmem:[%s3 + $0x20] sm:$0xff]
  %v431 = vld [vmem:[%s3 + $0x28] sm:$0xff]
  %v432 = vld [vmem:[%s3 + $0x30] sm:$0xff]
  %v433 = vld [vmem:[%s3 + $0x38] sm:$0xff]
  %v434 = vld [vmem:[%s3 + $0x40] sm:$0xff]
  %v435 = vld [vmem:[%s3 + $0x48] sm:$0xff]
  %v436 = vld [vmem:[%s3 + $0x50] sm:$0xff]
  %v437 = vld [vmem:[%s3 + $0x58] sm:$0xff]
  %v438 = vld [vmem:[%s3 + $0x60] sm:$0xff]
  %v439 = vld [vmem:[%s3 + $0x68] sm:$0xff]
  %v440 = vld [vmem:[%s3 + $0x70] sm:$0xff]
  %v441 = vld [vmem:[%s3 + $0x78] sm:$0xff]
  %v442 = vld [vmem:[%s4] sm:$0x3]
  %v444 = vlaneseq
  %v445 = vshrl.u32 %v444, 7
  %v446 = vsub.s32 0, %v445
  %v447 = vrot.slane %v442, %v446
  %v448 = vlaneseq
  %v449 = vshrl.u32 %v448, 7
  %v450 = vsub.s32 1, %v449
  %v451 = vrot.slane %v442, %v450
  %v470 = vunpack.c.l.b16 %v426
  %v471 = vunpack.c.h.b16 %v426
  %v472 = vunpack.c.l.b16 %v427
  %v473 = vunpack.c.h.b16 %v427
  %v474 = vunpack.c.l.b16 %v428
  %v475 = vunpack.c.h.b16 %v428
  %v476 = vunpack.c.l.b16 %v429
  %v477 = vunpack.c.h.b16 %v429
  %v478 = vunpack.c.l.b16 %v430
  %v479 = vunpack.c.h.b16 %v430
  %v480 = vunpack.c.l.b16 %v431
  %v481 = vunpack.c.h.b16 %v431
  %v482 = vunpack.c.l.b16 %v432
  %v483 = vunpack.c.h.b16 %v432
  %v484 = vunpack.c.l.b16 %v433
  %v485 = vunpack.c.h.b16 %v433
  %v486 = vunpack.c.l.b16 %v434
  %v487 = vunpack.c.h.b16 %v434
  %v488 = vunpack.c.l.b16 %v435
  %v489 = vunpack.c.h.b16 %v435
  %v490 = vunpack.c.l.b16 %v436
  %v491 = vunpack.c.h.b16 %v436
  %v492 = vunpack.c.l.b16 %v437
  %v493 = vunpack.c.h.b16 %v437
  %v494 = vunpack.c.l.b16 %v438
  %v495 = vunpack.c.h.b16 %v438
  %v496 = vunpack.c.l.b16 %v439
  %v497 = vunpack.c.h.b16 %v439
  %v498 = vunpack.c.l.b16 %v440
  %v499 = vunpack.c.h.b16 %v440
  %v500 = vunpack.c.l.b16 %v441
  %v501 = vunpack.c.h.b16 %v441
  %v502 = vpack.c.b16 %v472, %v470
  %v503 = vpack.c.b16 %v473, %v471
  %v504 = vpack.c.b16 %v476, %v474
  %v505 = vpack.c.b16 %v477, %v475
  %v506 = vpack.c.b16 %v480, %v478
  %v507 = vpack.c.b16 %v481, %v479
  %v508 = vpack.c.b16 %v484, %v482
  %v509 = vpack.c.b16 %v485, %v483
  %v510 = vpack.c.b16 %v488, %v486
  %v511 = vpack.c.b16 %v489, %v487
  %v512 = vpack.c.b16 %v492, %v490
  %v513 = vpack.c.b16 %v493, %v491
  %v514 = vpack.c.b16 %v496, %v494
  %v515 = vpack.c.b16 %v497, %v495
  %v516 = vpack.c.b16 %v500, %v498
  %v517 = vpack.c.b16 %v501, %v499
  %534 = vmatprep.subr.bf16.mxu0 %v517
  %535 = vmatpush1.bf16.msra.mxu0 %v516
  %536 = vmatprep.subr.bf16.mxu0 %v515
  %537 = vmatpush1.bf16.msra.mxu0 %v514
  %538 = vmatprep.subr.bf16.mxu0 %v513
  %539 = vmatpush1.bf16.msra.mxu0 %v512
  %540 = vmatprep.subr.bf16.mxu0 %v511
  %541 = vmatpush1.bf16.msra.mxu0 %v510
  %542 = vmatprep.subr.bf16.mxu0 %v509
  %543 = vmatpush1.bf16.msra.mxu0 %v508
  %544 = vmatprep.subr.bf16.mxu0 %v507
  %545 = vmatpush1.bf16.msra.mxu0 %v506
  %546 = vmatprep.subr.bf16.mxu0 %v505
  %547 = vmatpush1.bf16.msra.mxu0 %v504
  %548 = vmatprep.subr.bf16.mxu0 %v503
  %549 = vmatpush1.bf16.msra.mxu0 %v502
  %550 = vmatprep.subr.bf16.mxu0 0
  %551 = vmatpush2.bf16.msra.mxu0 0
  %552 = vmatprep.subr.bf16.mxu0 0
  %553 = vmatpush2.bf16.msra.mxu0 0
  %554 = vmatprep.subr.bf16.mxu0 0
  %555 = vmatpush2.bf16.msra.mxu0 0
  %556 = vmatprep.subr.bf16.mxu0 0
  %557 = vmatpush2.bf16.msra.mxu0 0
  %558 = vmatprep.subr.bf16.mxu0 0
  %559 = vmatpush2.bf16.msra.mxu0 0
  %560 = vmatprep.subr.bf16.mxu0 0
  %561 = vmatpush2.bf16.msra.mxu0 0
  %562 = vmatprep.subr.bf16.mxu0 0
  %563 = vmatpush2.bf16.msra.mxu0 0
  %564 = vmatprep.subr.bf16.mxu0 0
  %565 = vmatpush2.bf16.msra.mxu0 0
  %566 = vmatprep.mubr.bf16.mxu0 0
  %567 = vmatmul.mubr.bf16.gmra.mxu0 %v410
  %v568 = vpop.f32.mrf.mxu0
  %v569 = vadd.f32 %v447, %v568
  %v570 = vpop.f32.mrf.mxu0
  %v571 = vadd.f32 %v451, %v570
  %v572 = vpop.f32.mrf.mxu0
  %v573 = vadd.f32 %v447, %v572
  %v574 = vpop.f32.mrf.mxu0
  %v575 = vadd.f32 %v451, %v574
  %576 = vmatprep.mubr.bf16.mxu0 0
  %577 = vmatmul.mubr.bf16.gmra.mxu0 %v411
  %v578 = vpop.f32.mrf.mxu0
  %v579 = vadd.f32 %v447, %v578
  %v580 = vpop.f32.mrf.mxu0
  %v581 = vadd.f32 %v451, %v580
  %v582 = vpop.f32.mrf.mxu0
  %v583 = vadd.f32 %v447, %v582
  %v584 = vpop.f32.mrf.mxu0
  %v585 = vadd.f32 %v451, %v584
  %586 = vmatprep.mubr.bf16.mxu0 0
  %587 = vmatmul.mubr.bf16.gmra.mxu0 %v412
  %v588 = vpop.f32.mrf.mxu0
  %v589 = vadd.f32 %v447, %v588
  %v590 = vpop.f32.mrf.mxu0
  %v591 = vadd.f32 %v451, %v590
  %v592 = vpop.f32.mrf.mxu0
  %v593 = vadd.f32 %v447, %v592
  %v594 = vpop.f32.mrf.mxu0
  %v595 = vadd.f32 %v451, %v594
  %596 = vmatprep.mubr.bf16.mxu0 0
  %597 = vmatmul.mubr.bf16.gmra.mxu0 %v413
  %v598 = vpop.f32.mrf.mxu0
  %v599 = vadd.f32 %v447, %v598
  %v600 = vpop.f32.mrf.mxu0
  %v601 = vadd.f32 %v451, %v600
  %v602 = vpop.f32.mrf.mxu0
  %v603 = vadd.f32 %v447, %v602
  %v604 = vpop.f32.mrf.mxu0
  %v605 = vadd.f32 %v451, %v604
  %606 = vmatprep.mubr.bf16.mxu0 0
  %607 = vmatmul.mubr.bf16.gmra.mxu0 %v414
  %v608 = vpop.f32.mrf.mxu0
  %v609 = vadd.f32 %v447, %v608
  %v610 = vpop.f32.mrf.mxu0
  %v611 = vadd.f32 %v451, %v610
  %v612 = vpop.f32.mrf.mxu0
  %v613 = vadd.f32 %v447, %v612
  %v614 = vpop.f32.mrf.mxu0
  %v615 = vadd.f32 %v451, %v614
  %616 = vmatprep.mubr.bf16.mxu0 0
  %617 = vmatmul.mubr.bf16.gmra.mxu0 %v415
  %v618 = vpop.f32.mrf.mxu0
  %v619 = vadd.f32 %v447, %v618
  %v620 = vpop.f32.mrf.mxu0
  %v621 = vadd.f32 %v451, %v620
  %v622 = vpop.f32.mrf.mxu0
  %v623 = vadd.f32 %v447, %v622
  %v624 = vpop.f32.mrf.mxu0
  %v625 = vadd.f32 %v451, %v624
  %626 = vmatprep.mubr.bf16.mxu0 0
  %627 = vmatmul.mubr.bf16.gmra.mxu0 %v416
  %v628 = vpop.f32.mrf.mxu0
  %v629 = vadd.f32 %v447, %v628
  %v630 = vpop.f32.mrf.mxu0
  %v631 = vadd.f32 %v451, %v630
  %v632 = vpop.f32.mrf.mxu0
  %v633 = vadd.f32 %v447, %v632
  %v634 = vpop.f32.mrf.mxu0
  %v635 = vadd.f32 %v451, %v634
  %636 = vmatprep.mubr.bf16.mxu0 0
  %637 = vmatmul.mubr.bf16.gmra.mxu0 %v417
  %v638 = vpop.f32.mrf.mxu0
  %v639 = vadd.f32 %v447, %v638
  %v640 = vpop.f32.mrf.mxu0
  %v641 = vadd.f32 %v451, %v640
  %v642 = vpop.f32.mrf.mxu0
  %v643 = vadd.f32 %v447, %v642
  %v644 = vpop.f32.mrf.mxu0
  %v645 = vadd.f32 %v451, %v644
  %646 = vmatprep.mubr.bf16.mxu0 0
  %647 = vmatmul.mubr.bf16.gmra.mxu0 %v418
  %v648 = vpop.f32.mrf.mxu0
  %v649 = vadd.f32 %v447, %v648
  %v650 = vpop.f32.mrf.mxu0
  %v651 = vadd.f32 %v451, %v650
  %v652 = vpop.f32.mrf.mxu0
  %v653 = vadd.f32 %v447, %v652
  %v654 = vpop.f32.mrf.mxu0
  %v655 = vadd.f32 %v451, %v654
  %656 = vmatprep.mubr.bf16.mxu0 0
  %657 = vmatmul.mubr.bf16.gmra.mxu0 %v419
  %v658 = vpop.f32.mrf.mxu0
  %v659 = vadd.f32 %v447, %v658
  %v660 = vpop.f32.mrf.mxu0
  %v661 = vadd.f32 %v451, %v660
  %v662 = vpop.f32.mrf.mxu0
  %v663 = vadd.f32 %v447, %v662
  %v664 = vpop.f32.mrf.mxu0
  %v665 = vadd.f32 %v451, %v664
  %666 = vmatprep.mubr.bf16.mxu0 0
  %667 = vmatmul.mubr.bf16.gmra.mxu0 %v420
  %v668 = vpop.f32.mrf.mxu0
  %v669 = vadd.f32 %v447, %v668
  %v670 = vpop.f32.mrf.mxu0
  %v671 = vadd.f32 %v451, %v670
  %v672 = vpop.f32.mrf.mxu0
  %v673 = vadd.f32 %v447, %v672
  %v674 = vpop.f32.mrf.mxu0
  %v675 = vadd.f32 %v451, %v674
  %676 = vmatprep.mubr.bf16.mxu0 0
  %677 = vmatmul.mubr.bf16.gmra.mxu0 %v421
  %v678 = vpop.f32.mrf.mxu0
  %v679 = vadd.f32 %v447, %v678
  %v680 = vpop.f32.mrf.mxu0
  %v681 = vadd.f32 %v451, %v680
  %v682 = vpop.f32.mrf.mxu0
  %v683 = vadd.f32 %v447, %v682
  %v684 = vpop.f32.mrf.mxu0
  %v685 = vadd.f32 %v451, %v684
  %686 = vmatprep.mubr.bf16.mxu0 0
  %687 = vmatmul.mubr.bf16.gmra.mxu0 %v422
  %v688 = vpop.f32.mrf.mxu0
  %v689 = vadd.f32 %v447, %v688
  %v690 = vpop.f32.mrf.mxu0
  %v691 = vadd.f32 %v451, %v690
  %v692 = vpop.f32.mrf.mxu0
  %v693 = vadd.f32 %v447, %v692
  %v694 = vpop.f32.mrf.mxu0
  %v695 = vadd.f32 %v451, %v694
  %696 = vmatprep.mubr.bf16.mxu0 0
  %697 = vmatmul.mubr.bf16.gmra.mxu0 %v423
  %v698 = vpop.f32.mrf.mxu0
  %v699 = vadd.f32 %v447, %v698
  %v700 = vpop.f32.mrf.mxu0
  %v701 = vadd.f32 %v451, %v700
  %v702 = vpop.f32.mrf.mxu0
  %v703 = vadd.f32 %v447, %v702
  %v704 = vpop.f32.mrf.mxu0
  %v705 = vadd.f32 %v451, %v704
  %706 = vmatprep.mubr.bf16.mxu0 0
  %707 = vmatmul.mubr.bf16.gmra.mxu0 %v424
  %v708 = vpop.f32.mrf.mxu0
  %v709 = vadd.f32 %v447, %v708
  %v710 = vpop.f32.mrf.mxu0
  %v711 = vadd.f32 %v451, %v710
  %v712 = vpop.f32.mrf.mxu0
  %v713 = vadd.f32 %v447, %v712
  %v714 = vpop.f32.mrf.mxu0
  %v715 = vadd.f32 %v451, %v714
  %716 = vmatprep.mubr.bf16.mxu0 0
  %717 = vmatmul.mubr.bf16.gmra.mxu0 %v425
  %v718 = vpop.f32.mrf.mxu0
  %v719 = vadd.f32 %v447, %v718
  %v720 = vpop.f32.mrf.mxu0
  %v721 = vadd.f32 %v451, %v720
  %v722 = vpop.f32.mrf.mxu0
  %v723 = vadd.f32 %v447, %v722
  %v724 = vpop.f32.mrf.mxu0
  %v725 = vadd.f32 %v451, %v724
  %726 = vdwg.mxu0
  %v727 = vmax.f32 %v569, 0.0
  %v728 = vmax.f32 %v571, 0.0
  %v729 = vmax.f32 %v573, 0.0
  %v730 = vmax.f32 %v575, 0.0
  %v731 = vmax.f32 %v579, 0.0
  %v732 = vmax.f32 %v581, 0.0
  %v733 = vmax.f32 %v583, 0.0
  %v734 = vmax.f32 %v585, 0.0
  %v735 = vmax.f32 %v589, 0.0
  %v736 = vmax.f32 %v591, 0.0
  %v737 = vmax.f32 %v593, 0.0
  %v738 = vmax.f32 %v595, 0.0
  %v739 = vmax.f32 %v599, 0.0
  %v740 = vmax.f32 %v601, 0.0
  %v741 = vmax.f32 %v603, 0.0
  %v742 = vmax.f32 %v605, 0.0
  %v743 = vmax.f32 %v609, 0.0
  %v744 = vmax.f32 %v611, 0.0
  %v745 = vmax.f32 %v613, 0.0
  %v746 = vmax.f32 %v615, 0.0
  %v747 = vmax.f32 %v619, 0.0
  %v748 = vmax.f32 %v621, 0.0
  %v749 = vmax.f32 %v623, 0.0
  %v750 = vmax.f32 %v625, 0.0
  %v751 = vmax.f32 %v629, 0.0
  %v752 = vmax.f32 %v631, 0.0
  %v753 = vmax.f32 %v633, 0.0
  %v754 = vmax.f32 %v635, 0.0
  %v755 = vmax.f32 %v639, 0.0
  %v756 = vmax.f32 %v641, 0.0
  %v757 = vmax.f32 %v643, 0.0
  %v758 = vmax.f32 %v645, 0.0
  %v759 = vmax.f32 %v649, 0.0
  %v760 = vmax.f32 %v651, 0.0
  %v761 = vmax.f32 %v653, 0.0
  %v762 = vmax.f32 %v655, 0.0
  %v763 = vmax.f32 %v659, 0.0
  %v764 = vmax.f32 %v661, 0.0
  %v765 = vmax.f32 %v663, 0.0
  %v766 = vmax.f32 %v665, 0.0
  %v767 = vmax.f32 %v669, 0.0
  %v768 = vmax.f32 %v671, 0.0
  %v769 = vmax.f32 %v673, 0.0
  %v770 = vmax.f32 %v675, 0.0
  %v771 = vmax.f32 %v679, 0.0
  %v772 = vmax.f32 %v681, 0.0
  %v773 = vmax.f32 %v683, 0.0
  %v774 = vmax.f32 %v685, 0.0
  %v775 = vmax.f32 %v689, 0.0
  %v776 = vmax.f32 %v691, 0.0
  %v777 = vmax.f32 %v693, 0.0
  %v778 = vmax.f32 %v695, 0.0
  %v779 = vmax.f32 %v699, 0.0
  %v780 = vmax.f32 %v701, 0.0
  %v781 = vmax.f32 %v703, 0.0
  %v782 = vmax.f32 %v705, 0.0
  %v783 = vmax.f32 %v709, 0.0
  %v784 = vmax.f32 %v711, 0.0
  %v785 = vmax.f32 %v713, 0.0
  %v786 = vmax.f32 %v715, 0.0
  %v787 = vmax.f32 %v719, 0.0
  %v788 = vmax.f32 %v721, 0.0
  %v789 = vmax.f32 %v723, 0.0
  %v790 = vmax.f32 %v725, 0.0
  %v791 = vpack.c.bf16 %v729, %v727
  %v792 = vpack.c.bf16 %v730, %v728
  %v793 = vpack.c.bf16 %v733, %v731
  %v794 = vpack.c.bf16 %v734, %v732
  %v795 = vpack.c.bf16 %v737, %v735
  %v796 = vpack.c.bf16 %v738, %v736
  %v797 = vpack.c.bf16 %v741, %v739
  %v798 = vpack.c.bf16 %v742, %v740
  %v799 = vpack.c.bf16 %v745, %v743
  %v800 = vpack.c.bf16 %v746, %v744
  %v801 = vpack.c.bf16 %v749, %v747
  %v802 = vpack.c.bf16 %v750, %v748
  %v803 = vpack.c.bf16 %v753, %v751
  %v804 = vpack.c.bf16 %v754, %v752
  %v805 = vpack.c.bf16 %v757, %v755
  %v806 = vpack.c.bf16 %v758, %v756
  %v807 = vpack.c.bf16 %v761, %v759
  %v808 = vpack.c.bf16 %v762, %v760
  %v809 = vpack.c.bf16 %v765, %v763
  %v810 = vpack.c.bf16 %v766, %v764
  %v811 = vpack.c.bf16 %v769, %v767
  %v812 = vpack.c.bf16 %v770, %v768
  %v813 = vpack.c.bf16 %v773, %v771
  %v814 = vpack.c.bf16 %v774, %v772
  %v815 = vpack.c.bf16 %v777, %v775
  %v816 = vpack.c.bf16 %v778, %v776
  %v817 = vpack.c.bf16 %v781, %v779
  %v818 = vpack.c.bf16 %v782, %v780
  %v819 = vpack.c.bf16 %v785, %v783
  %v820 = vpack.c.bf16 %v786, %v784
  %v821 = vpack.c.bf16 %v789, %v787
  %v822 = vpack.c.bf16 %v790, %v788
  %v823 = vld [vmem:[%s5] sm:$0xff]
  %v824 = vld [vmem:[%s5 + $0x8] sm:$0xff]
  %v825 = vld [vmem:[%s5 + $0x10] sm:$0xff]
  %v826 = vld [vmem:[%s5 + $0x18] sm:$0xff]
  %v827 = vld [vmem:[%s5 + $0x20] sm:$0xff]
  %v828 = vld [vmem:[%s5 + $0x28] sm:$0xff]
  %v829 = vld [vmem:[%s5 + $0x30] sm:$0xff]
  %v830 = vld [vmem:[%s5 + $0x38] sm:$0xff]
  %v831 = vld [vmem:[%s5 + $0x40] sm:$0xff]
  %v832 = vld [vmem:[%s5 + $0x48] sm:$0xff]
  %v833 = vld [vmem:[%s5 + $0x50] sm:$0xff]
  %v834 = vld [vmem:[%s5 + $0x58] sm:$0xff]
  %v835 = vld [vmem:[%s5 + $0x60] sm:$0xff]
  %v836 = vld [vmem:[%s5 + $0x68] sm:$0xff]
  %v837 = vld [vmem:[%s5 + $0x70] sm:$0xff]
  %v838 = vld [vmem:[%s5 + $0x78] sm:$0xff]
  %v839 = vld [vmem:[%s5 + $0x80] sm:$0xff]
  %v840 = vld [vmem:[%s5 + $0x88] sm:$0xff]
  %v841 = vld [vmem:[%s5 + $0x90] sm:$0xff]
  %v842 = vld [vmem:[%s5 + $0x98] sm:$0xff]
  %v843 = vld [vmem:[%s5 + $0xa0] sm:$0xff]
  %v844 = vld [vmem:[%s5 + $0xa8] sm:$0xff]
  %v845 = vld [vmem:[%s5 + $0xb0] sm:$0xff]
  %v846 = vld [vmem:[%s5 + $0xb8] sm:$0xff]
  %v847 = vld [vmem:[%s5 + $0xc0] sm:$0xff]
  %v848 = vld [vmem:[%s5 + $0xc8] sm:$0xff]
  %v849 = vld [vmem:[%s5 + $0xd0] sm:$0xff]
  %v850 = vld [vmem:[%s5 + $0xd8] sm:$0xff]
  %v851 = vld [vmem:[%s5 + $0xe0] sm:$0xff]
  %v852 = vld [vmem:[%s5 + $0xe8] sm:$0xff]
  %v853 = vld [vmem:[%s5 + $0xf0] sm:$0xff]
  %v854 = vld [vmem:[%s5 + $0xf8] sm:$0xff]
  %v855 = vld [vmem:[%s5 + $0x100] sm:$0xff]
  %v856 = vld [vmem:[%s5 + $0x108] sm:$0xff]
  %v857 = vld [vmem:[%s5 + $0x110] sm:$0xff]
  %v858 = vld [vmem:[%s5 + $0x118] sm:$0xff]
  %v859 = vld [vmem:[%s5 + $0x120] sm:$0xff]
  %v860 = vld [vmem:[%s5 + $0x128] sm:$0xff]
  %v861 = vld [vmem:[%s5 + $0x130] sm:$0xff]
  %v862 = vld [vmem:[%s5 + $0x138] sm:$0xff]
  %v863 = vld [vmem:[%s5 + $0x140] sm:$0xff]
  %v864 = vld [vmem:[%s5 + $0x148] sm:$0xff]
  %v865 = vld [vmem:[%s5 + $0x150] sm:$0xff]
  %v866 = vld [vmem:[%s5 + $0x158] sm:$0xff]
  %v867 = vld [vmem:[%s5 + $0x160] sm:$0xff]
  %v868 = vld [vmem:[%s5 + $0x168] sm:$0xff]
  %v869 = vld [vmem:[%s5 + $0x170] sm:$0xff]
  %v870 = vld [vmem:[%s5 + $0x178] sm:$0xff]
  %v871 = vld [vmem:[%s5 + $0x180] sm:$0xff]
  %v872 = vld [vmem:[%s5 + $0x188] sm:$0xff]
  %v873 = vld [vmem:[%s5 + $0x190] sm:$0xff]
  %v874 = vld [vmem:[%s5 + $0x198] sm:$0xff]
  %v875 = vld [vmem:[%s5 + $0x1a0] sm:$0xff]
  %v876 = vld [vmem:[%s5 + $0x1a8] sm:$0xff]
  %v877 = vld [vmem:[%s5 + $0x1b0] sm:$0xff]
  %v878 = vld [vmem:[%s5 + $0x1b8] sm:$0xff]
  %v879 = vld [vmem:[%s5 + $0x1c0] sm:$0xff]
  %v880 = vld [vmem:[%s5 + $0x1c8] sm:$0xff]
  %v881 = vld [vmem:[%s5 + $0x1d0] sm:$0xff]
  %v882 = vld [vmem:[%s5 + $0x1d8] sm:$0xff]
  %v883 = vld [vmem:[%s5 + $0x1e0] sm:$0xff]
  %v884 = vld [vmem:[%s5 + $0x1e8] sm:$0xff]
  %v885 = vld [vmem:[%s5 + $0x1f0] sm:$0xff]
  %v886 = vld [vmem:[%s5 + $0x1f8] sm:$0xff]
  %v887 = vld [vmem:[%s6] sm:$0xf]
  %v889 = vlaneseq
  %v890 = vshrl.u32 %v889, 7
  %v891 = vsub.s32 0, %v890
  %v892 = vrot.slane %v887, %v891
  %v893 = vlaneseq
  %v894 = vshrl.u32 %v893, 7
  %v895 = vsub.s32 1, %v894
  %v896 = vrot.slane %v887, %v895
  %v897 = vlaneseq
  %v898 = vshrl.u32 %v897, 7
  %v899 = vsub.s32 2, %v898
  %v900 = vrot.slane %v887, %v899
  %v901 = vlaneseq
  %v902 = vshrl.u32 %v901, 7
  %v903 = vsub.s32 3, %v902
  %v904 = vrot.slane %v887, %v903
  %v973 = vunpack.c.l.b16 %v823
  %v974 = vunpack.c.h.b16 %v823
  %v975 = vunpack.c.l.b16 %v824
  %v976 = vunpack.c.h.b16 %v824
  %v977 = vunpack.c.l.b16 %v825
  %v978 = vunpack.c.h.b16 %v825
  %v979 = vunpack.c.l.b16 %v826
  %v980 = vunpack.c.h.b16 %v826
  %v981 = vunpack.c.l.b16 %v827
  %v982 = vunpack.c.h.b16 %v827
  %v983 = vunpack.c.l.b16 %v828
  %v984 = vunpack.c.h.b16 %v828
  %v985 = vunpack.c.l.b16 %v829
  %v986 = vunpack.c.h.b16 %v829
  %v987 = vunpack.c.l.b16 %v830
  %v988 = vunpack.c.h.b16 %v830
  %v989 = vunpack.c.l.b16 %v831
  %v990 = vunpack.c.h.b16 %v831
  %v991 = vunpack.c.l.b16 %v832
  %v992 = vunpack.c.h.b16 %v832
  %v993 = vunpack.c.l.b16 %v833
  %v994 = vunpack.c.h.b16 %v833
  %v995 = vunpack.c.l.b16 %v834
  %v996 = vunpack.c.h.b16 %v834
  %v997 = vunpack.c.l.b16 %v835
  %v998 = vunpack.c.h.b16 %v835
  %v999 = vunpack.c.l.b16 %v836
  %v1000 = vunpack.c.h.b16 %v836
  %v1001 = vunpack.c.l.b16 %v837
  %v1002 = vunpack.c.h.b16 %v837
  %v1003 = vunpack.c.l.b16 %v838
  %v1004 = vunpack.c.h.b16 %v838
  %v1005 = vunpack.c.l.b16 %v839
  %v1006 = vunpack.c.h.b16 %v839
  %v1007 = vunpack.c.l.b16 %v840
  %v1008 = vunpack.c.h.b16 %v840
  %v1009 = vunpack.c.l.b16 %v841
  %v1010 = vunpack.c.h.b16 %v841
  %v1011 = vunpack.c.l.b16 %v842
  %v1012 = vunpack.c.h.b16 %v842
  %v1013 = vunpack.c.l.b16 %v843
  %v1014 = vunpack.c.h.b16 %v843
  %v1015 = vunpack.c.l.b16 %v844
  %v1016 = vunpack.c.h.b16 %v844
  %v1017 = vunpack.c.l.b16 %v845
  %v1018 = vunpack.c.h.b16 %v845
  %v1019 = vunpack.c.l.b16 %v846
  %v1020 = vunpack.c.h.b16 %v846
  %v1021 = vunpack.c.l.b16 %v847
  %v1022 = vunpack.c.h.b16 %v847
  %v1023 = vunpack.c.l.b16 %v848
  %v1024 = vunpack.c.h.b16 %v848
  %v1025 = vunpack.c.l.b16 %v849
  %v1026 = vunpack.c.h.b16 %v849
  %v1027 = vunpack.c.l.b16 %v850
  %v1028 = vunpack.c.h.b16 %v850
  %v1029 = vunpack.c.l.b16 %v851
  %v1030 = vunpack.c.h.b16 %v851
  %v1031 = vunpack.c.l.b16 %v852
  %v1032 = vunpack.c.h.b16 %v852
  %v1033 = vunpack.c.l.b16 %v853
  %v1034 = vunpack.c.h.b16 %v853
  %v1035 = vunpack.c.l.b16 %v854
  %v1036 = vunpack.c.h.b16 %v854
  %v1037 = vunpack.c.l.b16 %v855
  %v1038 = vunpack.c.h.b16 %v855
  %v1039 = vunpack.c.l.b16 %v856
  %v1040 = vunpack.c.h.b16 %v856
  %v1041 = vunpack.c.l.b16 %v857
  %v1042 = vunpack.c.h.b16 %v857
  %v1043 = vunpack.c.l.b16 %v858
  %v1044 = vunpack.c.h.b16 %v858
  %v1045 = vunpack.c.l.b16 %v859
  %v1046 = vunpack.c.h.b16 %v859
  %v1047 = vunpack.c.l.b16 %v860
  %v1048 = vunpack.c.h.b16 %v860
  %v1049 = vunpack.c.l.b16 %v861
  %v1050 = vunpack.c.h.b16 %v861
  %v1051 = vunpack.c.l.b16 %v862
  %v1052 = vunpack.c.h.b16 %v862
  %v1053 = vunpack.c.l.b16 %v863
  %v1054 = vunpack.c.h.b16 %v863
  %v1055 = vunpack.c.l.b16 %v864
  %v1056 = vunpack.c.h.b16 %v864
  %v1057 = vunpack.c.l.b16 %v865
  %v1058 = vunpack.c.h.b16 %v865
  %v1059 = vunpack.c.l.b16 %v866
  %v1060 = vunpack.c.h.b16 %v866
  %v1061 = vunpack.c.l.b16 %v867
  %v1062 = vunpack.c.h.b16 %v867
  %v1063 = vunpack.c.l.b16 %v868
  %v1064 = vunpack.c.h.b16 %v868
  %v1065 = vunpack.c.l.b16 %v869
  %v1066 = vunpack.c.h.b16 %v869
  %v1067 = vunpack.c.l.b16 %v870
  %v1068 = vunpack.c.h.b16 %v870
  %v1069 = vunpack.c.l.b16 %v871
  %v1070 = vunpack.c.h.b16 %v871
  %v1071 = vunpack.c.l.b16 %v872
  %v1072 = vunpack.c.h.b16 %v872
  %v1073 = vunpack.c.l.b16 %v873
  %v1074 = vunpack.c.h.b16 %v873
  %v1075 = vunpack.c.l.b16 %v874
  %v1076 = vunpack.c.h.b16 %v874
  %v1077 = vunpack.c.l.b16 %v875
  %v1078 = vunpack.c.h.b16 %v875
  %v1079 = vunpack.c.l.b16 %v876
  %v1080 = vunpack.c.h.b16 %v876
  %v1081 = vunpack.c.l.b16 %v877
  %v1082 = vunpack.c.h.b16 %v877
  %v1083 = vunpack.c.l.b16 %v878
  %v1084 = vunpack.c.h.b16 %v878
  %v1085 = vunpack.c.l.b16 %v879
  %v1086 = vunpack.c.h.b16 %v879
  %v1087 = vunpack.c.l.b16 %v880
  %v1088 = vunpack.c.h.b16 %v880
  %v1089 = vunpack.c.l.b16 %v881
  %v1090 = vunpack.c.h.b16 %v881
  %v1091 = vunpack.c.l.b16 %v882
  %v1092 = vunpack.c.h.b16 %v882
  %v1093 = vunpack.c.l.b16 %v883
  %v1094 = vunpack.c.h.b16 %v883
  %v1095 = vunpack.c.l.b16 %v884
  %v1096 = vunpack.c.h.b16 %v884
  %v1097 = vunpack.c.l.b16 %v885
  %v1098 = vunpack.c.h.b16 %v885
  %v1099 = vunpack.c.l.b16 %v886
  %v1100 = vunpack.c.h.b16 %v886
  %v1101 = vpack.c.b16 %v977, %v973
  %v1102 = vpack.c.b16 %v978, %v974
  %v1103 = vpack.c.b16 %v979, %v975
  %v1104 = vpack.c.b16 %v980, %v976
  %v1105 = vpack.c.b16 %v985, %v981
  %v1106 = vpack.c.b16 %v986, %v982
  %v1107 = vpack.c.b16 %v987, %v983
  %v1108 = vpack.c.b16 %v988, %v984
  %v1109 = vpack.c.b16 %v993, %v989
  %v1110 = vpack.c.b16 %v994, %v990
  %v1111 = vpack.c.b16 %v995, %v991
  %v1112 = vpack.c.b16 %v996, %v992
  %v1113 = vpack.c.b16 %v1001, %v997
  %v1114 = vpack.c.b16 %v1002, %v998
  %v1115 = vpack.c.b16 %v1003, %v999
  %v1116 = vpack.c.b16 %v1004, %v1000
  %v1117 = vpack.c.b16 %v1009, %v1005
  %v1118 = vpack.c.b16 %v1010, %v1006
  %v1119 = vpack.c.b16 %v1011, %v1007
  %v1120 = vpack.c.b16 %v1012, %v1008
  %v1121 = vpack.c.b16 %v1017, %v1013
  %v1122 = vpack.c.b16 %v1018, %v1014
  %v1123 = vpack.c.b16 %v1019, %v1015
  %v1124 = vpack.c.b16 %v1020, %v1016
  %v1125 = vpack.c.b16 %v1025, %v1021
  %v1126 = vpack.c.b16 %v1026, %v1022
  %v1127 = vpack.c.b16 %v1027, %v1023
  %v1128 = vpack.c.b16 %v1028, %v1024
  %v1129 = vpack.c.b16 %v1033, %v1029
  %v1130 = vpack.c.b16 %v1034, %v1030
  %v1131 = vpack.c.b16 %v1035, %v1031
  %v1132 = vpack.c.b16 %v1036, %v1032
  %v1133 = vpack.c.b16 %v1041, %v1037
  %v1134 = vpack.c.b16 %v1042, %v1038
  %v1135 = vpack.c.b16 %v1043, %v1039
  %v1136 = vpack.c.b16 %v1044, %v1040
  %v1137 = vpack.c.b16 %v1049, %v1045
  %v1138 = vpack.c.b16 %v1050, %v1046
  %v1139 = vpack.c.b16 %v1051, %v1047
  %v1140 = vpack.c.b16 %v1052, %v1048
  %v1141 = vpack.c.b16 %v1057, %v1053
  %v1142 = vpack.c.b16 %v1058, %v1054
  %v1143 = vpack.c.b16 %v1059, %v1055
  %v1144 = vpack.c.b16 %v1060, %v1056
  %v1145 = vpack.c.b16 %v1065, %v1061
  %v1146 = vpack.c.b16 %v1066, %v1062
  %v1147 = vpack.c.b16 %v1067, %v1063
  %v1148 = vpack.c.b16 %v1068, %v1064
  %v1149 = vpack.c.b16 %v1073, %v1069
  %v1150 = vpack.c.b16 %v1074, %v1070
  %v1151 = vpack.c.b16 %v1075, %v1071
  %v1152 = vpack.c.b16 %v1076, %v1072
  %v1153 = vpack.c.b16 %v1081, %v1077
  %v1154 = vpack.c.b16 %v1082, %v1078
  %v1155 = vpack.c.b16 %v1083, %v1079
  %v1156 = vpack.c.b16 %v1084, %v1080
  %v1157 = vpack.c.b16 %v1089, %v1085
  %v1158 = vpack.c.b16 %v1090, %v1086
  %v1159 = vpack.c.b16 %v1091, %v1087
  %v1160 = vpack.c.b16 %v1092, %v1088
  %v1161 = vpack.c.b16 %v1097, %v1093
  %v1162 = vpack.c.b16 %v1098, %v1094
  %v1163 = vpack.c.b16 %v1099, %v1095
  %v1164 = vpack.c.b16 %v1100, %v1096
  %1229 = vmatprep.subr.bf16.mxu0 %v1130
  %1230 = vmatpush1.bf16.msra.mxu0 %v1129
  %1231 = vmatprep.subr.bf16.mxu0 %v1126
  %1232 = vmatpush1.bf16.msra.mxu0 %v1125
  %1233 = vmatprep.subr.bf16.mxu0 %v1122
  %1234 = vmatpush1.bf16.msra.mxu0 %v1121
  %1235 = vmatprep.subr.bf16.mxu0 %v1118
  %1236 = vmatpush1.bf16.msra.mxu0 %v1117
  %1237 = vmatprep.subr.bf16.mxu0 %v1114
  %1238 = vmatpush1.bf16.msra.mxu0 %v1113
  %1239 = vmatprep.subr.bf16.mxu0 %v1110
  %1240 = vmatpush1.bf16.msra.mxu0 %v1109
  %1241 = vmatprep.subr.bf16.mxu0 %v1106
  %1242 = vmatpush1.bf16.msra.mxu0 %v1105
  %1243 = vmatprep.subr.bf16.mxu0 %v1102
  %1244 = vmatpush1.bf16.msra.mxu0 %v1101
  %1245 = vmatprep.subr.bf16.mxu0 %v1162
  %1246 = vmatpush2.bf16.msra.mxu0 %v1161
  %1247 = vmatprep.subr.bf16.mxu0 %v1158
  %1248 = vmatpush2.bf16.msra.mxu0 %v1157
  %1249 = vmatprep.subr.bf16.mxu0 %v1154
  %1250 = vmatpush2.bf16.msra.mxu0 %v1153
  %1251 = vmatprep.subr.bf16.mxu0 %v1150
  %1252 = vmatpush2.bf16.msra.mxu0 %v1149
  %1253 = vmatprep.subr.bf16.mxu0 %v1146
  %1254 = vmatpush2.bf16.msra.mxu0 %v1145
  %1255 = vmatprep.subr.bf16.mxu0 %v1142
  %1256 = vmatpush2.bf16.msra.mxu0 %v1141
  %1257 = vmatprep.subr.bf16.mxu0 %v1138
  %1258 = vmatpush2.bf16.msra.mxu0 %v1137
  %1259 = vmatprep.subr.bf16.mxu0 %v1134
  %1260 = vmatpush2.bf16.msra.mxu0 %v1133
  %1261 = vmatprep.mubr.bf16.mxu0 %v792
  %1262 = vmatmul.mubr.bf16.gmra.mxu0 %v791
  %v1263 = vpop.f32.mrf.mxu0
  %v1264 = vadd.f32 %v892, %v1263
  %v1265 = vpop.f32.mrf.mxu0
  %v1266 = vadd.f32 %v896, %v1265
  %v1267 = vpop.f32.mrf.mxu0
  %v1268 = vadd.f32 %v892, %v1267
  %v1269 = vpop.f32.mrf.mxu0
  %v1270 = vadd.f32 %v896, %v1269
  %1271 = vmatprep.mubr.bf16.mxu0 %v794
  %1272 = vmatmul.mubr.bf16.gmra.mxu0 %v793
  %v1273 = vpop.f32.mrf.mxu0
  %v1274 = vadd.f32 %v892, %v1273
  %v1275 = vpop.f32.mrf.mxu0
  %v1276 = vadd.f32 %v896, %v1275
  %v1277 = vpop.f32.mrf.mxu0
  %v1278 = vadd.f32 %v892, %v1277
  %v1279 = vpop.f32.mrf.mxu0
  %v1280 = vadd.f32 %v896, %v1279
  %1281 = vmatprep.mubr.bf16.mxu0 %v796
  %1282 = vmatmul.mubr.bf16.gmra.mxu0 %v795
  %v1283 = vpop.f32.mrf.mxu0
  %v1284 = vadd.f32 %v892, %v1283
  %v1285 = vpop.f32.mrf.mxu0
  %v1286 = vadd.f32 %v896, %v1285
  %v1287 = vpop.f32.mrf.mxu0
  %v1288 = vadd.f32 %v892, %v1287
  %v1289 = vpop.f32.mrf.mxu0
  %v1290 = vadd.f32 %v896, %v1289
  %1291 = vmatprep.mubr.bf16.mxu0 %v798
  %1292 = vmatmul.mubr.bf16.gmra.mxu0 %v797
  %v1293 = vpop.f32.mrf.mxu0
  %v1294 = vadd.f32 %v892, %v1293
  %v1295 = vpop.f32.mrf.mxu0
  %v1296 = vadd.f32 %v896, %v1295
  %v1297 = vpop.f32.mrf.mxu0
  %v1298 = vadd.f32 %v892, %v1297
  %v1299 = vpop.f32.mrf.mxu0
  %v1300 = vadd.f32 %v896, %v1299
  %1301 = vmatprep.mubr.bf16.mxu0 %v800
  %1302 = vmatmul.mubr.bf16.gmra.mxu0 %v799
  %v1303 = vpop.f32.mrf.mxu0
  %v1304 = vadd.f32 %v892, %v1303
  %v1305 = vpop.f32.mrf.mxu0
  %v1306 = vadd.f32 %v896, %v1305
  %v1307 = vpop.f32.mrf.mxu0
  %v1308 = vadd.f32 %v892, %v1307
  %v1309 = vpop.f32.mrf.mxu0
  %v1310 = vadd.f32 %v896, %v1309
  %1311 = vmatprep.mubr.bf16.mxu0 %v802
  %1312 = vmatmul.mubr.bf16.gmra.mxu0 %v801
  %v1313 = vpop.f32.mrf.mxu0
  %v1314 = vadd.f32 %v892, %v1313
  %v1315 = vpop.f32.mrf.mxu0
  %v1316 = vadd.f32 %v896, %v1315
  %v1317 = vpop.f32.mrf.mxu0
  %v1318 = vadd.f32 %v892, %v1317
  %v1319 = vpop.f32.mrf.mxu0
  %v1320 = vadd.f32 %v896, %v1319
  %1321 = vmatprep.mubr.bf16.mxu0 %v804
  %1322 = vmatmul.mubr.bf16.gmra.mxu0 %v803
  %v1323 = vpop.f32.mrf.mxu0
  %v1324 = vadd.f32 %v892, %v1323
  %v1325 = vpop.f32.mrf.mxu0
  %v1326 = vadd.f32 %v896, %v1325
  %v1327 = vpop.f32.mrf.mxu0
  %v1328 = vadd.f32 %v892, %v1327
  %v1329 = vpop.f32.mrf.mxu0
  %v1330 = vadd.f32 %v896, %v1329
  %1331 = vmatprep.mubr.bf16.mxu0 %v806
  %1332 = vmatmul.mubr.bf16.gmra.mxu0 %v805
  %v1333 = vpop.f32.mrf.mxu0
  %v1334 = vadd.f32 %v892, %v1333
  %v1335 = vpop.f32.mrf.mxu0
  %v1336 = vadd.f32 %v896, %v1335
  %v1337 = vpop.f32.mrf.mxu0
  %v1338 = vadd.f32 %v892, %v1337
  %v1339 = vpop.f32.mrf.mxu0
  %v1340 = vadd.f32 %v896, %v1339
  %1341 = vmatprep.mubr.bf16.mxu0 %v808
  %1342 = vmatmul.mubr.bf16.gmra.mxu0 %v807
  %v1343 = vpop.f32.mrf.mxu0
  %v1344 = vadd.f32 %v892, %v1343
  %v1345 = vpop.f32.mrf.mxu0
  %v1346 = vadd.f32 %v896, %v1345
  %v1347 = vpop.f32.mrf.mxu0
  %v1348 = vadd.f32 %v892, %v1347
  %v1349 = vpop.f32.mrf.mxu0
  %v1350 = vadd.f32 %v896, %v1349
  %1351 = vmatprep.mubr.bf16.mxu0 %v810
  %1352 = vmatmul.mubr.bf16.gmra.mxu0 %v809
  %v1353 = vpop.f32.mrf.mxu0
  %v1354 = vadd.f32 %v892, %v1353
  %v1355 = vpop.f32.mrf.mxu0
  %v1356 = vadd.f32 %v896, %v1355
  %v1357 = vpop.f32.mrf.mxu0
  %v1358 = vadd.f32 %v892, %v1357
  %v1359 = vpop.f32.mrf.mxu0
  %v1360 = vadd.f32 %v896, %v1359
  %1361 = vmatprep.mubr.bf16.mxu0 %v812
  %1362 = vmatmul.mubr.bf16.gmra.mxu0 %v811
  %v1363 = vpop.f32.mrf.mxu0
  %v1364 = vadd.f32 %v892, %v1363
  %v1365 = vpop.f32.mrf.mxu0
  %v1366 = vadd.f32 %v896, %v1365
  %v1367 = vpop.f32.mrf.mxu0
  %v1368 = vadd.f32 %v892, %v1367
  %v1369 = vpop.f32.mrf.mxu0
  %v1370 = vadd.f32 %v896, %v1369
  %1371 = vmatprep.mubr.bf16.mxu0 %v814
  %1372 = vmatmul.mubr.bf16.gmra.mxu0 %v813
  %v1373 = vpop.f32.mrf.mxu0
  %v1374 = vadd.f32 %v892, %v1373
  %v1375 = vpop.f32.mrf.mxu0
  %v1376 = vadd.f32 %v896, %v1375
  %v1377 = vpop.f32.mrf.mxu0
  %v1378 = vadd.f32 %v892, %v1377
  %v1379 = vpop.f32.mrf.mxu0
  %v1380 = vadd.f32 %v896, %v1379
  %1381 = vmatprep.mubr.bf16.mxu0 %v816
  %1382 = vmatmul.mubr.bf16.gmra.mxu0 %v815
  %v1383 = vpop.f32.mrf.mxu0
  %v1384 = vadd.f32 %v892, %v1383
  %v1385 = vpop.f32.mrf.mxu0
  %v1386 = vadd.f32 %v896, %v1385
  %v1387 = vpop.f32.mrf.mxu0
  %v1388 = vadd.f32 %v892, %v1387
  %v1389 = vpop.f32.mrf.mxu0
  %v1390 = vadd.f32 %v896, %v1389
  %1391 = vmatprep.mubr.bf16.mxu0 %v818
  %1392 = vmatmul.mubr.bf16.gmra.mxu0 %v817
  %v1393 = vpop.f32.mrf.mxu0
  %v1394 = vadd.f32 %v892, %v1393
  %v1395 = vpop.f32.mrf.mxu0
  %v1396 = vadd.f32 %v896, %v1395
  %v1397 = vpop.f32.mrf.mxu0
  %v1398 = vadd.f32 %v892, %v1397
  %v1399 = vpop.f32.mrf.mxu0
  %v1400 = vadd.f32 %v896, %v1399
  %1401 = vmatprep.mubr.bf16.mxu0 %v820
  %1402 = vmatmul.mubr.bf16.gmra.mxu0 %v819
  %v1403 = vpop.f32.mrf.mxu0
  %v1404 = vadd.f32 %v892, %v1403
  %v1405 = vpop.f32.mrf.mxu0
  %v1406 = vadd.f32 %v896, %v1405
  %v1407 = vpop.f32.mrf.mxu0
  %v1408 = vadd.f32 %v892, %v1407
  %v1409 = vpop.f32.mrf.mxu0
  %v1410 = vadd.f32 %v896, %v1409
  %1411 = vmatprep.mubr.bf16.mxu0 %v822
  %1412 = vmatmul.mubr.bf16.gmra.mxu0 %v821
  %v1413 = vpop.f32.mrf.mxu0
  %v1414 = vadd.f32 %v892, %v1413
  %v1415 = vpop.f32.mrf.mxu0
  %v1416 = vadd.f32 %v896, %v1415
  %v1417 = vpop.f32.mrf.mxu0
  %v1418 = vadd.f32 %v892, %v1417
  %v1419 = vpop.f32.mrf.mxu0
  %v1420 = vadd.f32 %v896, %v1419
  %1421 = vdwg.mxu0
  %1422 = vmatprep.subr.bf16.mxu0 %v1132
  %1423 = vmatpush1.bf16.msra.mxu0 %v1131
  %1424 = vmatprep.subr.bf16.mxu0 %v1128
  %1425 = vmatpush1.bf16.msra.mxu0 %v1127
  %1426 = vmatprep.subr.bf16.mxu0 %v1124
  %1427 = vmatpush1.bf16.msra.mxu0 %v1123
  %1428 = vmatprep.subr.bf16.mxu0 %v1120
  %1429 = vmatpush1.bf16.msra.mxu0 %v1119
  %1430 = vmatprep.subr.bf16.mxu0 %v1116
  %1431 = vmatpush1.bf16.msra.mxu0 %v1115
  %1432 = vmatprep.subr.bf16.mxu0 %v1112
  %1433 = vmatpush1.bf16.msra.mxu0 %v1111
  %1434 = vmatprep.subr.bf16.mxu0 %v1108
  %1435 = vmatpush1.bf16.msra.mxu0 %v1107
  %1436 = vmatprep.subr.bf16.mxu0 %v1104
  %1437 = vmatpush1.bf16.msra.mxu0 %v1103
  %1438 = vmatprep.subr.bf16.mxu0 %v1164
  %1439 = vmatpush2.bf16.msra.mxu0 %v1163
  %1440 = vmatprep.subr.bf16.mxu0 %v1160
  %1441 = vmatpush2.bf16.msra.mxu0 %v1159
  %1442 = vmatprep.subr.bf16.mxu0 %v1156
  %1443 = vmatpush2.bf16.msra.mxu0 %v1155
  %1444 = vmatprep.subr.bf16.mxu0 %v1152
  %1445 = vmatpush2.bf16.msra.mxu0 %v1151
  %1446 = vmatprep.subr.bf16.mxu0 %v1148
  %1447 = vmatpush2.bf16.msra.mxu0 %v1147
  %1448 = vmatprep.subr.bf16.mxu0 %v1144
  %1449 = vmatpush2.bf16.msra.mxu0 %v1143
  %1450 = vmatprep.subr.bf16.mxu0 %v1140
  %1451 = vmatpush2.bf16.msra.mxu0 %v1139
  %1452 = vmatprep.subr.bf16.mxu0 %v1136
  %1453 = vmatpush2.bf16.msra.mxu0 %v1135
  %1454 = vmatprep.mubr.bf16.mxu0 %v792
  %1455 = vmatmul.mubr.bf16.gmra.mxu0 %v791
  %v1456 = vpop.f32.mrf.mxu0
  %v1457 = vadd.f32 %v900, %v1456
  %v1458 = vpop.f32.mrf.mxu0
  %v1459 = vadd.f32 %v904, %v1458
  %v1460 = vpop.f32.mrf.mxu0
  %v1461 = vadd.f32 %v900, %v1460
  %v1462 = vpop.f32.mrf.mxu0
  %v1463 = vadd.f32 %v904, %v1462
  %1464 = vmatprep.mubr.bf16.mxu0 %v794
  %1465 = vmatmul.mubr.bf16.gmra.mxu0 %v793
  %v1466 = vpop.f32.mrf.mxu0
  %v1467 = vadd.f32 %v900, %v1466
  %v1468 = vpop.f32.mrf.mxu0
  %v1469 = vadd.f32 %v904, %v1468
  %v1470 = vpop.f32.mrf.mxu0
  %v1471 = vadd.f32 %v900, %v1470
  %v1472 = vpop.f32.mrf.mxu0
  %v1473 = vadd.f32 %v904, %v1472
  %1474 = vmatprep.mubr.bf16.mxu0 %v796
  %1475 = vmatmul.mubr.bf16.gmra.mxu0 %v795
  %v1476 = vpop.f32.mrf.mxu0
  %v1477 = vadd.f32 %v900, %v1476
  %v1478 = vpop.f32.mrf.mxu0
  %v1479 = vadd.f32 %v904, %v1478
  %v1480 = vpop.f32.mrf.mxu0
  %v1481 = vadd.f32 %v900, %v1480
  %v1482 = vpop.f32.mrf.mxu0
  %v1483 = vadd.f32 %v904, %v1482
  %1484 = vmatprep.mubr.bf16.mxu0 %v798
  %1485 = vmatmul.mubr.bf16.gmra.mxu0 %v797
  %v1486 = vpop.f32.mrf.mxu0
  %v1487 = vadd.f32 %v900, %v1486
  %v1488 = vpop.f32.mrf.mxu0
  %v1489 = vadd.f32 %v904, %v1488
  %v1490 = vpop.f32.mrf.mxu0
  %v1491 = vadd.f32 %v900, %v1490
  %v1492 = vpop.f32.mrf.mxu0
  %v1493 = vadd.f32 %v904, %v1492
  %1494 = vmatprep.mubr.bf16.mxu0 %v800
  %1495 = vmatmul.mubr.bf16.gmra.mxu0 %v799
  %v1496 = vpop.f32.mrf.mxu0
  %v1497 = vadd.f32 %v900, %v1496
  %v1498 = vpop.f32.mrf.mxu0
  %v1499 = vadd.f32 %v904, %v1498
  %v1500 = vpop.f32.mrf.mxu0
  %v1501 = vadd.f32 %v900, %v1500
  %v1502 = vpop.f32.mrf.mxu0
  %v1503 = vadd.f32 %v904, %v1502
  %1504 = vmatprep.mubr.bf16.mxu0 %v802
  %1505 = vmatmul.mubr.bf16.gmra.mxu0 %v801
  %v1506 = vpop.f32.mrf.mxu0
  %v1507 = vadd.f32 %v900, %v1506
  %v1508 = vpop.f32.mrf.mxu0
  %v1509 = vadd.f32 %v904, %v1508
  %v1510 = vpop.f32.mrf.mxu0
  %v1511 = vadd.f32 %v900, %v1510
  %v1512 = vpop.f32.mrf.mxu0
  %v1513 = vadd.f32 %v904, %v1512
  %1514 = vmatprep.mubr.bf16.mxu0 %v804
  %1515 = vmatmul.mubr.bf16.gmra.mxu0 %v803
  %v1516 = vpop.f32.mrf.mxu0
  %v1517 = vadd.f32 %v900, %v1516
  %v1518 = vpop.f32.mrf.mxu0
  %v1519 = vadd.f32 %v904, %v1518
  %v1520 = vpop.f32.mrf.mxu0
  %v1521 = vadd.f32 %v900, %v1520
  %v1522 = vpop.f32.mrf.mxu0
  %v1523 = vadd.f32 %v904, %v1522
  %1524 = vmatprep.mubr.bf16.mxu0 %v806
  %1525 = vmatmul.mubr.bf16.gmra.mxu0 %v805
  %v1526 = vpop.f32.mrf.mxu0
  %v1527 = vadd.f32 %v900, %v1526
  %v1528 = vpop.f32.mrf.mxu0
  %v1529 = vadd.f32 %v904, %v1528
  %v1530 = vpop.f32.mrf.mxu0
  %v1531 = vadd.f32 %v900, %v1530
  %v1532 = vpop.f32.mrf.mxu0
  %v1533 = vadd.f32 %v904, %v1532
  %1534 = vmatprep.mubr.bf16.mxu0 %v808
  %1535 = vmatmul.mubr.bf16.gmra.mxu0 %v807
  %v1536 = vpop.f32.mrf.mxu0
  %v1537 = vadd.f32 %v900, %v1536
  %v1538 = vpop.f32.mrf.mxu0
  %v1539 = vadd.f32 %v904, %v1538
  %v1540 = vpop.f32.mrf.mxu0
  %v1541 = vadd.f32 %v900, %v1540
  %v1542 = vpop.f32.mrf.mxu0
  %v1543 = vadd.f32 %v904, %v1542
  %1544 = vmatprep.mubr.bf16.mxu0 %v810
  %1545 = vmatmul.mubr.bf16.gmra.mxu0 %v809
  %v1546 = vpop.f32.mrf.mxu0
  %v1547 = vadd.f32 %v900, %v1546
  %v1548 = vpop.f32.mrf.mxu0
  %v1549 = vadd.f32 %v904, %v1548
  %v1550 = vpop.f32.mrf.mxu0
  %v1551 = vadd.f32 %v900, %v1550
  %v1552 = vpop.f32.mrf.mxu0
  %v1553 = vadd.f32 %v904, %v1552
  %1554 = vmatprep.mubr.bf16.mxu0 %v812
  %1555 = vmatmul.mubr.bf16.gmra.mxu0 %v811
  %v1556 = vpop.f32.mrf.mxu0
  %v1557 = vadd.f32 %v900, %v1556
  %v1558 = vpop.f32.mrf.mxu0
  %v1559 = vadd.f32 %v904, %v1558
  %v1560 = vpop.f32.mrf.mxu0
  %v1561 = vadd.f32 %v900, %v1560
  %v1562 = vpop.f32.mrf.mxu0
  %v1563 = vadd.f32 %v904, %v1562
  %1564 = vmatprep.mubr.bf16.mxu0 %v814
  %1565 = vmatmul.mubr.bf16.gmra.mxu0 %v813
  %v1566 = vpop.f32.mrf.mxu0
  %v1567 = vadd.f32 %v900, %v1566
  %v1568 = vpop.f32.mrf.mxu0
  %v1569 = vadd.f32 %v904, %v1568
  %v1570 = vpop.f32.mrf.mxu0
  %v1571 = vadd.f32 %v900, %v1570
  %v1572 = vpop.f32.mrf.mxu0
  %v1573 = vadd.f32 %v904, %v1572
  %1574 = vmatprep.mubr.bf16.mxu0 %v816
  %1575 = vmatmul.mubr.bf16.gmra.mxu0 %v815
  %v1576 = vpop.f32.mrf.mxu0
  %v1577 = vadd.f32 %v900, %v1576
  %v1578 = vpop.f32.mrf.mxu0
  %v1579 = vadd.f32 %v904, %v1578
  %v1580 = vpop.f32.mrf.mxu0
  %v1581 = vadd.f32 %v900, %v1580
  %v1582 = vpop.f32.mrf.mxu0
  %v1583 = vadd.f32 %v904, %v1582
  %1584 = vmatprep.mubr.bf16.mxu0 %v818
  %1585 = vmatmul.mubr.bf16.gmra.mxu0 %v817
  %v1586 = vpop.f32.mrf.mxu0
  %v1587 = vadd.f32 %v900, %v1586
  %v1588 = vpop.f32.mrf.mxu0
  %v1589 = vadd.f32 %v904, %v1588
  %v1590 = vpop.f32.mrf.mxu0
  %v1591 = vadd.f32 %v900, %v1590
  %v1592 = vpop.f32.mrf.mxu0
  %v1593 = vadd.f32 %v904, %v1592
  %1594 = vmatprep.mubr.bf16.mxu0 %v820
  %1595 = vmatmul.mubr.bf16.gmra.mxu0 %v819
  %v1596 = vpop.f32.mrf.mxu0
  %v1597 = vadd.f32 %v900, %v1596
  %v1598 = vpop.f32.mrf.mxu0
  %v1599 = vadd.f32 %v904, %v1598
  %v1600 = vpop.f32.mrf.mxu0
  %v1601 = vadd.f32 %v900, %v1600
  %v1602 = vpop.f32.mrf.mxu0
  %v1603 = vadd.f32 %v904, %v1602
  %1604 = vmatprep.mubr.bf16.mxu0 %v822
  %1605 = vmatmul.mubr.bf16.gmra.mxu0 %v821
  %v1606 = vpop.f32.mrf.mxu0
  %v1607 = vadd.f32 %v900, %v1606
  %v1608 = vpop.f32.mrf.mxu0
  %v1609 = vadd.f32 %v904, %v1608
  %v1610 = vpop.f32.mrf.mxu0
  %v1611 = vadd.f32 %v900, %v1610
  %v1612 = vpop.f32.mrf.mxu0
  %v1613 = vadd.f32 %v904, %v1612
  %1614 = vdwg.mxu0
  %v1615 = vmax.f32 %v1264, 0.0
  %v1616 = vmax.f32 %v1266, 0.0
  %v1617 = vmax.f32 %v1457, 0.0
  %v1618 = vmax.f32 %v1459, 0.0
  %v1619 = vmax.f32 %v1268, 0.0
  %v1620 = vmax.f32 %v1270, 0.0
  %v1621 = vmax.f32 %v1461, 0.0
  %v1622 = vmax.f32 %v1463, 0.0
  %v1623 = vmax.f32 %v1274, 0.0
  %v1624 = vmax.f32 %v1276, 0.0
  %v1625 = vmax.f32 %v1467, 0.0
  %v1626 = vmax.f32 %v1469, 0.0
  %v1627 = vmax.f32 %v1278, 0.0
  %v1628 = vmax.f32 %v1280, 0.0
  %v1629 = vmax.f32 %v1471, 0.0
  %v1630 = vmax.f32 %v1473, 0.0
  %v1631 = vmax.f32 %v1284, 0.0
  %v1632 = vmax.f32 %v1286, 0.0
  %v1633 = vmax.f32 %v1477, 0.0
  %v1634 = vmax.f32 %v1479, 0.0
  %v1635 = vmax.f32 %v1288, 0.0
  %v1636 = vmax.f32 %v1290, 0.0
  %v1637 = vmax.f32 %v1481, 0.0
  %v1638 = vmax.f32 %v1483, 0.0
  %v1639 = vmax.f32 %v1294, 0.0
  %v1640 = vmax.f32 %v1296, 0.0
  %v1641 = vmax.f32 %v1487, 0.0
  %v1642 = vmax.f32 %v1489, 0.0
  %v1643 = vmax.f32 %v1298, 0.0
  %v1644 = vmax.f32 %v1300, 0.0
  %v1645 = vmax.f32 %v1491, 0.0
  %v1646 = vmax.f32 %v1493, 0.0
  %v1647 = vmax.f32 %v1304, 0.0
  %v1648 = vmax.f32 %v1306, 0.0
  %v1649 = vmax.f32 %v1497, 0.0
  %v1650 = vmax.f32 %v1499, 0.0
  %v1651 = vmax.f32 %v1308, 0.0
  %v1652 = vmax.f32 %v1310, 0.0
  %v1653 = vmax.f32 %v1501, 0.0
  %v1654 = vmax.f32 %v1503, 0.0
  %v1655 = vmax.f32 %v1314, 0.0
  %v1656 = vmax.f32 %v1316, 0.0
  %v1657 = vmax.f32 %v1507, 0.0
  %v1658 = vmax.f32 %v1509, 0.0
  %v1659 = vmax.f32 %v1318, 0.0
  %v1660 = vmax.f32 %v1320, 0.0
  %v1661 = vmax.f32 %v1511, 0.0
  %v1662 = vmax.f32 %v1513, 0.0
  %v1663 = vmax.f32 %v1324, 0.0
  %v1664 = vmax.f32 %v1326, 0.0
  %v1665 = vmax.f32 %v1517, 0.0
  %v1666 = vmax.f32 %v1519, 0.0
  %v1667 = vmax.f32 %v1328, 0.0
  %v1668 = vmax.f32 %v1330, 0.0
  %v1669 = vmax.f32 %v1521, 0.0
  %v1670 = vmax.f32 %v1523, 0.0
  %v1671 = vmax.f32 %v1334, 0.0
  %v1672 = vmax.f32 %v1336, 0.0
  %v1673 = vmax.f32 %v1527, 0.0
  %v1674 = vmax.f32 %v1529, 0.0
  %v1675 = vmax.f32 %v1338, 0.0
  %v1676 = vmax.f32 %v1340, 0.0
  %v1677 = vmax.f32 %v1531, 0.0
  %v1678 = vmax.f32 %v1533, 0.0
  %v1679 = vmax.f32 %v1344, 0.0
  %v1680 = vmax.f32 %v1346, 0.0
  %v1681 = vmax.f32 %v1537, 0.0
  %v1682 = vmax.f32 %v1539, 0.0
  %v1683 = vmax.f32 %v1348, 0.0
  %v1684 = vmax.f32 %v1350, 0.0
  %v1685 = vmax.f32 %v1541, 0.0
  %v1686 = vmax.f32 %v1543, 0.0
  %v1687 = vmax.f32 %v1354, 0.0
  %v1688 = vmax.f32 %v1356, 0.0
  %v1689 = vmax.f32 %v1547, 0.0
  %v1690 = vmax.f32 %v1549, 0.0
  %v1691 = vmax.f32 %v1358, 0.0
  %v1692 = vmax.f32 %v1360, 0.0
  %v1693 = vmax.f32 %v1551, 0.0
  %v1694 = vmax.f32 %v1553, 0.0
  %v1695 = vmax.f32 %v1364, 0.0
  %v1696 = vmax.f32 %v1366, 0.0
  %v1697 = vmax.f32 %v1557, 0.0
  %v1698 = vmax.f32 %v1559, 0.0
  %v1699 = vmax.f32 %v1368, 0.0
  %v1700 = vmax.f32 %v1370, 0.0
  %v1701 = vmax.f32 %v1561, 0.0
  %v1702 = vmax.f32 %v1563, 0.0
  %v1703 = vmax.f32 %v1374, 0.0
  %v1704 = vmax.f32 %v1376, 0.0
  %v1705 = vmax.f32 %v1567, 0.0
  %v1706 = vmax.f32 %v1569, 0.0
  %v1707 = vmax.f32 %v1378, 0.0
  %v1708 = vmax.f32 %v1380, 0.0
  %v1709 = vmax.f32 %v1571, 0.0
  %v1710 = vmax.f32 %v1573, 0.0
  %v1711 = vmax.f32 %v1384, 0.0
  %v1712 = vmax.f32 %v1386, 0.0
  %v1713 = vmax.f32 %v1577, 0.0
  %v1714 = vmax.f32 %v1579, 0.0
  %v1715 = vmax.f32 %v1388, 0.0
  %v1716 = vmax.f32 %v1390, 0.0
  %v1717 = vmax.f32 %v1581, 0.0
  %v1718 = vmax.f32 %v1583, 0.0
  %v1719 = vmax.f32 %v1394, 0.0
  %v1720 = vmax.f32 %v1396, 0.0
  %v1721 = vmax.f32 %v1587, 0.0
  %v1722 = vmax.f32 %v1589, 0.0
  %v1723 = vmax.f32 %v1398, 0.0
  %v1724 = vmax.f32 %v1400, 0.0
  %v1725 = vmax.f32 %v1591, 0.0
  %v1726 = vmax.f32 %v1593, 0.0
  %v1727 = vmax.f32 %v1404, 0.0
  %v1728 = vmax.f32 %v1406, 0.0
  %v1729 = vmax.f32 %v1597, 0.0
  %v1730 = vmax.f32 %v1599, 0.0
  %v1731 = vmax.f32 %v1408, 0.0
  %v1732 = vmax.f32 %v1410, 0.0
  %v1733 = vmax.f32 %v1601, 0.0
  %v1734 = vmax.f32 %v1603, 0.0
  %v1735 = vmax.f32 %v1414, 0.0
  %v1736 = vmax.f32 %v1416, 0.0
  %v1737 = vmax.f32 %v1607, 0.0
  %v1738 = vmax.f32 %v1609, 0.0
  %v1739 = vmax.f32 %v1418, 0.0
  %v1740 = vmax.f32 %v1420, 0.0
  %v1741 = vmax.f32 %v1611, 0.0
  %v1742 = vmax.f32 %v1613, 0.0
  %v1743 = vpack.c.bf16 %v1619, %v1615
  %v1744 = vpack.c.bf16 %v1620, %v1616
  %v1745 = vpack.c.bf16 %v1621, %v1617
  %v1746 = vpack.c.bf16 %v1622, %v1618
  %v1747 = vpack.c.bf16 %v1627, %v1623
  %v1748 = vpack.c.bf16 %v1628, %v1624
  %v1749 = vpack.c.bf16 %v1629, %v1625
  %v1750 = vpack.c.bf16 %v1630, %v1626
  %v1751 = vpack.c.bf16 %v1635, %v1631
  %v1752 = vpack.c.bf16 %v1636, %v1632
  %v1753 = vpack.c.bf16 %v1637, %v1633
  %v1754 = vpack.c.bf16 %v1638, %v1634
  %v1755 = vpack.c.bf16 %v1643, %v1639
  %v1756 = vpack.c.bf16 %v1644, %v1640
  %v1757 = vpack.c.bf16 %v1645, %v1641
  %v1758 = vpack.c.bf16 %v1646, %v1642
  %v1759 = vpack.c.bf16 %v1651, %v1647
  %v1760 = vpack.c.bf16 %v1652, %v1648
  %v1761 = vpack.c.bf16 %v1653, %v1649
  %v1762 = vpack.c.bf16 %v1654, %v1650
  %v1763 = vpack.c.bf16 %v1659, %v1655
  %v1764 = vpack.c.bf16 %v1660, %v1656
  %v1765 = vpack.c.bf16 %v1661, %v1657
  %v1766 = vpack.c.bf16 %v1662, %v1658
  %v1767 = vpack.c.bf16 %v1667, %v1663
  %v1768 = vpack.c.bf16 %v1668, %v1664
  %v1769 = vpack.c.bf16 %v1669, %v1665
  %v1770 = vpack.c.bf16 %v1670, %v1666
  %v1771 = vpack.c.bf16 %v1675, %v1671
  %v1772 = vpack.c.bf16 %v1676, %v1672
  %v1773 = vpack.c.bf16 %v1677, %v1673
  %v1774 = vpack.c.bf16 %v1678, %v1674
  %v1775 = vpack.c.bf16 %v1683, %v1679
  %v1776 = vpack.c.bf16 %v1684, %v1680
  %v1777 = vpack.c.bf16 %v1685, %v1681
  %v1778 = vpack.c.bf16 %v1686, %v1682
  %v1779 = vpack.c.bf16 %v1691, %v1687
  %v1780 = vpack.c.bf16 %v1692, %v1688
  %v1781 = vpack.c.bf16 %v1693, %v1689
  %v1782 = vpack.c.bf16 %v1694, %v1690
  %v1783 = vpack.c.bf16 %v1699, %v1695
  %v1784 = vpack.c.bf16 %v1700, %v1696
  %v1785 = vpack.c.bf16 %v1701, %v1697
  %v1786 = vpack.c.bf16 %v1702, %v1698
  %v1787 = vpack.c.bf16 %v1707, %v1703
  %v1788 = vpack.c.bf16 %v1708, %v1704
  %v1789 = vpack.c.bf16 %v1709, %v1705
  %v1790 = vpack.c.bf16 %v1710, %v1706
  %v1791 = vpack.c.bf16 %v1715, %v1711
  %v1792 = vpack.c.bf16 %v1716, %v1712
  %v1793 = vpack.c.bf16 %v1717, %v1713
  %v1794 = vpack.c.bf16 %v1718, %v1714
  %v1795 = vpack.c.bf16 %v1723, %v1719
  %v1796 = vpack.c.bf16 %v1724, %v1720
  %v1797 = vpack.c.bf16 %v1725, %v1721
  %v1798 = vpack.c.bf16 %v1726, %v1722
  %v1799 = vpack.c.bf16 %v1731, %v1727
  %v1800 = vpack.c.bf16 %v1732, %v1728
  %v1801 = vpack.c.bf16 %v1733, %v1729
  %v1802 = vpack.c.bf16 %v1734, %v1730
  %v1803 = vpack.c.bf16 %v1739, %v1735
  %v1804 = vpack.c.bf16 %v1740, %v1736
  %v1805 = vpack.c.bf16 %v1741, %v1737
  %v1806 = vpack.c.bf16 %v1742, %v1738
  %v1807 = vld [vmem:[%s7] sm:$0xff]
  %v1808 = vld [vmem:[%s7 + $0x8] sm:$0xff]
  %v1809 = vld [vmem:[%s7 + $0x10] sm:$0xff]
  %v1810 = vld [vmem:[%s7 + $0x18] sm:$0xff]
  %v1811 = vld [vmem:[%s7 + $0x20] sm:$0xff]
  %v1812 = vld [vmem:[%s7 + $0x28] sm:$0xff]
  %v1813 = vld [vmem:[%s7 + $0x30] sm:$0xff]
  %v1814 = vld [vmem:[%s7 + $0x38] sm:$0xff]
  %v1815 = vld [vmem:[%s7 + $0x40] sm:$0xff]
  %v1816 = vld [vmem:[%s7 + $0x48] sm:$0xff]
  %v1817 = vld [vmem:[%s7 + $0x50] sm:$0xff]
  %v1818 = vld [vmem:[%s7 + $0x58] sm:$0xff]
  %v1819 = vld [vmem:[%s7 + $0x60] sm:$0xff]
  %v1820 = vld [vmem:[%s7 + $0x68] sm:$0xff]
  %v1821 = vld [vmem:[%s7 + $0x70] sm:$0xff]
  %v1822 = vld [vmem:[%s7 + $0x78] sm:$0xff]
  %v1823 = vld [vmem:[%s7 + $0x80] sm:$0xff]
  %v1824 = vld [vmem:[%s7 + $0x88] sm:$0xff]
  %v1825 = vld [vmem:[%s7 + $0x90] sm:$0xff]
  %v1826 = vld [vmem:[%s7 + $0x98] sm:$0xff]
  %v1827 = vld [vmem:[%s7 + $0xa0] sm:$0xff]
  %v1828 = vld [vmem:[%s7 + $0xa8] sm:$0xff]
  %v1829 = vld [vmem:[%s7 + $0xb0] sm:$0xff]
  %v1830 = vld [vmem:[%s7 + $0xb8] sm:$0xff]
  %v1831 = vld [vmem:[%s7 + $0xc0] sm:$0xff]
  %v1832 = vld [vmem:[%s7 + $0xc8] sm:$0xff]
  %v1833 = vld [vmem:[%s7 + $0xd0] sm:$0xff]
  %v1834 = vld [vmem:[%s7 + $0xd8] sm:$0xff]
  %v1835 = vld [vmem:[%s7 + $0xe0] sm:$0xff]
  %v1836 = vld [vmem:[%s7 + $0xe8] sm:$0xff]
  %v1837 = vld [vmem:[%s7 + $0xf0] sm:$0xff]
  %v1838 = vld [vmem:[%s7 + $0xf8] sm:$0xff]
  %v1839 = vld [vmem:[%s7 + $0x100] sm:$0xff]
  %v1840 = vld [vmem:[%s7 + $0x108] sm:$0xff]
  %v1841 = vld [vmem:[%s7 + $0x110] sm:$0xff]
  %v1842 = vld [vmem:[%s7 + $0x118] sm:$0xff]
  %v1843 = vld [vmem:[%s7 + $0x120] sm:$0xff]
  %v1844 = vld [vmem:[%s7 + $0x128] sm:$0xff]
  %v1845 = vld [vmem:[%s7 + $0x130] sm:$0xff]
  %v1846 = vld [vmem:[%s7 + $0x138] sm:$0xff]
  %v1847 = vld [vmem:[%s7 + $0x140] sm:$0xff]
  %v1848 = vld [vmem:[%s7 + $0x148] sm:$0xff]
  %v1849 = vld [vmem:[%s7 + $0x150] sm:$0xff]
  %v1850 = vld [vmem:[%s7 + $0x158] sm:$0xff]
  %v1851 = vld [vmem:[%s7 + $0x160] sm:$0xff]
  %v1852 = vld [vmem:[%s7 + $0x168] sm:$0xff]
  %v1853 = vld [vmem:[%s7 + $0x170] sm:$0xff]
  %v1854 = vld [vmem:[%s7 + $0x178] sm:$0xff]
  %v1855 = vld [vmem:[%s7 + $0x180] sm:$0xff]
  %v1856 = vld [vmem:[%s7 + $0x188] sm:$0xff]
  %v1857 = vld [vmem:[%s7 + $0x190] sm:$0xff]
  %v1858 = vld [vmem:[%s7 + $0x198] sm:$0xff]
  %v1859 = vld [vmem:[%s7 + $0x1a0] sm:$0xff]
  %v1860 = vld [vmem:[%s7 + $0x1a8] sm:$0xff]
  %v1861 = vld [vmem:[%s7 + $0x1b0] sm:$0xff]
  %v1862 = vld [vmem:[%s7 + $0x1b8] sm:$0xff]
  %v1863 = vld [vmem:[%s7 + $0x1c0] sm:$0xff]
  %v1864 = vld [vmem:[%s7 + $0x1c8] sm:$0xff]
  %v1865 = vld [vmem:[%s7 + $0x1d0] sm:$0xff]
  %v1866 = vld [vmem:[%s7 + $0x1d8] sm:$0xff]
  %v1867 = vld [vmem:[%s7 + $0x1e0] sm:$0xff]
  %v1868 = vld [vmem:[%s7 + $0x1e8] sm:$0xff]
  %v1869 = vld [vmem:[%s7 + $0x1f0] sm:$0xff]
  %v1870 = vld [vmem:[%s7 + $0x1f8] sm:$0xff]
  %v1871 = vld [vmem:[%s7 + $0x200] sm:$0xff]
  %v1872 = vld [vmem:[%s7 + $0x208] sm:$0xff]
  %v1873 = vld [vmem:[%s7 + $0x210] sm:$0xff]
  %v1874 = vld [vmem:[%s7 + $0x218] sm:$0xff]
  %v1875 = vld [vmem:[%s7 + $0x220] sm:$0xff]
  %v1876 = vld [vmem:[%s7 + $0x228] sm:$0xff]
  %v1877 = vld [vmem:[%s7 + $0x230] sm:$0xff]
  %v1878 = vld [vmem:[%s7 + $0x238] sm:$0xff]
  %v1879 = vld [vmem:[%s7 + $0x240] sm:$0xff]
  %v1880 = vld [vmem:[%s7 + $0x248] sm:$0xff]
  %v1881 = vld [vmem:[%s7 + $0x250] sm:$0xff]
  %v1882 = vld [vmem:[%s7 + $0x258] sm:$0xff]
  %v1883 = vld [vmem:[%s7 + $0x260] sm:$0xff]
  %v1884 = vld [vmem:[%s7 + $0x268] sm:$0xff]
  %v1885 = vld [vmem:[%s7 + $0x270] sm:$0xff]
  %v1886 = vld [vmem:[%s7 + $0x278] sm:$0xff]
  %v1887 = vld [vmem:[%s7 + $0x280] sm:$0xff]
  %v1888 = vld [vmem:[%s7 + $0x288] sm:$0xff]
  %v1889 = vld [vmem:[%s7 + $0x290] sm:$0xff]
  %v1890 = vld [vmem:[%s7 + $0x298] sm:$0xff]
  %v1891 = vld [vmem:[%s7 + $0x2a0] sm:$0xff]
  %v1892 = vld [vmem:[%s7 + $0x2a8] sm:$0xff]
  %v1893 = vld [vmem:[%s7 + $0x2b0] sm:$0xff]
  %v1894 = vld [vmem:[%s7 + $0x2b8] sm:$0xff]
  %v1895 = vld [vmem:[%s7 + $0x2c0] sm:$0xff]
  %v1896 = vld [vmem:[%s7 + $0x2c8] sm:$0xff]
  %v1897 = vld [vmem:[%s7 + $0x2d0] sm:$0xff]
  %v1898 = vld [vmem:[%s7 + $0x2d8] sm:$0xff]
  %v1899 = vld [vmem:[%s7 + $0x2e0] sm:$0xff]
  %v1900 = vld [vmem:[%s7 + $0x2e8] sm:$0xff]
  %v1901 = vld [vmem:[%s7 + $0x2f0] sm:$0xff]
  %v1902 = vld [vmem:[%s7 + $0x2f8] sm:$0xff]
  %v1903 = vld [vmem:[%s7 + $0x300] sm:$0xff]
  %v1904 = vld [vmem:[%s7 + $0x308] sm:$0xff]
  %v1905 = vld [vmem:[%s7 + $0x310] sm:$0xff]
  %v1906 = vld [vmem:[%s7 + $0x318] sm:$0xff]
  %v1907 = vld [vmem:[%s7 + $0x320] sm:$0xff]
  %v1908 = vld [vmem:[%s7 + $0x328] sm:$0xff]
  %v1909 = vld [vmem:[%s7 + $0x330] sm:$0xff]
  %v1910 = vld [vmem:[%s7 + $0x338] sm:$0xff]
  %v1911 = vld [vmem:[%s7 + $0x340] sm:$0xff]
  %v1912 = vld [vmem:[%s7 + $0x348] sm:$0xff]
  %v1913 = vld [vmem:[%s7 + $0x350] sm:$0xff]
  %v1914 = vld [vmem:[%s7 + $0x358] sm:$0xff]
  %v1915 = vld [vmem:[%s7 + $0x360] sm:$0xff]
  %v1916 = vld [vmem:[%s7 + $0x368] sm:$0xff]
  %v1917 = vld [vmem:[%s7 + $0x370] sm:$0xff]
  %v1918 = vld [vmem:[%s7 + $0x378] sm:$0xff]
  %v1919 = vld [vmem:[%s7 + $0x380] sm:$0xff]
  %v1920 = vld [vmem:[%s7 + $0x388] sm:$0xff]
  %v1921 = vld [vmem:[%s7 + $0x390] sm:$0xff]
  %v1922 = vld [vmem:[%s7 + $0x398] sm:$0xff]
  %v1923 = vld [vmem:[%s7 + $0x3a0] sm:$0xff]
  %v1924 = vld [vmem:[%s7 + $0x3a8] sm:$0xff]
  %v1925 = vld [vmem:[%s7 + $0x3b0] sm:$0xff]
  %v1926 = vld [vmem:[%s7 + $0x3b8] sm:$0xff]
  %v1927 = vld [vmem:[%s7 + $0x3c0] sm:$0xff]
  %v1928 = vld [vmem:[%s7 + $0x3c8] sm:$0xff]
  %v1929 = vld [vmem:[%s7 + $0x3d0] sm:$0xff]
  %v1930 = vld [vmem:[%s7 + $0x3d8] sm:$0xff]
  %v1931 = vld [vmem:[%s7 + $0x3e0] sm:$0xff]
  %v1932 = vld [vmem:[%s7 + $0x3e8] sm:$0xff]
  %v1933 = vld [vmem:[%s7 + $0x3f0] sm:$0xff]
  %v1934 = vld [vmem:[%s7 + $0x3f8] sm:$0xff]
  %v1935 = vld [vmem:[%s7 + $0x400] sm:$0xff]
  %v1936 = vld [vmem:[%s7 + $0x408] sm:$0xff]
  %v1937 = vld [vmem:[%s7 + $0x410] sm:$0xff]
  %v1938 = vld [vmem:[%s7 + $0x418] sm:$0xff]
  %v1939 = vld [vmem:[%s7 + $0x420] sm:$0xff]
  %v1940 = vld [vmem:[%s7 + $0x428] sm:$0xff]
  %v1941 = vld [vmem:[%s7 + $0x430] sm:$0xff]
  %v1942 = vld [vmem:[%s7 + $0x438] sm:$0xff]
  %v1943 = vld [vmem:[%s7 + $0x440] sm:$0xff]
  %v1944 = vld [vmem:[%s7 + $0x448] sm:$0xff]
  %v1945 = vld [vmem:[%s7 + $0x450] sm:$0xff]
  %v1946 = vld [vmem:[%s7 + $0x458] sm:$0xff]
  %v1947 = vld [vmem:[%s7 + $0x460] sm:$0xff]
  %v1948 = vld [vmem:[%s7 + $0x468] sm:$0xff]
  %v1949 = vld [vmem:[%s7 + $0x470] sm:$0xff]
  %v1950 = vld [vmem:[%s7 + $0x478] sm:$0xff]
  %v1951 = vld [vmem:[%s7 + $0x480] sm:$0xff]
  %v1952 = vld [vmem:[%s7 + $0x488] sm:$0xff]
  %v1953 = vld [vmem:[%s7 + $0x490] sm:$0xff]
  %v1954 = vld [vmem:[%s7 + $0x498] sm:$0xff]
  %v1955 = vld [vmem:[%s7 + $0x4a0] sm:$0xff]
  %v1956 = vld [vmem:[%s7 + $0x4a8] sm:$0xff]
  %v1957 = vld [vmem:[%s7 + $0x4b0] sm:$0xff]
  %v1958 = vld [vmem:[%s7 + $0x4b8] sm:$0xff]
  %v1959 = vld [vmem:[%s7 + $0x4c0] sm:$0xff]
  %v1960 = vld [vmem:[%s7 + $0x4c8] sm:$0xff]
  %v1961 = vld [vmem:[%s7 + $0x4d0] sm:$0xff]
  %v1962 = vld [vmem:[%s7 + $0x4d8] sm:$0xff]
  %v1963 = vld [vmem:[%s7 + $0x4e0] sm:$0xff]
  %v1964 = vld [vmem:[%s7 + $0x4e8] sm:$0xff]
  %v1965 = vld [vmem:[%s7 + $0x4f0] sm:$0xff]
  %v1966 = vld [vmem:[%s7 + $0x4f8] sm:$0xff]
  %v1967 = vld [vmem:[%s7 + $0x500] sm:$0xff]
  %v1968 = vld [vmem:[%s7 + $0x508] sm:$0xff]
  %v1969 = vld [vmem:[%s7 + $0x510] sm:$0xff]
  %v1970 = vld [vmem:[%s7 + $0x518] sm:$0xff]
  %v1971 = vld [vmem:[%s7 + $0x520] sm:$0xff]
  %v1972 = vld [vmem:[%s7 + $0x528] sm:$0xff]
  %v1973 = vld [vmem:[%s7 + $0x530] sm:$0xff]
  %v1974 = vld [vmem:[%s7 + $0x538] sm:$0xff]
  %v1975 = vld [vmem:[%s7 + $0x540] sm:$0xff]
  %v1976 = vld [vmem:[%s7 + $0x548] sm:$0xff]
  %v1977 = vld [vmem:[%s7 + $0x550] sm:$0xff]
  %v1978 = vld [vmem:[%s7 + $0x558] sm:$0xff]
  %v1979 = vld [vmem:[%s7 + $0x560] sm:$0xff]
  %v1980 = vld [vmem:[%s7 + $0x568] sm:$0xff]
  %v1981 = vld [vmem:[%s7 + $0x570] sm:$0xff]
  %v1982 = vld [vmem:[%s7 + $0x578] sm:$0xff]
  %v1983 = vld [vmem:[%s7 + $0x580] sm:$0xff]
  %v1984 = vld [vmem:[%s7 + $0x588] sm:$0xff]
  %v1985 = vld [vmem:[%s7 + $0x590] sm:$0xff]
  %v1986 = vld [vmem:[%s7 + $0x598] sm:$0xff]
  %v1987 = vld [vmem:[%s7 + $0x5a0] sm:$0xff]
  %v1988 = vld [vmem:[%s7 + $0x5a8] sm:$0xff]
  %v1989 = vld [vmem:[%s7 + $0x5b0] sm:$0xff]
  %v1990 = vld [vmem:[%s7 + $0x5b8] sm:$0xff]
  %v1991 = vld [vmem:[%s7 + $0x5c0] sm:$0xff]
  %v1992 = vld [vmem:[%s7 + $0x5c8] sm:$0xff]
  %v1993 = vld [vmem:[%s7 + $0x5d0] sm:$0xff]
  %v1994 = vld [vmem:[%s7 + $0x5d8] sm:$0xff]
  %v1995 = vld [vmem:[%s7 + $0x5e0] sm:$0xff]
  %v1996 = vld [vmem:[%s7 + $0x5e8] sm:$0xff]
  %v1997 = vld [vmem:[%s7 + $0x5f0] sm:$0xff]
  %v1998 = vld [vmem:[%s7 + $0x5f8] sm:$0xff]
  %v1999 = vld [vmem:[%s8] sm:$0x3f]
  %v2001 = vlaneseq
  %v2002 = vshrl.u32 %v2001, 7
  %v2003 = vsub.s32 0, %v2002
  %v2004 = vrot.slane %v1999, %v2003
  %v2005 = vlaneseq
  %v2006 = vshrl.u32 %v2005, 7
  %v2007 = vsub.s32 1, %v2006
  %v2008 = vrot.slane %v1999, %v2007
  %v2009 = vlaneseq
  %v2010 = vshrl.u32 %v2009, 7
  %v2011 = vsub.s32 2, %v2010
  %v2012 = vrot.slane %v1999, %v2011
  %v2013 = vlaneseq
  %v2014 = vshrl.u32 %v2013, 7
  %v2015 = vsub.s32 3, %v2014
  %v2016 = vrot.slane %v1999, %v2015
  %v2017 = vlaneseq
  %v2018 = vshrl.u32 %v2017, 7
  %v2019 = vsub.s32 4, %v2018
  %v2020 = vrot.slane %v1999, %v2019
  %v2021 = vlaneseq
  %v2022 = vshrl.u32 %v2021, 7
  %v2023 = vsub.s32 5, %v2022
  %v2024 = vrot.slane %v1999, %v2023
  %v2223 = vunpack.c.l.b16 %v1807
  %v2224 = vunpack.c.h.b16 %v1807
  %v2225 = vunpack.c.l.b16 %v1808
  %v2226 = vunpack.c.h.b16 %v1808
  %v2227 = vunpack.c.l.b16 %v1809
  %v2228 = vunpack.c.h.b16 %v1809
  %v2229 = vunpack.c.l.b16 %v1810
  %v2230 = vunpack.c.h.b16 %v1810
  %v2231 = vunpack.c.l.b16 %v1811
  %v2232 = vunpack.c.h.b16 %v1811
  %v2233 = vunpack.c.l.b16 %v1812
  %v2234 = vunpack.c.h.b16 %v1812
  %v2235 = vunpack.c.l.b16 %v1813
  %v2236 = vunpack.c.h.b16 %v1813
  %v2237 = vunpack.c.l.b16 %v1814
  %v2238 = vunpack.c.h.b16 %v1814
  %v2239 = vunpack.c.l.b16 %v1815
  %v2240 = vunpack.c.h.b16 %v1815
  %v2241 = vunpack.c.l.b16 %v1816
  %v2242 = vunpack.c.h.b16 %v1816
  %v2243 = vunpack.c.l.b16 %v1817
  %v2244 = vunpack.c.h.b16 %v1817
  %v2245 = vunpack.c.l.b16 %v1818
  %v2246 = vunpack.c.h.b16 %v1818
  %v2247 = vunpack.c.l.b16 %v1819
  %v2248 = vunpack.c.h.b16 %v1819
  %v2249 = vunpack.c.l.b16 %v1820
  %v2250 = vunpack.c.h.b16 %v1820
  %v2251 = vunpack.c.l.b16 %v1821
  %v2252 = vunpack.c.h.b16 %v1821
  %v2253 = vunpack.c.l.b16 %v1822
  %v2254 = vunpack.c.h.b16 %v1822
  %v2255 = vunpack.c.l.b16 %v1823
  %v2256 = vunpack.c.h.b16 %v1823
  %v2257 = vunpack.c.l.b16 %v1824
  %v2258 = vunpack.c.h.b16 %v1824
  %v2259 = vunpack.c.l.b16 %v1825
  %v2260 = vunpack.c.h.b16 %v1825
  %v2261 = vunpack.c.l.b16 %v1826
  %v2262 = vunpack.c.h.b16 %v1826
  %v2263 = vunpack.c.l.b16 %v1827
  %v2264 = vunpack.c.h.b16 %v1827
  %v2265 = vunpack.c.l.b16 %v1828
  %v2266 = vunpack.c.h.b16 %v1828
  %v2267 = vunpack.c.l.b16 %v1829
  %v2268 = vunpack.c.h.b16 %v1829
  %v2269 = vunpack.c.l.b16 %v1830
  %v2270 = vunpack.c.h.b16 %v1830
  %v2271 = vunpack.c.l.b16 %v1831
  %v2272 = vunpack.c.h.b16 %v1831
  %v2273 = vunpack.c.l.b16 %v1832
  %v2274 = vunpack.c.h.b16 %v1832
  %v2275 = vunpack.c.l.b16 %v1833
  %v2276 = vunpack.c.h.b16 %v1833
  %v2277 = vunpack.c.l.b16 %v1834
  %v2278 = vunpack.c.h.b16 %v1834
  %v2279 = vunpack.c.l.b16 %v1835
  %v2280 = vunpack.c.h.b16 %v1835
  %v2281 = vunpack.c.l.b16 %v1836
  %v2282 = vunpack.c.h.b16 %v1836
  %v2283 = vunpack.c.l.b16 %v1837
  %v2284 = vunpack.c.h.b16 %v1837
  %v2285 = vunpack.c.l.b16 %v1838
  %v2286 = vunpack.c.h.b16 %v1838
  %v2287 = vunpack.c.l.b16 %v1839
  %v2288 = vunpack.c.h.b16 %v1839
  %v2289 = vunpack.c.l.b16 %v1840
  %v2290 = vunpack.c.h.b16 %v1840
  %v2291 = vunpack.c.l.b16 %v1841
  %v2292 = vunpack.c.h.b16 %v1841
  %v2293 = vunpack.c.l.b16 %v1842
  %v2294 = vunpack.c.h.b16 %v1842
  %v2295 = vunpack.c.l.b16 %v1843
  %v2296 = vunpack.c.h.b16 %v1843
  %v2297 = vunpack.c.l.b16 %v1844
  %v2298 = vunpack.c.h.b16 %v1844
  %v2299 = vunpack.c.l.b16 %v1845
  %v2300 = vunpack.c.h.b16 %v1845
  %v2301 = vunpack.c.l.b16 %v1846
  %v2302 = vunpack.c.h.b16 %v1846
  %v2303 = vunpack.c.l.b16 %v1847
  %v2304 = vunpack.c.h.b16 %v1847
  %v2305 = vunpack.c.l.b16 %v1848
  %v2306 = vunpack.c.h.b16 %v1848
  %v2307 = vunpack.c.l.b16 %v1849
  %v2308 = vunpack.c.h.b16 %v1849
  %v2309 = vunpack.c.l.b16 %v1850
  %v2310 = vunpack.c.h.b16 %v1850
  %v2311 = vunpack.c.l.b16 %v1851
  %v2312 = vunpack.c.h.b16 %v1851
  %v2313 = vunpack.c.l.b16 %v1852
  %v2314 = vunpack.c.h.b16 %v1852
  %v2315 = vunpack.c.l.b16 %v1853
  %v2316 = vunpack.c.h.b16 %v1853
  %v2317 = vunpack.c.l.b16 %v1854
  %v2318 = vunpack.c.h.b16 %v1854
  %v2319 = vunpack.c.l.b16 %v1855
  %v2320 = vunpack.c.h.b16 %v1855
  %v2321 = vunpack.c.l.b16 %v1856
  %v2322 = vunpack.c.h.b16 %v1856
  %v2323 = vunpack.c.l.b16 %v1857
  %v2324 = vunpack.c.h.b16 %v1857
  %v2325 = vunpack.c.l.b16 %v1858
  %v2326 = vunpack.c.h.b16 %v1858
  %v2327 = vunpack.c.l.b16 %v1859
  %v2328 = vunpack.c.h.b16 %v1859
  %v2329 = vunpack.c.l.b16 %v1860
  %v2330 = vunpack.c.h.b16 %v1860
  %v2331 = vunpack.c.l.b16 %v1861
  %v2332 = vunpack.c.h.b16 %v1861
  %v2333 = vunpack.c.l.b16 %v1862
  %v2334 = vunpack.c.h.b16 %v1862
  %v2335 = vunpack.c.l.b16 %v1863
  %v2336 = vunpack.c.h.b16 %v1863
  %v2337 = vunpack.c.l.b16 %v1864
  %v2338 = vunpack.c.h.b16 %v1864
  %v2339 = vunpack.c.l.b16 %v1865
  %v2340 = vunpack.c.h.b16 %v1865
  %v2341 = vunpack.c.l.b16 %v1866
  %v2342 = vunpack.c.h.b16 %v1866
  %v2343 = vunpack.c.l.b16 %v1867
  %v2344 = vunpack.c.h.b16 %v1867
  %v2345 = vunpack.c.l.b16 %v1868
  %v2346 = vunpack.c.h.b16 %v1868
  %v2347 = vunpack.c.l.b16 %v1869
  %v2348 = vunpack.c.h.b16 %v1869
  %v2349 = vunpack.c.l.b16 %v1870
  %v2350 = vunpack.c.h.b16 %v1870
  %v2351 = vunpack.c.l.b16 %v1871
  %v2352 = vunpack.c.h.b16 %v1871
  %v2353 = vunpack.c.l.b16 %v1872
  %v2354 = vunpack.c.h.b16 %v1872
  %v2355 = vunpack.c.l.b16 %v1873
  %v2356 = vunpack.c.h.b16 %v1873
  %v2357 = vunpack.c.l.b16 %v1874
  %v2358 = vunpack.c.h.b16 %v1874
  %v2359 = vunpack.c.l.b16 %v1875
  %v2360 = vunpack.c.h.b16 %v1875
  %v2361 = vunpack.c.l.b16 %v1876
  %v2362 = vunpack.c.h.b16 %v1876
  %v2363 = vunpack.c.l.b16 %v1877
  %v2364 = vunpack.c.h.b16 %v1877
  %v2365 = vunpack.c.l.b16 %v1878
  %v2366 = vunpack.c.h.b16 %v1878
  %v2367 = vunpack.c.l.b16 %v1879
  %v2368 = vunpack.c.h.b16 %v1879
  %v2369 = vunpack.c.l.b16 %v1880
  %v2370 = vunpack.c.h.b16 %v1880
  %v2371 = vunpack.c.l.b16 %v1881
  %v2372 = vunpack.c.h.b16 %v1881
  %v2373 = vunpack.c.l.b16 %v1882
  %v2374 = vunpack.c.h.b16 %v1882
  %v2375 = vunpack.c.l.b16 %v1883
  %v2376 = vunpack.c.h.b16 %v1883
  %v2377 = vunpack.c.l.b16 %v1884
  %v2378 = vunpack.c.h.b16 %v1884
  %v2379 = vunpack.c.l.b16 %v1885
  %v2380 = vunpack.c.h.b16 %v1885
  %v2381 = vunpack.c.l.b16 %v1886
  %v2382 = vunpack.c.h.b16 %v1886
  %v2383 = vunpack.c.l.b16 %v1887
  %v2384 = vunpack.c.h.b16 %v1887
  %v2385 = vunpack.c.l.b16 %v1888
  %v2386 = vunpack.c.h.b16 %v1888
  %v2387 = vunpack.c.l.b16 %v1889
  %v2388 = vunpack.c.h.b16 %v1889
  %v2389 = vunpack.c.l.b16 %v1890
  %v2390 = vunpack.c.h.b16 %v1890
  %v2391 = vunpack.c.l.b16 %v1891
  %v2392 = vunpack.c.h.b16 %v1891
  %v2393 = vunpack.c.l.b16 %v1892
  %v2394 = vunpack.c.h.b16 %v1892
  %v2395 = vunpack.c.l.b16 %v1893
  %v2396 = vunpack.c.h.b16 %v1893
  %v2397 = vunpack.c.l.b16 %v1894
  %v2398 = vunpack.c.h.b16 %v1894
  %v2399 = vunpack.c.l.b16 %v1895
  %v2400 = vunpack.c.h.b16 %v1895
  %v2401 = vunpack.c.l.b16 %v1896
  %v2402 = vunpack.c.h.b16 %v1896
  %v2403 = vunpack.c.l.b16 %v1897
  %v2404 = vunpack.c.h.b16 %v1897
  %v2405 = vunpack.c.l.b16 %v1898
  %v2406 = vunpack.c.h.b16 %v1898
  %v2407 = vunpack.c.l.b16 %v1899
  %v2408 = vunpack.c.h.b16 %v1899
  %v2409 = vunpack.c.l.b16 %v1900
  %v2410 = vunpack.c.h.b16 %v1900
  %v2411 = vunpack.c.l.b16 %v1901
  %v2412 = vunpack.c.h.b16 %v1901
  %v2413 = vunpack.c.l.b16 %v1902
  %v2414 = vunpack.c.h.b16 %v1902
  %v2415 = vunpack.c.l.b16 %v1903
  %v2416 = vunpack.c.h.b16 %v1903
  %v2417 = vunpack.c.l.b16 %v1904
  %v2418 = vunpack.c.h.b16 %v1904
  %v2419 = vunpack.c.l.b16 %v1905
  %v2420 = vunpack.c.h.b16 %v1905
  %v2421 = vunpack.c.l.b16 %v1906
  %v2422 = vunpack.c.h.b16 %v1906
  %v2423 = vunpack.c.l.b16 %v1907
  %v2424 = vunpack.c.h.b16 %v1907
  %v2425 = vunpack.c.l.b16 %v1908
  %v2426 = vunpack.c.h.b16 %v1908
  %v2427 = vunpack.c.l.b16 %v1909
  %v2428 = vunpack.c.h.b16 %v1909
  %v2429 = vunpack.c.l.b16 %v1910
  %v2430 = vunpack.c.h.b16 %v1910
  %v2431 = vunpack.c.l.b16 %v1911
  %v2432 = vunpack.c.h.b16 %v1911
  %v2433 = vunpack.c.l.b16 %v1912
  %v2434 = vunpack.c.h.b16 %v1912
  %v2435 = vunpack.c.l.b16 %v1913
  %v2436 = vunpack.c.h.b16 %v1913
  %v2437 = vunpack.c.l.b16 %v1914
  %v2438 = vunpack.c.h.b16 %v1914
  %v2439 = vunpack.c.l.b16 %v1915
  %v2440 = vunpack.c.h.b16 %v1915
  %v2441 = vunpack.c.l.b16 %v1916
  %v2442 = vunpack.c.h.b16 %v1916
  %v2443 = vunpack.c.l.b16 %v1917
  %v2444 = vunpack.c.h.b16 %v1917
  %v2445 = vunpack.c.l.b16 %v1918
  %v2446 = vunpack.c.h.b16 %v1918
  %v2447 = vunpack.c.l.b16 %v1919
  %v2448 = vunpack.c.h.b16 %v1919
  %v2449 = vunpack.c.l.b16 %v1920
  %v2450 = vunpack.c.h.b16 %v1920
  %v2451 = vunpack.c.l.b16 %v1921
  %v2452 = vunpack.c.h.b16 %v1921
  %v2453 = vunpack.c.l.b16 %v1922
  %v2454 = vunpack.c.h.b16 %v1922
  %v2455 = vunpack.c.l.b16 %v1923
  %v2456 = vunpack.c.h.b16 %v1923
  %v2457 = vunpack.c.l.b16 %v1924
  %v2458 = vunpack.c.h.b16 %v1924
  %v2459 = vunpack.c.l.b16 %v1925
  %v2460 = vunpack.c.h.b16 %v1925
  %v2461 = vunpack.c.l.b16 %v1926
  %v2462 = vunpack.c.h.b16 %v1926
  %v2463 = vunpack.c.l.b16 %v1927
  %v2464 = vunpack.c.h.b16 %v1927
  %v2465 = vunpack.c.l.b16 %v1928
  %v2466 = vunpack.c.h.b16 %v1928
  %v2467 = vunpack.c.l.b16 %v1929
  %v2468 = vunpack.c.h.b16 %v1929
  %v2469 = vunpack.c.l.b16 %v1930
  %v2470 = vunpack.c.h.b16 %v1930
  %v2471 = vunpack.c.l.b16 %v1931
  %v2472 = vunpack.c.h.b16 %v1931
  %v2473 = vunpack.c.l.b16 %v1932
  %v2474 = vunpack.c.h.b16 %v1932
  %v2475 = vunpack.c.l.b16 %v1933
  %v2476 = vunpack.c.h.b16 %v1933
  %v2477 = vunpack.c.l.b16 %v1934
  %v2478 = vunpack.c.h.b16 %v1934
  %v2479 = vunpack.c.l.b16 %v1935
  %v2480 = vunpack.c.h.b16 %v1935
  %v2481 = vunpack.c.l.b16 %v1936
  %v2482 = vunpack.c.h.b16 %v1936
  %v2483 = vunpack.c.l.b16 %v1937
  %v2484 = vunpack.c.h.b16 %v1937
  %v2485 = vunpack.c.l.b16 %v1938
  %v2486 = vunpack.c.h.b16 %v1938
  %v2487 = vunpack.c.l.b16 %v1939
  %v2488 = vunpack.c.h.b16 %v1939
  %v2489 = vunpack.c.l.b16 %v1940
  %v2490 = vunpack.c.h.b16 %v1940
  %v2491 = vunpack.c.l.b16 %v1941
  %v2492 = vunpack.c.h.b16 %v1941
  %v2493 = vunpack.c.l.b16 %v1942
  %v2494 = vunpack.c.h.b16 %v1942
  %v2495 = vunpack.c.l.b16 %v1943
  %v2496 = vunpack.c.h.b16 %v1943
  %v2497 = vunpack.c.l.b16 %v1944
  %v2498 = vunpack.c.h.b16 %v1944
  %v2499 = vunpack.c.l.b16 %v1945
  %v2500 = vunpack.c.h.b16 %v1945
  %v2501 = vunpack.c.l.b16 %v1946
  %v2502 = vunpack.c.h.b16 %v1946
  %v2503 = vunpack.c.l.b16 %v1947
  %v2504 = vunpack.c.h.b16 %v1947
  %v2505 = vunpack.c.l.b16 %v1948
  %v2506 = vunpack.c.h.b16 %v1948
  %v2507 = vunpack.c.l.b16 %v1949
  %v2508 = vunpack.c.h.b16 %v1949
  %v2509 = vunpack.c.l.b16 %v1950
  %v2510 = vunpack.c.h.b16 %v1950
  %v2511 = vunpack.c.l.b16 %v1951
  %v2512 = vunpack.c.h.b16 %v1951
  %v2513 = vunpack.c.l.b16 %v1952
  %v2514 = vunpack.c.h.b16 %v1952
  %v2515 = vunpack.c.l.b16 %v1953
  %v2516 = vunpack.c.h.b16 %v1953
  %v2517 = vunpack.c.l.b16 %v1954
  %v2518 = vunpack.c.h.b16 %v1954
  %v2519 = vunpack.c.l.b16 %v1955
  %v2520 = vunpack.c.h.b16 %v1955
  %v2521 = vunpack.c.l.b16 %v1956
  %v2522 = vunpack.c.h.b16 %v1956
  %v2523 = vunpack.c.l.b16 %v1957
  %v2524 = vunpack.c.h.b16 %v1957
  %v2525 = vunpack.c.l.b16 %v1958
  %v2526 = vunpack.c.h.b16 %v1958
  %v2527 = vunpack.c.l.b16 %v1959
  %v2528 = vunpack.c.h.b16 %v1959
  %v2529 = vunpack.c.l.b16 %v1960
  %v2530 = vunpack.c.h.b16 %v1960
  %v2531 = vunpack.c.l.b16 %v1961
  %v2532 = vunpack.c.h.b16 %v1961
  %v2533 = vunpack.c.l.b16 %v1962
  %v2534 = vunpack.c.h.b16 %v1962
  %v2535 = vunpack.c.l.b16 %v1963
  %v2536 = vunpack.c.h.b16 %v1963
  %v2537 = vunpack.c.l.b16 %v1964
  %v2538 = vunpack.c.h.b16 %v1964
  %v2539 = vunpack.c.l.b16 %v1965
  %v2540 = vunpack.c.h.b16 %v1965
  %v2541 = vunpack.c.l.b16 %v1966
  %v2542 = vunpack.c.h.b16 %v1966
  %v2543 = vunpack.c.l.b16 %v1967
  %v2544 = vunpack.c.h.b16 %v1967
  %v2545 = vunpack.c.l.b16 %v1968
  %v2546 = vunpack.c.h.b16 %v1968
  %v2547 = vunpack.c.l.b16 %v1969
  %v2548 = vunpack.c.h.b16 %v1969
  %v2549 = vunpack.c.l.b16 %v1970
  %v2550 = vunpack.c.h.b16 %v1970
  %v2551 = vunpack.c.l.b16 %v1971
  %v2552 = vunpack.c.h.b16 %v1971
  %v2553 = vunpack.c.l.b16 %v1972
  %v2554 = vunpack.c.h.b16 %v1972
  %v2555 = vunpack.c.l.b16 %v1973
  %v2556 = vunpack.c.h.b16 %v1973
  %v2557 = vunpack.c.l.b16 %v1974
  %v2558 = vunpack.c.h.b16 %v1974
  %v2559 = vunpack.c.l.b16 %v1975
  %v2560 = vunpack.c.h.b16 %v1975
  %v2561 = vunpack.c.l.b16 %v1976
  %v2562 = vunpack.c.h.b16 %v1976
  %v2563 = vunpack.c.l.b16 %v1977
  %v2564 = vunpack.c.h.b16 %v1977
  %v2565 = vunpack.c.l.b16 %v1978
  %v2566 = vunpack.c.h.b16 %v1978
  %v2567 = vunpack.c.l.b16 %v1979
  %v2568 = vunpack.c.h.b16 %v1979
  %v2569 = vunpack.c.l.b16 %v1980
  %v2570 = vunpack.c.h.b16 %v1980
  %v2571 = vunpack.c.l.b16 %v1981
  %v2572 = vunpack.c.h.b16 %v1981
  %v2573 = vunpack.c.l.b16 %v1982
  %v2574 = vunpack.c.h.b16 %v1982
  %v2575 = vunpack.c.l.b16 %v1983
  %v2576 = vunpack.c.h.b16 %v1983
  %v2577 = vunpack.c.l.b16 %v1984
  %v2578 = vunpack.c.h.b16 %v1984
  %v2579 = vunpack.c.l.b16 %v1985
  %v2580 = vunpack.c.h.b16 %v1985
  %v2581 = vunpack.c.l.b16 %v1986
  %v2582 = vunpack.c.h.b16 %v1986
  %v2583 = vunpack.c.l.b16 %v1987
  %v2584 = vunpack.c.h.b16 %v1987
  %v2585 = vunpack.c.l.b16 %v1988
  %v2586 = vunpack.c.h.b16 %v1988
  %v2587 = vunpack.c.l.b16 %v1989
  %v2588 = vunpack.c.h.b16 %v1989
  %v2589 = vunpack.c.l.b16 %v1990
  %v2590 = vunpack.c.h.b16 %v1990
  %v2591 = vunpack.c.l.b16 %v1991
  %v2592 = vunpack.c.h.b16 %v1991
  %v2593 = vunpack.c.l.b16 %v1992
  %v2594 = vunpack.c.h.b16 %v1992
  %v2595 = vunpack.c.l.b16 %v1993
  %v2596 = vunpack.c.h.b16 %v1993
  %v2597 = vunpack.c.l.b16 %v1994
  %v2598 = vunpack.c.h.b16 %v1994
  %v2599 = vunpack.c.l.b16 %v1995
  %v2600 = vunpack.c.h.b16 %v1995
  %v2601 = vunpack.c.l.b16 %v1996
  %v2602 = vunpack.c.h.b16 %v1996
  %v2603 = vunpack.c.l.b16 %v1997
  %v2604 = vunpack.c.h.b16 %v1997
  %v2605 = vunpack.c.l.b16 %v1998
  %v2606 = vunpack.c.h.b16 %v1998
  %v2607 = vpack.c.b16 %v2229, %v2223
  %v2608 = vpack.c.b16 %v2230, %v2224
  %v2609 = vpack.c.b16 %v2231, %v2225
  %v2610 = vpack.c.b16 %v2232, %v2226
  %v2611 = vpack.c.b16 %v2233, %v2227
  %v2612 = vpack.c.b16 %v2234, %v2228
  %v2613 = vpack.c.b16 %v2241, %v2235
  %v2614 = vpack.c.b16 %v2242, %v2236
  %v2615 = vpack.c.b16 %v2243, %v2237
  %v2616 = vpack.c.b16 %v2244, %v2238
  %v2617 = vpack.c.b16 %v2245, %v2239
  %v2618 = vpack.c.b16 %v2246, %v2240
  %v2619 = vpack.c.b16 %v2253, %v2247
  %v2620 = vpack.c.b16 %v2254, %v2248
  %v2621 = vpack.c.b16 %v2255, %v2249
  %v2622 = vpack.c.b16 %v2256, %v2250
  %v2623 = vpack.c.b16 %v2257, %v2251
  %v2624 = vpack.c.b16 %v2258, %v2252
  %v2625 = vpack.c.b16 %v2265, %v2259
  %v2626 = vpack.c.b16 %v2266, %v2260
  %v2627 = vpack.c.b16 %v2267, %v2261
  %v2628 = vpack.c.b16 %v2268, %v2262
  %v2629 = vpack.c.b16 %v2269, %v2263
  %v2630 = vpack.c.b16 %v2270, %v2264
  %v2631 = vpack.c.b16 %v2277, %v2271
  %v2632 = vpack.c.b16 %v2278, %v2272
  %v2633 = vpack.c.b16 %v2279, %v2273
  %v2634 = vpack.c.b16 %v2280, %v2274
  %v2635 = vpack.c.b16 %v2281, %v2275
  %v2636 = vpack.c.b16 %v2282, %v2276
  %v2637 = vpack.c.b16 %v2289, %v2283
  %v2638 = vpack.c.b16 %v2290, %v2284
  %v2639 = vpack.c.b16 %v2291, %v2285
  %v2640 = vpack.c.b16 %v2292, %v2286
  %v2641 = vpack.c.b16 %v2293, %v2287
  %v2642 = vpack.c.b16 %v2294, %v2288
  %v2643 = vpack.c.b16 %v2301, %v2295
  %v2644 = vpack.c.b16 %v2302, %v2296
  %v2645 = vpack.c.b16 %v2303, %v2297
  %v2646 = vpack.c.b16 %v2304, %v2298
  %v2647 = vpack.c.b16 %v2305, %v2299
  %v2648 = vpack.c.b16 %v2306, %v2300
  %v2649 = vpack.c.b16 %v2313, %v2307
  %v2650 = vpack.c.b16 %v2314, %v2308
  %v2651 = vpack.c.b16 %v2315, %v2309
  %v2652 = vpack.c.b16 %v2316, %v2310
  %v2653 = vpack.c.b16 %v2317, %v2311
  %v2654 = vpack.c.b16 %v2318, %v2312
  %v2655 = vpack.c.b16 %v2325, %v2319
  %v2656 = vpack.c.b16 %v2326, %v2320
  %v2657 = vpack.c.b16 %v2327, %v2321
  %v2658 = vpack.c.b16 %v2328, %v2322
  %v2659 = vpack.c.b16 %v2329, %v2323
  %v2660 = vpack.c.b16 %v2330, %v2324
  %v2661 = vpack.c.b16 %v2337, %v2331
  %v2662 = vpack.c.b16 %v2338, %v2332
  %v2663 = vpack.c.b16 %v2339, %v2333
  %v2664 = vpack.c.b16 %v2340, %v2334
  %v2665 = vpack.c.b16 %v2341, %v2335
  %v2666 = vpack.c.b16 %v2342, %v2336
  %v2667 = vpack.c.b16 %v2349, %v2343
  %v2668 = vpack.c.b16 %v2350, %v2344
  %v2669 = vpack.c.b16 %v2351, %v2345
  %v2670 = vpack.c.b16 %v2352, %v2346
  %v2671 = vpack.c.b16 %v2353, %v2347
  %v2672 = vpack.c.b16 %v2354, %v2348
  %v2673 = vpack.c.b16 %v2361, %v2355
  %v2674 = vpack.c.b16 %v2362, %v2356
  %v2675 = vpack.c.b16 %v2363, %v2357
  %v2676 = vpack.c.b16 %v2364, %v2358
  %v2677 = vpack.c.b16 %v2365, %v2359
  %v2678 = vpack.c.b16 %v2366, %v2360
  %v2679 = vpack.c.b16 %v2373, %v2367
  %v2680 = vpack.c.b16 %v2374, %v2368
  %v2681 = vpack.c.b16 %v2375, %v2369
  %v2682 = vpack.c.b16 %v2376, %v2370
  %v2683 = vpack.c.b16 %v2377, %v2371
  %v2684 = vpack.c.b16 %v2378, %v2372
  %v2685 = vpack.c.b16 %v2385, %v2379
  %v2686 = vpack.c.b16 %v2386, %v2380
  %v2687 = vpack.c.b16 %v2387, %v2381
  %v2688 = vpack.c.b16 %v2388, %v2382
  %v2689 = vpack.c.b16 %v2389, %v2383
  %v2690 = vpack.c.b16 %v2390, %v2384
  %v2691 = vpack.c.b16 %v2397, %v2391
  %v2692 = vpack.c.b16 %v2398, %v2392
  %v2693 = vpack.c.b16 %v2399, %v2393
  %v2694 = vpack.c.b16 %v2400, %v2394
  %v2695 = vpack.c.b16 %v2401, %v2395
  %v2696 = vpack.c.b16 %v2402, %v2396
  %v2697 = vpack.c.b16 %v2409, %v2403
  %v2698 = vpack.c.b16 %v2410, %v2404
  %v2699 = vpack.c.b16 %v2411, %v2405
  %v2700 = vpack.c.b16 %v2412, %v2406
  %v2701 = vpack.c.b16 %v2413, %v2407
  %v2702 = vpack.c.b16 %v2414, %v2408
  %v2703 = vpack.c.b16 %v2421, %v2415
  %v2704 = vpack.c.b16 %v2422, %v2416
  %v2705 = vpack.c.b16 %v2423, %v2417
  %v2706 = vpack.c.b16 %v2424, %v2418
  %v2707 = vpack.c.b16 %v2425, %v2419
  %v2708 = vpack.c.b16 %v2426, %v2420
  %v2709 = vpack.c.b16 %v2433, %v2427
  %v2710 = vpack.c.b16 %v2434, %v2428
  %v2711 = vpack.c.b16 %v2435, %v2429
  %v2712 = vpack.c.b16 %v2436, %v2430
  %v2713 = vpack.c.b16 %v2437, %v2431
  %v2714 = vpack.c.b16 %v2438, %v2432
  %v2715 = vpack.c.b16 %v2445, %v2439
  %v2716 = vpack.c.b16 %v2446, %v2440
  %v2717 = vpack.c.b16 %v2447, %v2441
  %v2718 = vpack.c.b16 %v2448, %v2442
  %v2719 = vpack.c.b16 %v2449, %v2443
  %v2720 = vpack.c.b16 %v2450, %v2444
  %v2721 = vpack.c.b16 %v2457, %v2451
  %v2722 = vpack.c.b16 %v2458, %v2452
  %v2723 = vpack.c.b16 %v2459, %v2453
  %v2724 = vpack.c.b16 %v2460, %v2454
  %v2725 = vpack.c.b16 %v2461, %v2455
  %v2726 = vpack.c.b16 %v2462, %v2456
  %v2727 = vpack.c.b16 %v2469, %v2463
  %v2728 = vpack.c.b16 %v2470, %v2464
  %v2729 = vpack.c.b16 %v2471, %v2465
  %v2730 = vpack.c.b16 %v2472, %v2466
  %v2731 = vpack.c.b16 %v2473, %v2467
  %v2732 = vpack.c.b16 %v2474, %v2468
  %v2733 = vpack.c.b16 %v2481, %v2475
  %v2734 = vpack.c.b16 %v2482, %v2476
  %v2735 = vpack.c.b16 %v2483, %v2477
  %v2736 = vpack.c.b16 %v2484, %v2478
  %v2737 = vpack.c.b16 %v2485, %v2479
  %v2738 = vpack.c.b16 %v2486, %v2480
  %v2739 = vpack.c.b16 %v2493, %v2487
  %v2740 = vpack.c.b16 %v2494, %v2488
  %v2741 = vpack.c.b16 %v2495, %v2489
  %v2742 = vpack.c.b16 %v2496, %v2490
  %v2743 = vpack.c.b16 %v2497, %v2491
  %v2744 = vpack.c.b16 %v2498, %v2492
  %v2745 = vpack.c.b16 %v2505, %v2499
  %v2746 = vpack.c.b16 %v2506, %v2500
  %v2747 = vpack.c.b16 %v2507, %v2501
  %v2748 = vpack.c.b16 %v2508, %v2502
  %v2749 = vpack.c.b16 %v2509, %v2503
  %v2750 = vpack.c.b16 %v2510, %v2504
  %v2751 = vpack.c.b16 %v2517, %v2511
  %v2752 = vpack.c.b16 %v2518, %v2512
  %v2753 = vpack.c.b16 %v2519, %v2513
  %v2754 = vpack.c.b16 %v2520, %v2514
  %v2755 = vpack.c.b16 %v2521, %v2515
  %v2756 = vpack.c.b16 %v2522, %v2516
  %v2757 = vpack.c.b16 %v2529, %v2523
  %v2758 = vpack.c.b16 %v2530, %v2524
  %v2759 = vpack.c.b16 %v2531, %v2525
  %v2760 = vpack.c.b16 %v2532, %v2526
  %v2761 = vpack.c.b16 %v2533, %v2527
  %v2762 = vpack.c.b16 %v2534, %v2528
  %v2763 = vpack.c.b16 %v2541, %v2535
  %v2764 = vpack.c.b16 %v2542, %v2536
  %v2765 = vpack.c.b16 %v2543, %v2537
  %v2766 = vpack.c.b16 %v2544, %v2538
  %v2767 = vpack.c.b16 %v2545, %v2539
  %v2768 = vpack.c.b16 %v2546, %v2540
  %v2769 = vpack.c.b16 %v2553, %v2547
  %v2770 = vpack.c.b16 %v2554, %v2548
  %v2771 = vpack.c.b16 %v2555, %v2549
  %v2772 = vpack.c.b16 %v2556, %v2550
  %v2773 = vpack.c.b16 %v2557, %v2551
  %v2774 = vpack.c.b16 %v2558, %v2552
  %v2775 = vpack.c.b16 %v2565, %v2559
  %v2776 = vpack.c.b16 %v2566, %v2560
  %v2777 = vpack.c.b16 %v2567, %v2561
  %v2778 = vpack.c.b16 %v2568, %v2562
  %v2779 = vpack.c.b16 %v2569, %v2563
  %v2780 = vpack.c.b16 %v2570, %v2564
  %v2781 = vpack.c.b16 %v2577, %v2571
  %v2782 = vpack.c.b16 %v2578, %v2572
  %v2783 = vpack.c.b16 %v2579, %v2573
  %v2784 = vpack.c.b16 %v2580, %v2574
  %v2785 = vpack.c.b16 %v2581, %v2575
  %v2786 = vpack.c.b16 %v2582, %v2576
  %v2787 = vpack.c.b16 %v2589, %v2583
  %v2788 = vpack.c.b16 %v2590, %v2584
  %v2789 = vpack.c.b16 %v2591, %v2585
  %v2790 = vpack.c.b16 %v2592, %v2586
  %v2791 = vpack.c.b16 %v2593, %v2587
  %v2792 = vpack.c.b16 %v2594, %v2588
  %v2793 = vpack.c.b16 %v2601, %v2595
  %v2794 = vpack.c.b16 %v2602, %v2596
  %v2795 = vpack.c.b16 %v2603, %v2597
  %v2796 = vpack.c.b16 %v2604, %v2598
  %v2797 = vpack.c.b16 %v2605, %v2599
  %v2798 = vpack.c.b16 %v2606, %v2600
  %2991 = vmatprep.subr.bf16.mxu0 %v2650
  %2992 = vmatpush1.bf16.msra.mxu0 %v2649
  %2993 = vmatprep.subr.bf16.mxu0 %v2644
  %2994 = vmatpush1.bf16.msra.mxu0 %v2643
  %2995 = vmatprep.subr.bf16.mxu0 %v2638
  %2996 = vmatpush1.bf16.msra.mxu0 %v2637
  %2997 = vmatprep.subr.bf16.mxu0 %v2632
  %2998 = vmatpush1.bf16.msra.mxu0 %v2631
  %2999 = vmatprep.subr.bf16.mxu0 %v2626
  %3000 = vmatpush1.bf16.msra.mxu0 %v2625
  %3001 = vmatprep.subr.bf16.mxu0 %v2620
  %3002 = vmatpush1.bf16.msra.mxu0 %v2619
  %3003 = vmatprep.subr.bf16.mxu0 %v2614
  %3004 = vmatpush1.bf16.msra.mxu0 %v2613
  %3005 = vmatprep.subr.bf16.mxu0 %v2608
  %3006 = vmatpush1.bf16.msra.mxu0 %v2607
  %3007 = vmatprep.subr.bf16.mxu0 %v2698
  %3008 = vmatpush2.bf16.msra.mxu0 %v2697
  %3009 = vmatprep.subr.bf16.mxu0 %v2692
  %3010 = vmatpush2.bf16.msra.mxu0 %v2691
  %3011 = vmatprep.subr.bf16.mxu0 %v2686
  %3012 = vmatpush2.bf16.msra.mxu0 %v2685
  %3013 = vmatprep.subr.bf16.mxu0 %v2680
  %3014 = vmatpush2.bf16.msra.mxu0 %v2679
  %3015 = vmatprep.subr.bf16.mxu0 %v2674
  %3016 = vmatpush2.bf16.msra.mxu0 %v2673
  %3017 = vmatprep.subr.bf16.mxu0 %v2668
  %3018 = vmatpush2.bf16.msra.mxu0 %v2667
  %3019 = vmatprep.subr.bf16.mxu0 %v2662
  %3020 = vmatpush2.bf16.msra.mxu0 %v2661
  %3021 = vmatprep.subr.bf16.mxu0 %v2656
  %3022 = vmatpush2.bf16.msra.mxu0 %v2655
  %3023 = vmatprep.mubr.bf16.mxu0 %v1744
  %3024 = vmatmul.mubr.bf16.gmra.mxu0 %v1743
  %v3025 = vpop.f32.mrf.mxu0
  %v3026 = vadd.f32 %v2004, %v3025
  %v3027 = vpop.f32.mrf.mxu0
  %v3028 = vadd.f32 %v2008, %v3027
  %v3029 = vpop.f32.mrf.mxu0
  %v3030 = vadd.f32 %v2004, %v3029
  %v3031 = vpop.f32.mrf.mxu0
  %v3032 = vadd.f32 %v2008, %v3031
  %3033 = vmatprep.mubr.bf16.mxu0 %v1748
  %3034 = vmatmul.mubr.bf16.gmra.mxu0 %v1747
  %v3035 = vpop.f32.mrf.mxu0
  %v3036 = vadd.f32 %v2004, %v3035
  %v3037 = vpop.f32.mrf.mxu0
  %v3038 = vadd.f32 %v2008, %v3037
  %v3039 = vpop.f32.mrf.mxu0
  %v3040 = vadd.f32 %v2004, %v3039
  %v3041 = vpop.f32.mrf.mxu0
  %v3042 = vadd.f32 %v2008, %v3041
  %3043 = vmatprep.mubr.bf16.mxu0 %v1752
  %3044 = vmatmul.mubr.bf16.gmra.mxu0 %v1751
  %v3045 = vpop.f32.mrf.mxu0
  %v3046 = vadd.f32 %v2004, %v3045
  %v3047 = vpop.f32.mrf.mxu0
  %v3048 = vadd.f32 %v2008, %v3047
  %v3049 = vpop.f32.mrf.mxu0
  %v3050 = vadd.f32 %v2004, %v3049
  %v3051 = vpop.f32.mrf.mxu0
  %v3052 = vadd.f32 %v2008, %v3051
  %3053 = vmatprep.mubr.bf16.mxu0 %v1756
  %3054 = vmatmul.mubr.bf16.gmra.mxu0 %v1755
  %v3055 = vpop.f32.mrf.mxu0
  %v3056 = vadd.f32 %v2004, %v3055
  %v3057 = vpop.f32.mrf.mxu0
  %v3058 = vadd.f32 %v2008, %v3057
  %v3059 = vpop.f32.mrf.mxu0
  %v3060 = vadd.f32 %v2004, %v3059
  %v3061 = vpop.f32.mrf.mxu0
  %v3062 = vadd.f32 %v2008, %v3061
  %3063 = vmatprep.mubr.bf16.mxu0 %v1760
  %3064 = vmatmul.mubr.bf16.gmra.mxu0 %v1759
  %v3065 = vpop.f32.mrf.mxu0
  %v3066 = vadd.f32 %v2004, %v3065
  %v3067 = vpop.f32.mrf.mxu0
  %v3068 = vadd.f32 %v2008, %v3067
  %v3069 = vpop.f32.mrf.mxu0
  %v3070 = vadd.f32 %v2004, %v3069
  %v3071 = vpop.f32.mrf.mxu0
  %v3072 = vadd.f32 %v2008, %v3071
  %3073 = vmatprep.mubr.bf16.mxu0 %v1764
  %3074 = vmatmul.mubr.bf16.gmra.mxu0 %v1763
  %v3075 = vpop.f32.mrf.mxu0
  %v3076 = vadd.f32 %v2004, %v3075
  %v3077 = vpop.f32.mrf.mxu0
  %v3078 = vadd.f32 %v2008, %v3077
  %v3079 = vpop.f32.mrf.mxu0
  %v3080 = vadd.f32 %v2004, %v3079
  %v3081 = vpop.f32.mrf.mxu0
  %v3082 = vadd.f32 %v2008, %v3081
  %3083 = vmatprep.mubr.bf16.mxu0 %v1768
  %3084 = vmatmul.mubr.bf16.gmra.mxu0 %v1767
  %v3085 = vpop.f32.mrf.mxu0
  %v3086 = vadd.f32 %v2004, %v3085
  %v3087 = vpop.f32.mrf.mxu0
  %v3088 = vadd.f32 %v2008, %v3087
  %v3089 = vpop.f32.mrf.mxu0
  %v3090 = vadd.f32 %v2004, %v3089
  %v3091 = vpop.f32.mrf.mxu0
  %v3092 = vadd.f32 %v2008, %v3091
  %3093 = vmatprep.mubr.bf16.mxu0 %v1772
  %3094 = vmatmul.mubr.bf16.gmra.mxu0 %v1771
  %v3095 = vpop.f32.mrf.mxu0
  %v3096 = vadd.f32 %v2004, %v3095
  %v3097 = vpop.f32.mrf.mxu0
  %v3098 = vadd.f32 %v2008, %v3097
  %v3099 = vpop.f32.mrf.mxu0
  %v3100 = vadd.f32 %v2004, %v3099
  %v3101 = vpop.f32.mrf.mxu0
  %v3102 = vadd.f32 %v2008, %v3101
  %3103 = vmatprep.mubr.bf16.mxu0 %v1776
  %3104 = vmatmul.mubr.bf16.gmra.mxu0 %v1775
  %v3105 = vpop.f32.mrf.mxu0
  %v3106 = vadd.f32 %v2004, %v3105
  %v3107 = vpop.f32.mrf.mxu0
  %v3108 = vadd.f32 %v2008, %v3107
  %v3109 = vpop.f32.mrf.mxu0
  %v3110 = vadd.f32 %v2004, %v3109
  %v3111 = vpop.f32.mrf.mxu0
  %v3112 = vadd.f32 %v2008, %v3111
  %3113 = vmatprep.mubr.bf16.mxu0 %v1780
  %3114 = vmatmul.mubr.bf16.gmra.mxu0 %v1779
  %v3115 = vpop.f32.mrf.mxu0
  %v3116 = vadd.f32 %v2004, %v3115
  %v3117 = vpop.f32.mrf.mxu0
  %v3118 = vadd.f32 %v2008, %v3117
  %v3119 = vpop.f32.mrf.mxu0
  %v3120 = vadd.f32 %v2004, %v3119
  %v3121 = vpop.f32.mrf.mxu0
  %v3122 = vadd.f32 %v2008, %v3121
  %3123 = vmatprep.mubr.bf16.mxu0 %v1784
  %3124 = vmatmul.mubr.bf16.gmra.mxu0 %v1783
  %v3125 = vpop.f32.mrf.mxu0
  %v3126 = vadd.f32 %v2004, %v3125
  %v3127 = vpop.f32.mrf.mxu0
  %v3128 = vadd.f32 %v2008, %v3127
  %v3129 = vpop.f32.mrf.mxu0
  %v3130 = vadd.f32 %v2004, %v3129
  %v3131 = vpop.f32.mrf.mxu0
  %v3132 = vadd.f32 %v2008, %v3131
  %3133 = vmatprep.mubr.bf16.mxu0 %v1788
  %3134 = vmatmul.mubr.bf16.gmra.mxu0 %v1787
  %v3135 = vpop.f32.mrf.mxu0
  %v3136 = vadd.f32 %v2004, %v3135
  %v3137 = vpop.f32.mrf.mxu0
  %v3138 = vadd.f32 %v2008, %v3137
  %v3139 = vpop.f32.mrf.mxu0
  %v3140 = vadd.f32 %v2004, %v3139
  %v3141 = vpop.f32.mrf.mxu0
  %v3142 = vadd.f32 %v2008, %v3141
  %3143 = vmatprep.mubr.bf16.mxu0 %v1792
  %3144 = vmatmul.mubr.bf16.gmra.mxu0 %v1791
  %v3145 = vpop.f32.mrf.mxu0
  %v3146 = vadd.f32 %v2004, %v3145
  %v3147 = vpop.f32.mrf.mxu0
  %v3148 = vadd.f32 %v2008, %v3147
  %v3149 = vpop.f32.mrf.mxu0
  %v3150 = vadd.f32 %v2004, %v3149
  %v3151 = vpop.f32.mrf.mxu0
  %v3152 = vadd.f32 %v2008, %v3151
  %3153 = vmatprep.mubr.bf16.mxu0 %v1796
  %3154 = vmatmul.mubr.bf16.gmra.mxu0 %v1795
  %v3155 = vpop.f32.mrf.mxu0
  %v3156 = vadd.f32 %v2004, %v3155
  %v3157 = vpop.f32.mrf.mxu0
  %v3158 = vadd.f32 %v2008, %v3157
  %v3159 = vpop.f32.mrf.mxu0
  %v3160 = vadd.f32 %v2004, %v3159
  %v3161 = vpop.f32.mrf.mxu0
  %v3162 = vadd.f32 %v2008, %v3161
  %3163 = vmatprep.mubr.bf16.mxu0 %v1800
  %3164 = vmatmul.mubr.bf16.gmra.mxu0 %v1799
  %v3165 = vpop.f32.mrf.mxu0
  %v3166 = vadd.f32 %v2004, %v3165
  %v3167 = vpop.f32.mrf.mxu0
  %v3168 = vadd.f32 %v2008, %v3167
  %v3169 = vpop.f32.mrf.mxu0
  %v3170 = vadd.f32 %v2004, %v3169
  %v3171 = vpop.f32.mrf.mxu0
  %v3172 = vadd.f32 %v2008, %v3171
  %3173 = vmatprep.mubr.bf16.mxu0 %v1804
  %3174 = vmatmul.mubr.bf16.gmra.mxu0 %v1803
  %v3175 = vpop.f32.mrf.mxu0
  %v3176 = vadd.f32 %v2004, %v3175
  %v3177 = vpop.f32.mrf.mxu0
  %v3178 = vadd.f32 %v2008, %v3177
  %v3179 = vpop.f32.mrf.mxu0
  %v3180 = vadd.f32 %v2004, %v3179
  %v3181 = vpop.f32.mrf.mxu0
  %v3182 = vadd.f32 %v2008, %v3181
  %3183 = vdwg.mxu0
  %3184 = vmatprep.subr.bf16.mxu0 %v2746
  %3185 = vmatpush1.bf16.msra.mxu0 %v2745
  %3186 = vmatprep.subr.bf16.mxu0 %v2740
  %3187 = vmatpush1.bf16.msra.mxu0 %v2739
  %3188 = vmatprep.subr.bf16.mxu0 %v2734
  %3189 = vmatpush1.bf16.msra.mxu0 %v2733
  %3190 = vmatprep.subr.bf16.mxu0 %v2728
  %3191 = vmatpush1.bf16.msra.mxu0 %v2727
  %3192 = vmatprep.subr.bf16.mxu0 %v2722
  %3193 = vmatpush1.bf16.msra.mxu0 %v2721
  %3194 = vmatprep.subr.bf16.mxu0 %v2716
  %3195 = vmatpush1.bf16.msra.mxu0 %v2715
  %3196 = vmatprep.subr.bf16.mxu0 %v2710
  %3197 = vmatpush1.bf16.msra.mxu0 %v2709
  %3198 = vmatprep.subr.bf16.mxu0 %v2704
  %3199 = vmatpush1.bf16.msra.mxu0 %v2703
  %3200 = vmatprep.subr.bf16.mxu0 %v2794
  %3201 = vmatpush2.bf16.msra.mxu0 %v2793
  %3202 = vmatprep.subr.bf16.mxu0 %v2788
  %3203 = vmatpush2.bf16.msra.mxu0 %v2787
  %3204 = vmatprep.subr.bf16.mxu0 %v2782
  %3205 = vmatpush2.bf16.msra.mxu0 %v2781
  %3206 = vmatprep.subr.bf16.mxu0 %v2776
  %3207 = vmatpush2.bf16.msra.mxu0 %v2775
  %3208 = vmatprep.subr.bf16.mxu0 %v2770
  %3209 = vmatpush2.bf16.msra.mxu0 %v2769
  %3210 = vmatprep.subr.bf16.mxu0 %v2764
  %3211 = vmatpush2.bf16.msra.mxu0 %v2763
  %3212 = vmatprep.subr.bf16.mxu0 %v2758
  %3213 = vmatpush2.bf16.msra.mxu0 %v2757
  %3214 = vmatprep.subr.bf16.mxu0 %v2752
  %3215 = vmatpush2.bf16.msra.mxu0 %v2751
  %3216 = vmatprep.mubr.bf16.mxu0 %v1746
  %3217 = vmatmul.mubr.bf16.gmra.mxu0 %v1745
  %v3218 = vpop.f32.mrf.mxu0
  %v3219 = vadd.f32 %v3026, %v3218
  %v3220 = vpop.f32.mrf.mxu0
  %v3221 = vadd.f32 %v3028, %v3220
  %v3222 = vpop.f32.mrf.mxu0
  %v3223 = vadd.f32 %v3030, %v3222
  %v3224 = vpop.f32.mrf.mxu0
  %v3225 = vadd.f32 %v3032, %v3224
  %3226 = vmatprep.mubr.bf16.mxu0 %v1750
  %3227 = vmatmul.mubr.bf16.gmra.mxu0 %v1749
  %v3228 = vpop.f32.mrf.mxu0
  %v3229 = vadd.f32 %v3036, %v3228
  %v3230 = vpop.f32.mrf.mxu0
  %v3231 = vadd.f32 %v3038, %v3230
  %v3232 = vpop.f32.mrf.mxu0
  %v3233 = vadd.f32 %v3040, %v3232
  %v3234 = vpop.f32.mrf.mxu0
  %v3235 = vadd.f32 %v3042, %v3234
  %3236 = vmatprep.mubr.bf16.mxu0 %v1754
  %3237 = vmatmul.mubr.bf16.gmra.mxu0 %v1753
  %v3238 = vpop.f32.mrf.mxu0
  %v3239 = vadd.f32 %v3046, %v3238
  %v3240 = vpop.f32.mrf.mxu0
  %v3241 = vadd.f32 %v3048, %v3240
  %v3242 = vpop.f32.mrf.mxu0
  %v3243 = vadd.f32 %v3050, %v3242
  %v3244 = vpop.f32.mrf.mxu0
  %v3245 = vadd.f32 %v3052, %v3244
  %3246 = vmatprep.mubr.bf16.mxu0 %v1758
  %3247 = vmatmul.mubr.bf16.gmra.mxu0 %v1757
  %v3248 = vpop.f32.mrf.mxu0
  %v3249 = vadd.f32 %v3056, %v3248
  %v3250 = vpop.f32.mrf.mxu0
  %v3251 = vadd.f32 %v3058, %v3250
  %v3252 = vpop.f32.mrf.mxu0
  %v3253 = vadd.f32 %v3060, %v3252
  %v3254 = vpop.f32.mrf.mxu0
  %v3255 = vadd.f32 %v3062, %v3254
  %3256 = vmatprep.mubr.bf16.mxu0 %v1762
  %3257 = vmatmul.mubr.bf16.gmra.mxu0 %v1761
  %v3258 = vpop.f32.mrf.mxu0
  %v3259 = vadd.f32 %v3066, %v3258
  %v3260 = vpop.f32.mrf.mxu0
  %v3261 = vadd.f32 %v3068, %v3260
  %v3262 = vpop.f32.mrf.mxu0
  %v3263 = vadd.f32 %v3070, %v3262
  %v3264 = vpop.f32.mrf.mxu0
  %v3265 = vadd.f32 %v3072, %v3264
  %3266 = vmatprep.mubr.bf16.mxu0 %v1766
  %3267 = vmatmul.mubr.bf16.gmra.mxu0 %v1765
  %v3268 = vpop.f32.mrf.mxu0
  %v3269 = vadd.f32 %v3076, %v3268
  %v3270 = vpop.f32.mrf.mxu0
  %v3271 = vadd.f32 %v3078, %v3270
  %v3272 = vpop.f32.mrf.mxu0
  %v3273 = vadd.f32 %v3080, %v3272
  %v3274 = vpop.f32.mrf.mxu0
  %v3275 = vadd.f32 %v3082, %v3274
  %3276 = vmatprep.mubr.bf16.mxu0 %v1770
  %3277 = vmatmul.mubr.bf16.gmra.mxu0 %v1769
  %v3278 = vpop.f32.mrf.mxu0
  %v3279 = vadd.f32 %v3086, %v3278
  %v3280 = vpop.f32.mrf.mxu0
  %v3281 = vadd.f32 %v3088, %v3280
  %v3282 = vpop.f32.mrf.mxu0
  %v3283 = vadd.f32 %v3090, %v3282
  %v3284 = vpop.f32.mrf.mxu0
  %v3285 = vadd.f32 %v3092, %v3284
  %3286 = vmatprep.mubr.bf16.mxu0 %v1774
  %3287 = vmatmul.mubr.bf16.gmra.mxu0 %v1773
  %v3288 = vpop.f32.mrf.mxu0
  %v3289 = vadd.f32 %v3096, %v3288
  %v3290 = vpop.f32.mrf.mxu0
  %v3291 = vadd.f32 %v3098, %v3290
  %v3292 = vpop.f32.mrf.mxu0
  %v3293 = vadd.f32 %v3100, %v3292
  %v3294 = vpop.f32.mrf.mxu0
  %v3295 = vadd.f32 %v3102, %v3294
  %3296 = vmatprep.mubr.bf16.mxu0 %v1778
  %3297 = vmatmul.mubr.bf16.gmra.mxu0 %v1777
  %v3298 = vpop.f32.mrf.mxu0
  %v3299 = vadd.f32 %v3106, %v3298
  %v3300 = vpop.f32.mrf.mxu0
  %v3301 = vadd.f32 %v3108, %v3300
  %v3302 = vpop.f32.mrf.mxu0
  %v3303 = vadd.f32 %v3110, %v3302
  %v3304 = vpop.f32.mrf.mxu0
  %v3305 = vadd.f32 %v3112, %v3304
  %3306 = vmatprep.mubr.bf16.mxu0 %v1782
  %3307 = vmatmul.mubr.bf16.gmra.mxu0 %v1781
  %v3308 = vpop.f32.mrf.mxu0
  %v3309 = vadd.f32 %v3116, %v3308
  %v3310 = vpop.f32.mrf.mxu0
  %v3311 = vadd.f32 %v3118, %v3310
  %v3312 = vpop.f32.mrf.mxu0
  %v3313 = vadd.f32 %v3120, %v3312
  %v3314 = vpop.f32.mrf.mxu0
  %v3315 = vadd.f32 %v3122, %v3314
  %3316 = vmatprep.mubr.bf16.mxu0 %v1786
  %3317 = vmatmul.mubr.bf16.gmra.mxu0 %v1785
  %v3318 = vpop.f32.mrf.mxu0
  %v3319 = vadd.f32 %v3126, %v3318
  %v3320 = vpop.f32.mrf.mxu0
  %v3321 = vadd.f32 %v3128, %v3320
  %v3322 = vpop.f32.mrf.mxu0
  %v3323 = vadd.f32 %v3130, %v3322
  %v3324 = vpop.f32.mrf.mxu0
  %v3325 = vadd.f32 %v3132, %v3324
  %3326 = vmatprep.mubr.bf16.mxu0 %v1790
  %3327 = vmatmul.mubr.bf16.gmra.mxu0 %v1789
  %v3328 = vpop.f32.mrf.mxu0
  %v3329 = vadd.f32 %v3136, %v3328
  %v3330 = vpop.f32.mrf.mxu0
  %v3331 = vadd.f32 %v3138, %v3330
  %v3332 = vpop.f32.mrf.mxu0
  %v3333 = vadd.f32 %v3140, %v3332
  %v3334 = vpop.f32.mrf.mxu0
  %v3335 = vadd.f32 %v3142, %v3334
  %3336 = vmatprep.mubr.bf16.mxu0 %v1794
  %3337 = vmatmul.mubr.bf16.gmra.mxu0 %v1793
  %v3338 = vpop.f32.mrf.mxu0
  %v3339 = vadd.f32 %v3146, %v3338
  %v3340 = vpop.f32.mrf.mxu0
  %v3341 = vadd.f32 %v3148, %v3340
  %v3342 = vpop.f32.mrf.mxu0
  %v3343 = vadd.f32 %v3150, %v3342
  %v3344 = vpop.f32.mrf.mxu0
  %v3345 = vadd.f32 %v3152, %v3344
  %3346 = vmatprep.mubr.bf16.mxu0 %v1798
  %3347 = vmatmul.mubr.bf16.gmra.mxu0 %v1797
  %v3348 = vpop.f32.mrf.mxu0
  %v3349 = vadd.f32 %v3156, %v3348
  %v3350 = vpop.f32.mrf.mxu0
  %v3351 = vadd.f32 %v3158, %v3350
  %v3352 = vpop.f32.mrf.mxu0
  %v3353 = vadd.f32 %v3160, %v3352
  %v3354 = vpop.f32.mrf.mxu0
  %v3355 = vadd.f32 %v3162, %v3354
  %3356 = vmatprep.mubr.bf16.mxu0 %v1802
  %3357 = vmatmul.mubr.bf16.gmra.mxu0 %v1801
  %v3358 = vpop.f32.mrf.mxu0
  %v3359 = vadd.f32 %v3166, %v3358
  %v3360 = vpop.f32.mrf.mxu0
  %v3361 = vadd.f32 %v3168, %v3360
  %v3362 = vpop.f32.mrf.mxu0
  %v3363 = vadd.f32 %v3170, %v3362
  %v3364 = vpop.f32.mrf.mxu0
  %v3365 = vadd.f32 %v3172, %v3364
  %3366 = vmatprep.mubr.bf16.mxu0 %v1806
  %3367 = vmatmul.mubr.bf16.gmra.mxu0 %v1805
  %v3368 = vpop.f32.mrf.mxu0
  %v3369 = vadd.f32 %v3176, %v3368
  %v3370 = vpop.f32.mrf.mxu0
  %v3371 = vadd.f32 %v3178, %v3370
  %v3372 = vpop.f32.mrf.mxu0
  %v3373 = vadd.f32 %v3180, %v3372
  %v3374 = vpop.f32.mrf.mxu0
  %v3375 = vadd.f32 %v3182, %v3374
  %3376 = vdwg.mxu0
  %3377 = vmatprep.subr.bf16.mxu0 %v2652
  %3378 = vmatpush1.bf16.msra.mxu0 %v2651
  %3379 = vmatprep.subr.bf16.mxu0 %v2646
  %3380 = vmatpush1.bf16.msra.mxu0 %v2645
  %3381 = vmatprep.subr.bf16.mxu0 %v2640
  %3382 = vmatpush1.bf16.msra.mxu0 %v2639
  %3383 = vmatprep.subr.bf16.mxu0 %v2634
  %3384 = vmatpush1.bf16.msra.mxu0 %v2633
  %3385 = vmatprep.subr.bf16.mxu0 %v2628
  %3386 = vmatpush1.bf16.msra.mxu0 %v2627
  %3387 = vmatprep.subr.bf16.mxu0 %v2622
  %3388 = vmatpush1.bf16.msra.mxu0 %v2621
  %3389 = vmatprep.subr.bf16.mxu0 %v2616
  %3390 = vmatpush1.bf16.msra.mxu0 %v2615
  %3391 = vmatprep.subr.bf16.mxu0 %v2610
  %3392 = vmatpush1.bf16.msra.mxu0 %v2609
  %3393 = vmatprep.subr.bf16.mxu0 %v2700
  %3394 = vmatpush2.bf16.msra.mxu0 %v2699
  %3395 = vmatprep.subr.bf16.mxu0 %v2694
  %3396 = vmatpush2.bf16.msra.mxu0 %v2693
  %3397 = vmatprep.subr.bf16.mxu0 %v2688
  %3398 = vmatpush2.bf16.msra.mxu0 %v2687
  %3399 = vmatprep.subr.bf16.mxu0 %v2682
  %3400 = vmatpush2.bf16.msra.mxu0 %v2681
  %3401 = vmatprep.subr.bf16.mxu0 %v2676
  %3402 = vmatpush2.bf16.msra.mxu0 %v2675
  %3403 = vmatprep.subr.bf16.mxu0 %v2670
  %3404 = vmatpush2.bf16.msra.mxu0 %v2669
  %3405 = vmatprep.subr.bf16.mxu0 %v2664
  %3406 = vmatpush2.bf16.msra.mxu0 %v2663
  %3407 = vmatprep.subr.bf16.mxu0 %v2658
  %3408 = vmatpush2.bf16.msra.mxu0 %v2657
  %3409 = vmatprep.mubr.bf16.mxu0 %v1744
  %3410 = vmatmul.mubr.bf16.gmra.mxu0 %v1743
  %v3411 = vpop.f32.mrf.mxu0
  %v3412 = vadd.f32 %v2012, %v3411
  %v3413 = vpop.f32.mrf.mxu0
  %v3414 = vadd.f32 %v2016, %v3413
  %v3415 = vpop.f32.mrf.mxu0
  %v3416 = vadd.f32 %v2012, %v3415
  %v3417 = vpop.f32.mrf.mxu0
  %v3418 = vadd.f32 %v2016, %v3417
  %3419 = vmatprep.mubr.bf16.mxu0 %v1748
  %3420 = vmatmul.mubr.bf16.gmra.mxu0 %v1747
  %v3421 = vpop.f32.mrf.mxu0
  %v3422 = vadd.f32 %v2012, %v3421
  %v3423 = vpop.f32.mrf.mxu0
  %v3424 = vadd.f32 %v2016, %v3423
  %v3425 = vpop.f32.mrf.mxu0
  %v3426 = vadd.f32 %v2012, %v3425
  %v3427 = vpop.f32.mrf.mxu0
  %v3428 = vadd.f32 %v2016, %v3427
  %3429 = vmatprep.mubr.bf16.mxu0 %v1752
  %3430 = vmatmul.mubr.bf16.gmra.mxu0 %v1751
  %v3431 = vpop.f32.mrf.mxu0
  %v3432 = vadd.f32 %v2012, %v3431
  %v3433 = vpop.f32.mrf.mxu0
  %v3434 = vadd.f32 %v2016, %v3433
  %v3435 = vpop.f32.mrf.mxu0
  %v3436 = vadd.f32 %v2012, %v3435
  %v3437 = vpop.f32.mrf.mxu0
  %v3438 = vadd.f32 %v2016, %v3437
  %3439 = vmatprep.mubr.bf16.mxu0 %v1756
  %3440 = vmatmul.mubr.bf16.gmra.mxu0 %v1755
  %v3441 = vpop.f32.mrf.mxu0
  %v3442 = vadd.f32 %v2012, %v3441
  %v3443 = vpop.f32.mrf.mxu0
  %v3444 = vadd.f32 %v2016, %v3443
  %v3445 = vpop.f32.mrf.mxu0
  %v3446 = vadd.f32 %v2012, %v3445
  %v3447 = vpop.f32.mrf.mxu0
  %v3448 = vadd.f32 %v2016, %v3447
  %3449 = vmatprep.mubr.bf16.mxu0 %v1760
  %3450 = vmatmul.mubr.bf16.gmra.mxu0 %v1759
  %v3451 = vpop.f32.mrf.mxu0
  %v3452 = vadd.f32 %v2012, %v3451
  %v3453 = vpop.f32.mrf.mxu0
  %v3454 = vadd.f32 %v2016, %v3453
  %v3455 = vpop.f32.mrf.mxu0
  %v3456 = vadd.f32 %v2012, %v3455
  %v3457 = vpop.f32.mrf.mxu0
  %v3458 = vadd.f32 %v2016, %v3457
  %3459 = vmatprep.mubr.bf16.mxu0 %v1764
  %3460 = vmatmul.mubr.bf16.gmra.mxu0 %v1763
  %v3461 = vpop.f32.mrf.mxu0
  %v3462 = vadd.f32 %v2012, %v3461
  %v3463 = vpop.f32.mrf.mxu0
  %v3464 = vadd.f32 %v2016, %v3463
  %v3465 = vpop.f32.mrf.mxu0
  %v3466 = vadd.f32 %v2012, %v3465
  %v3467 = vpop.f32.mrf.mxu0
  %v3468 = vadd.f32 %v2016, %v3467
  %3469 = vmatprep.mubr.bf16.mxu0 %v1768
  %3470 = vmatmul.mubr.bf16.gmra.mxu0 %v1767
  %v3471 = vpop.f32.mrf.mxu0
  %v3472 = vadd.f32 %v2012, %v3471
  %v3473 = vpop.f32.mrf.mxu0
  %v3474 = vadd.f32 %v2016, %v3473
  %v3475 = vpop.f32.mrf.mxu0
  %v3476 = vadd.f32 %v2012, %v3475
  %v3477 = vpop.f32.mrf.mxu0
  %v3478 = vadd.f32 %v2016, %v3477
  %3479 = vmatprep.mubr.bf16.mxu0 %v1772
  %3480 = vmatmul.mubr.bf16.gmra.mxu0 %v1771
  %v3481 = vpop.f32.mrf.mxu0
  %v3482 = vadd.f32 %v2012, %v3481
  %v3483 = vpop.f32.mrf.mxu0
  %v3484 = vadd.f32 %v2016, %v3483
  %v3485 = vpop.f32.mrf.mxu0
  %v3486 = vadd.f32 %v2012, %v3485
  %v3487 = vpop.f32.mrf.mxu0
  %v3488 = vadd.f32 %v2016, %v3487
  %3489 = vmatprep.mubr.bf16.mxu0 %v1776
  %3490 = vmatmul.mubr.bf16.gmra.mxu0 %v1775
  %v3491 = vpop.f32.mrf.mxu0
  %v3492 = vadd.f32 %v2012, %v3491
  %v3493 = vpop.f32.mrf.mxu0
  %v3494 = vadd.f32 %v2016, %v3493
  %v3495 = vpop.f32.mrf.mxu0
  %v3496 = vadd.f32 %v2012, %v3495
  %v3497 = vpop.f32.mrf.mxu0
  %v3498 = vadd.f32 %v2016, %v3497
  %3499 = vmatprep.mubr.bf16.mxu0 %v1780
  %3500 = vmatmul.mubr.bf16.gmra.mxu0 %v1779
  %v3501 = vpop.f32.mrf.mxu0
  %v3502 = vadd.f32 %v2012, %v3501
  %v3503 = vpop.f32.mrf.mxu0
  %v3504 = vadd.f32 %v2016, %v3503
  %v3505 = vpop.f32.mrf.mxu0
  %v3506 = vadd.f32 %v2012, %v3505
  %v3507 = vpop.f32.mrf.mxu0
  %v3508 = vadd.f32 %v2016, %v3507
  %3509 = vmatprep.mubr.bf16.mxu0 %v1784
  %3510 = vmatmul.mubr.bf16.gmra.mxu0 %v1783
  %v3511 = vpop.f32.mrf.mxu0
  %v3512 = vadd.f32 %v2012, %v3511
  %v3513 = vpop.f32.mrf.mxu0
  %v3514 = vadd.f32 %v2016, %v3513
  %v3515 = vpop.f32.mrf.mxu0
  %v3516 = vadd.f32 %v2012, %v3515
  %v3517 = vpop.f32.mrf.mxu0
  %v3518 = vadd.f32 %v2016, %v3517
  %3519 = vmatprep.mubr.bf16.mxu0 %v1788
  %3520 = vmatmul.mubr.bf16.gmra.mxu0 %v1787
  %v3521 = vpop.f32.mrf.mxu0
  %v3522 = vadd.f32 %v2012, %v3521
  %v3523 = vpop.f32.mrf.mxu0
  %v3524 = vadd.f32 %v2016, %v3523
  %v3525 = vpop.f32.mrf.mxu0
  %v3526 = vadd.f32 %v2012, %v3525
  %v3527 = vpop.f32.mrf.mxu0
  %v3528 = vadd.f32 %v2016, %v3527
  %3529 = vmatprep.mubr.bf16.mxu0 %v1792
  %3530 = vmatmul.mubr.bf16.gmra.mxu0 %v1791
  %v3531 = vpop.f32.mrf.mxu0
  %v3532 = vadd.f32 %v2012, %v3531
  %v3533 = vpop.f32.mrf.mxu0
  %v3534 = vadd.f32 %v2016, %v3533
  %v3535 = vpop.f32.mrf.mxu0
  %v3536 = vadd.f32 %v2012, %v3535
  %v3537 = vpop.f32.mrf.mxu0
  %v3538 = vadd.f32 %v2016, %v3537
  %3539 = vmatprep.mubr.bf16.mxu0 %v1796
  %3540 = vmatmul.mubr.bf16.gmra.mxu0 %v1795
  %v3541 = vpop.f32.mrf.mxu0
  %v3542 = vadd.f32 %v2012, %v3541
  %v3543 = vpop.f32.mrf.mxu0
  %v3544 = vadd.f32 %v2016, %v3543
  %v3545 = vpop.f32.mrf.mxu0
  %v3546 = vadd.f32 %v2012, %v3545
  %v3547 = vpop.f32.mrf.mxu0
  %v3548 = vadd.f32 %v2016, %v3547
  %3549 = vmatprep.mubr.bf16.mxu0 %v1800
  %3550 = vmatmul.mubr.bf16.gmra.mxu0 %v1799
  %v3551 = vpop.f32.mrf.mxu0
  %v3552 = vadd.f32 %v2012, %v3551
  %v3553 = vpop.f32.mrf.mxu0
  %v3554 = vadd.f32 %v2016, %v3553
  %v3555 = vpop.f32.mrf.mxu0
  %v3556 = vadd.f32 %v2012, %v3555
  %v3557 = vpop.f32.mrf.mxu0
  %v3558 = vadd.f32 %v2016, %v3557
  %3559 = vmatprep.mubr.bf16.mxu0 %v1804
  %3560 = vmatmul.mubr.bf16.gmra.mxu0 %v1803
  %v3561 = vpop.f32.mrf.mxu0
  %v3562 = vadd.f32 %v2012, %v3561
  %v3563 = vpop.f32.mrf.mxu0
  %v3564 = vadd.f32 %v2016, %v3563
  %v3565 = vpop.f32.mrf.mxu0
  %v3566 = vadd.f32 %v2012, %v3565
  %v3567 = vpop.f32.mrf.mxu0
  %v3568 = vadd.f32 %v2016, %v3567
  %3569 = vdwg.mxu0
  %3570 = vmatprep.subr.bf16.mxu0 %v2748
  %3571 = vmatpush1.bf16.msra.mxu0 %v2747
  %3572 = vmatprep.subr.bf16.mxu0 %v2742
  %3573 = vmatpush1.bf16.msra.mxu0 %v2741
  %3574 = vmatprep.subr.bf16.mxu0 %v2736
  %3575 = vmatpush1.bf16.msra.mxu0 %v2735
  %3576 = vmatprep.subr.bf16.mxu0 %v2730
  %3577 = vmatpush1.bf16.msra.mxu0 %v2729
  %3578 = vmatprep.subr.bf16.mxu0 %v2724
  %3579 = vmatpush1.bf16.msra.mxu0 %v2723
  %3580 = vmatprep.subr.bf16.mxu0 %v2718
  %3581 = vmatpush1.bf16.msra.mxu0 %v2717
  %3582 = vmatprep.subr.bf16.mxu0 %v2712
  %3583 = vmatpush1.bf16.msra.mxu0 %v2711
  %3584 = vmatprep.subr.bf16.mxu0 %v2706
  %3585 = vmatpush1.bf16.msra.mxu0 %v2705
  %3586 = vmatprep.subr.bf16.mxu0 %v2796
  %3587 = vmatpush2.bf16.msra.mxu0 %v2795
  %3588 = vmatprep.subr.bf16.mxu0 %v2790
  %3589 = vmatpush2.bf16.msra.mxu0 %v2789
  %3590 = vmatprep.subr.bf16.mxu0 %v2784
  %3591 = vmatpush2.bf16.msra.mxu0 %v2783
  %3592 = vmatprep.subr.bf16.mxu0 %v2778
  %3593 = vmatpush2.bf16.msra.mxu0 %v2777
  %3594 = vmatprep.subr.bf16.mxu0 %v2772
  %3595 = vmatpush2.bf16.msra.mxu0 %v2771
  %3596 = vmatprep.subr.bf16.mxu0 %v2766
  %3597 = vmatpush2.bf16.msra.mxu0 %v2765
  %3598 = vmatprep.subr.bf16.mxu0 %v2760
  %3599 = vmatpush2.bf16.msra.mxu0 %v2759
  %3600 = vmatprep.subr.bf16.mxu0 %v2754
  %3601 = vmatpush2.bf16.msra.mxu0 %v2753
  %3602 = vmatprep.mubr.bf16.mxu0 %v1746
  %3603 = vmatmul.mubr.bf16.gmra.mxu0 %v1745
  %v3604 = vpop.f32.mrf.mxu0
  %v3605 = vadd.f32 %v3412, %v3604
  %v3606 = vpop.f32.mrf.mxu0
  %v3607 = vadd.f32 %v3414, %v3606
  %v3608 = vpop.f32.mrf.mxu0
  %v3609 = vadd.f32 %v3416, %v3608
  %v3610 = vpop.f32.mrf.mxu0
  %v3611 = vadd.f32 %v3418, %v3610
  %3612 = vmatprep.mubr.bf16.mxu0 %v1750
  %3613 = vmatmul.mubr.bf16.gmra.mxu0 %v1749
  %v3614 = vpop.f32.mrf.mxu0
  %v3615 = vadd.f32 %v3422, %v3614
  %v3616 = vpop.f32.mrf.mxu0
  %v3617 = vadd.f32 %v3424, %v3616
  %v3618 = vpop.f32.mrf.mxu0
  %v3619 = vadd.f32 %v3426, %v3618
  %v3620 = vpop.f32.mrf.mxu0
  %v3621 = vadd.f32 %v3428, %v3620
  %3622 = vmatprep.mubr.bf16.mxu0 %v1754
  %3623 = vmatmul.mubr.bf16.gmra.mxu0 %v1753
  %v3624 = vpop.f32.mrf.mxu0
  %v3625 = vadd.f32 %v3432, %v3624
  %v3626 = vpop.f32.mrf.mxu0
  %v3627 = vadd.f32 %v3434, %v3626
  %v3628 = vpop.f32.mrf.mxu0
  %v3629 = vadd.f32 %v3436, %v3628
  %v3630 = vpop.f32.mrf.mxu0
  %v3631 = vadd.f32 %v3438, %v3630
  %3632 = vmatprep.mubr.bf16.mxu0 %v1758
  %3633 = vmatmul.mubr.bf16.gmra.mxu0 %v1757
  %v3634 = vpop.f32.mrf.mxu0
  %v3635 = vadd.f32 %v3442, %v3634
  %v3636 = vpop.f32.mrf.mxu0
  %v3637 = vadd.f32 %v3444, %v3636
  %v3638 = vpop.f32.mrf.mxu0
  %v3639 = vadd.f32 %v3446, %v3638
  %v3640 = vpop.f32.mrf.mxu0
  %v3641 = vadd.f32 %v3448, %v3640
  %3642 = vmatprep.mubr.bf16.mxu0 %v1762
  %3643 = vmatmul.mubr.bf16.gmra.mxu0 %v1761
  %v3644 = vpop.f32.mrf.mxu0
  %v3645 = vadd.f32 %v3452, %v3644
  %v3646 = vpop.f32.mrf.mxu0
  %v3647 = vadd.f32 %v3454, %v3646
  %v3648 = vpop.f32.mrf.mxu0
  %v3649 = vadd.f32 %v3456, %v3648
  %v3650 = vpop.f32.mrf.mxu0
  %v3651 = vadd.f32 %v3458, %v3650
  %3652 = vmatprep.mubr.bf16.mxu0 %v1766
  %3653 = vmatmul.mubr.bf16.gmra.mxu0 %v1765
  %v3654 = vpop.f32.mrf.mxu0
  %v3655 = vadd.f32 %v3462, %v3654
  %v3656 = vpop.f32.mrf.mxu0
  %v3657 = vadd.f32 %v3464, %v3656
  %v3658 = vpop.f32.mrf.mxu0
  %v3659 = vadd.f32 %v3466, %v3658
  %v3660 = vpop.f32.mrf.mxu0
  %v3661 = vadd.f32 %v3468, %v3660
  %3662 = vmatprep.mubr.bf16.mxu0 %v1770
  %3663 = vmatmul.mubr.bf16.gmra.mxu0 %v1769
  %v3664 = vpop.f32.mrf.mxu0
  %v3665 = vadd.f32 %v3472, %v3664
  %v3666 = vpop.f32.mrf.mxu0
  %v3667 = vadd.f32 %v3474, %v3666
  %v3668 = vpop.f32.mrf.mxu0
  %v3669 = vadd.f32 %v3476, %v3668
  %v3670 = vpop.f32.mrf.mxu0
  %v3671 = vadd.f32 %v3478, %v3670
  %3672 = vmatprep.mubr.bf16.mxu0 %v1774
  %3673 = vmatmul.mubr.bf16.gmra.mxu0 %v1773
  %v3674 = vpop.f32.mrf.mxu0
  %v3675 = vadd.f32 %v3482, %v3674
  %v3676 = vpop.f32.mrf.mxu0
  %v3677 = vadd.f32 %v3484, %v3676
  %v3678 = vpop.f32.mrf.mxu0
  %v3679 = vadd.f32 %v3486, %v3678
  %v3680 = vpop.f32.mrf.mxu0
  %v3681 = vadd.f32 %v3488, %v3680
  %3682 = vmatprep.mubr.bf16.mxu0 %v1778
  %3683 = vmatmul.mubr.bf16.gmra.mxu0 %v1777
  %v3684 = vpop.f32.mrf.mxu0
  %v3685 = vadd.f32 %v3492, %v3684
  %v3686 = vpop.f32.mrf.mxu0
  %v3687 = vadd.f32 %v3494, %v3686
  %v3688 = vpop.f32.mrf.mxu0
  %v3689 = vadd.f32 %v3496, %v3688
  %v3690 = vpop.f32.mrf.mxu0
  %v3691 = vadd.f32 %v3498, %v3690
  %3692 = vmatprep.mubr.bf16.mxu0 %v1782
  %3693 = vmatmul.mubr.bf16.gmra.mxu0 %v1781
  %v3694 = vpop.f32.mrf.mxu0
  %v3695 = vadd.f32 %v3502, %v3694
  %v3696 = vpop.f32.mrf.mxu0
  %v3697 = vadd.f32 %v3504, %v3696
  %v3698 = vpop.f32.mrf.mxu0
  %v3699 = vadd.f32 %v3506, %v3698
  %v3700 = vpop.f32.mrf.mxu0
  %v3701 = vadd.f32 %v3508, %v3700
  %3702 = vmatprep.mubr.bf16.mxu0 %v1786
  %3703 = vmatmul.mubr.bf16.gmra.mxu0 %v1785
  %v3704 = vpop.f32.mrf.mxu0
  %v3705 = vadd.f32 %v3512, %v3704
  %v3706 = vpop.f32.mrf.mxu0
  %v3707 = vadd.f32 %v3514, %v3706
  %v3708 = vpop.f32.mrf.mxu0
  %v3709 = vadd.f32 %v3516, %v3708
  %v3710 = vpop.f32.mrf.mxu0
  %v3711 = vadd.f32 %v3518, %v3710
  %3712 = vmatprep.mubr.bf16.mxu0 %v1790
  %3713 = vmatmul.mubr.bf16.gmra.mxu0 %v1789
  %v3714 = vpop.f32.mrf.mxu0
  %v3715 = vadd.f32 %v3522, %v3714
  %v3716 = vpop.f32.mrf.mxu0
  %v3717 = vadd.f32 %v3524, %v3716
  %v3718 = vpop.f32.mrf.mxu0
  %v3719 = vadd.f32 %v3526, %v3718
  %v3720 = vpop.f32.mrf.mxu0
  %v3721 = vadd.f32 %v3528, %v3720
  %3722 = vmatprep.mubr.bf16.mxu0 %v1794
  %3723 = vmatmul.mubr.bf16.gmra.mxu0 %v1793
  %v3724 = vpop.f32.mrf.mxu0
  %v3725 = vadd.f32 %v3532, %v3724
  %v3726 = vpop.f32.mrf.mxu0
  %v3727 = vadd.f32 %v3534, %v3726
  %v3728 = vpop.f32.mrf.mxu0
  %v3729 = vadd.f32 %v3536, %v3728
  %v3730 = vpop.f32.mrf.mxu0
  %v3731 = vadd.f32 %v3538, %v3730
  %3732 = vmatprep.mubr.bf16.mxu0 %v1798
  %3733 = vmatmul.mubr.bf16.gmra.mxu0 %v1797
  %v3734 = vpop.f32.mrf.mxu0
  %v3735 = vadd.f32 %v3542, %v3734
  %v3736 = vpop.f32.mrf.mxu0
  %v3737 = vadd.f32 %v3544, %v3736
  %v3738 = vpop.f32.mrf.mxu0
  %v3739 = vadd.f32 %v3546, %v3738
  %v3740 = vpop.f32.mrf.mxu0
  %v3741 = vadd.f32 %v3548, %v3740
  %3742 = vmatprep.mubr.bf16.mxu0 %v1802
  %3743 = vmatmul.mubr.bf16.gmra.mxu0 %v1801
  %v3744 = vpop.f32.mrf.mxu0
  %v3745 = vadd.f32 %v3552, %v3744
  %v3746 = vpop.f32.mrf.mxu0
  %v3747 = vadd.f32 %v3554, %v3746
  %v3748 = vpop.f32.mrf.mxu0
  %v3749 = vadd.f32 %v3556, %v3748
  %v3750 = vpop.f32.mrf.mxu0
  %v3751 = vadd.f32 %v3558, %v3750
  %3752 = vmatprep.mubr.bf16.mxu0 %v1806
  %3753 = vmatmul.mubr.bf16.gmra.mxu0 %v1805
  %v3754 = vpop.f32.mrf.mxu0
  %v3755 = vadd.f32 %v3562, %v3754
  %v3756 = vpop.f32.mrf.mxu0
  %v3757 = vadd.f32 %v3564, %v3756
  %v3758 = vpop.f32.mrf.mxu0
  %v3759 = vadd.f32 %v3566, %v3758
  %v3760 = vpop.f32.mrf.mxu0
  %v3761 = vadd.f32 %v3568, %v3760
  %3762 = vdwg.mxu0
  %3763 = vmatprep.subr.bf16.mxu0 %v2654
  %3764 = vmatpush1.bf16.msra.mxu0 %v2653
  %3765 = vmatprep.subr.bf16.mxu0 %v2648
  %3766 = vmatpush1.bf16.msra.mxu0 %v2647
  %3767 = vmatprep.subr.bf16.mxu0 %v2642
  %3768 = vmatpush1.bf16.msra.mxu0 %v2641
  %3769 = vmatprep.subr.bf16.mxu0 %v2636
  %3770 = vmatpush1.bf16.msra.mxu0 %v2635
  %3771 = vmatprep.subr.bf16.mxu0 %v2630
  %3772 = vmatpush1.bf16.msra.mxu0 %v2629
  %3773 = vmatprep.subr.bf16.mxu0 %v2624
  %3774 = vmatpush1.bf16.msra.mxu0 %v2623
  %3775 = vmatprep.subr.bf16.mxu0 %v2618
  %3776 = vmatpush1.bf16.msra.mxu0 %v2617
  %3777 = vmatprep.subr.bf16.mxu0 %v2612
  %3778 = vmatpush1.bf16.msra.mxu0 %v2611
  %3779 = vmatprep.subr.bf16.mxu0 %v2702
  %3780 = vmatpush2.bf16.msra.mxu0 %v2701
  %3781 = vmatprep.subr.bf16.mxu0 %v2696
  %3782 = vmatpush2.bf16.msra.mxu0 %v2695
  %3783 = vmatprep.subr.bf16.mxu0 %v2690
  %3784 = vmatpush2.bf16.msra.mxu0 %v2689
  %3785 = vmatprep.subr.bf16.mxu0 %v2684
  %3786 = vmatpush2.bf16.msra.mxu0 %v2683
  %3787 = vmatprep.subr.bf16.mxu0 %v2678
  %3788 = vmatpush2.bf16.msra.mxu0 %v2677
  %3789 = vmatprep.subr.bf16.mxu0 %v2672
  %3790 = vmatpush2.bf16.msra.mxu0 %v2671
  %3791 = vmatprep.subr.bf16.mxu0 %v2666
  %3792 = vmatpush2.bf16.msra.mxu0 %v2665
  %3793 = vmatprep.subr.bf16.mxu0 %v2660
  %3794 = vmatpush2.bf16.msra.mxu0 %v2659
  %3795 = vmatprep.mubr.bf16.mxu0 %v1744
  %3796 = vmatmul.mubr.bf16.gmra.mxu0 %v1743
  %v3797 = vpop.f32.mrf.mxu0
  %v3798 = vadd.f32 %v2020, %v3797
  %v3799 = vpop.f32.mrf.mxu0
  %v3800 = vadd.f32 %v2024, %v3799
  %v3801 = vpop.f32.mrf.mxu0
  %v3802 = vadd.f32 %v2020, %v3801
  %v3803 = vpop.f32.mrf.mxu0
  %v3804 = vadd.f32 %v2024, %v3803
  %3805 = vmatprep.mubr.bf16.mxu0 %v1748
  %3806 = vmatmul.mubr.bf16.gmra.mxu0 %v1747
  %v3807 = vpop.f32.mrf.mxu0
  %v3808 = vadd.f32 %v2020, %v3807
  %v3809 = vpop.f32.mrf.mxu0
  %v3810 = vadd.f32 %v2024, %v3809
  %v3811 = vpop.f32.mrf.mxu0
  %v3812 = vadd.f32 %v2020, %v3811
  %v3813 = vpop.f32.mrf.mxu0
  %v3814 = vadd.f32 %v2024, %v3813
  %3815 = vmatprep.mubr.bf16.mxu0 %v1752
  %3816 = vmatmul.mubr.bf16.gmra.mxu0 %v1751
  %v3817 = vpop.f32.mrf.mxu0
  %v3818 = vadd.f32 %v2020, %v3817
  %v3819 = vpop.f32.mrf.mxu0
  %v3820 = vadd.f32 %v2024, %v3819
  %v3821 = vpop.f32.mrf.mxu0
  %v3822 = vadd.f32 %v2020, %v3821
  %v3823 = vpop.f32.mrf.mxu0
  %v3824 = vadd.f32 %v2024, %v3823
  %3825 = vmatprep.mubr.bf16.mxu0 %v1756
  %3826 = vmatmul.mubr.bf16.gmra.mxu0 %v1755
  %v3827 = vpop.f32.mrf.mxu0
  %v3828 = vadd.f32 %v2020, %v3827
  %v3829 = vpop.f32.mrf.mxu0
  %v3830 = vadd.f32 %v2024, %v3829
  %v3831 = vpop.f32.mrf.mxu0
  %v3832 = vadd.f32 %v2020, %v3831
  %v3833 = vpop.f32.mrf.mxu0
  %v3834 = vadd.f32 %v2024, %v3833
  %3835 = vmatprep.mubr.bf16.mxu0 %v1760
  %3836 = vmatmul.mubr.bf16.gmra.mxu0 %v1759
  %v3837 = vpop.f32.mrf.mxu0
  %v3838 = vadd.f32 %v2020, %v3837
  %v3839 = vpop.f32.mrf.mxu0
  %v3840 = vadd.f32 %v2024, %v3839
  %v3841 = vpop.f32.mrf.mxu0
  %v3842 = vadd.f32 %v2020, %v3841
  %v3843 = vpop.f32.mrf.mxu0
  %v3844 = vadd.f32 %v2024, %v3843
  %3845 = vmatprep.mubr.bf16.mxu0 %v1764
  %3846 = vmatmul.mubr.bf16.gmra.mxu0 %v1763
  %v3847 = vpop.f32.mrf.mxu0
  %v3848 = vadd.f32 %v2020, %v3847
  %v3849 = vpop.f32.mrf.mxu0
  %v3850 = vadd.f32 %v2024, %v3849
  %v3851 = vpop.f32.mrf.mxu0
  %v3852 = vadd.f32 %v2020, %v3851
  %v3853 = vpop.f32.mrf.mxu0
  %v3854 = vadd.f32 %v2024, %v3853
  %3855 = vmatprep.mubr.bf16.mxu0 %v1768
  %3856 = vmatmul.mubr.bf16.gmra.mxu0 %v1767
  %v3857 = vpop.f32.mrf.mxu0
  %v3858 = vadd.f32 %v2020, %v3857
  %v3859 = vpop.f32.mrf.mxu0
  %v3860 = vadd.f32 %v2024, %v3859
  %v3861 = vpop.f32.mrf.mxu0
  %v3862 = vadd.f32 %v2020, %v3861
  %v3863 = vpop.f32.mrf.mxu0
  %v3864 = vadd.f32 %v2024, %v3863
  %3865 = vmatprep.mubr.bf16.mxu0 %v1772
  %3866 = vmatmul.mubr.bf16.gmra.mxu0 %v1771
  %v3867 = vpop.f32.mrf.mxu0
  %v3868 = vadd.f32 %v2020, %v3867
  %v3869 = vpop.f32.mrf.mxu0
  %v3870 = vadd.f32 %v2024, %v3869
  %v3871 = vpop.f32.mrf.mxu0
  %v3872 = vadd.f32 %v2020, %v3871
  %v3873 = vpop.f32.mrf.mxu0
  %v3874 = vadd.f32 %v2024, %v3873
  %3875 = vmatprep.mubr.bf16.mxu0 %v1776
  %3876 = vmatmul.mubr.bf16.gmra.mxu0 %v1775
  %v3877 = vpop.f32.mrf.mxu0
  %v3878 = vadd.f32 %v2020, %v3877
  %v3879 = vpop.f32.mrf.mxu0
  %v3880 = vadd.f32 %v2024, %v3879
  %v3881 = vpop.f32.mrf.mxu0
  %v3882 = vadd.f32 %v2020, %v3881
  %v3883 = vpop.f32.mrf.mxu0
  %v3884 = vadd.f32 %v2024, %v3883
  %3885 = vmatprep.mubr.bf16.mxu0 %v1780
  %3886 = vmatmul.mubr.bf16.gmra.mxu0 %v1779
  %v3887 = vpop.f32.mrf.mxu0
  %v3888 = vadd.f32 %v2020, %v3887
  %v3889 = vpop.f32.mrf.mxu0
  %v3890 = vadd.f32 %v2024, %v3889
  %v3891 = vpop.f32.mrf.mxu0
  %v3892 = vadd.f32 %v2020, %v3891
  %v3893 = vpop.f32.mrf.mxu0
  %v3894 = vadd.f32 %v2024, %v3893
  %3895 = vmatprep.mubr.bf16.mxu0 %v1784
  %3896 = vmatmul.mubr.bf16.gmra.mxu0 %v1783
  %v3897 = vpop.f32.mrf.mxu0
  %v3898 = vadd.f32 %v2020, %v3897
  %v3899 = vpop.f32.mrf.mxu0
  %v3900 = vadd.f32 %v2024, %v3899
  %v3901 = vpop.f32.mrf.mxu0
  %v3902 = vadd.f32 %v2020, %v3901
  %v3903 = vpop.f32.mrf.mxu0
  %v3904 = vadd.f32 %v2024, %v3903
  %3905 = vmatprep.mubr.bf16.mxu0 %v1788
  %3906 = vmatmul.mubr.bf16.gmra.mxu0 %v1787
  %v3907 = vpop.f32.mrf.mxu0
  %v3908 = vadd.f32 %v2020, %v3907
  %v3909 = vpop.f32.mrf.mxu0
  %v3910 = vadd.f32 %v2024, %v3909
  %v3911 = vpop.f32.mrf.mxu0
  %v3912 = vadd.f32 %v2020, %v3911
  %v3913 = vpop.f32.mrf.mxu0
  %v3914 = vadd.f32 %v2024, %v3913
  %3915 = vmatprep.mubr.bf16.mxu0 %v1792
  %3916 = vmatmul.mubr.bf16.gmra.mxu0 %v1791
  %v3917 = vpop.f32.mrf.mxu0
  %v3918 = vadd.f32 %v2020, %v3917
  %v3919 = vpop.f32.mrf.mxu0
  %v3920 = vadd.f32 %v2024, %v3919
  %v3921 = vpop.f32.mrf.mxu0
  %v3922 = vadd.f32 %v2020, %v3921
  %v3923 = vpop.f32.mrf.mxu0
  %v3924 = vadd.f32 %v2024, %v3923
  %3925 = vmatprep.mubr.bf16.mxu0 %v1796
  %3926 = vmatmul.mubr.bf16.gmra.mxu0 %v1795
  %v3927 = vpop.f32.mrf.mxu0
  %v3928 = vadd.f32 %v2020, %v3927
  %v3929 = vpop.f32.mrf.mxu0
  %v3930 = vadd.f32 %v2024, %v3929
  %v3931 = vpop.f32.mrf.mxu0
  %v3932 = vadd.f32 %v2020, %v3931
  %v3933 = vpop.f32.mrf.mxu0
  %v3934 = vadd.f32 %v2024, %v3933
  %3935 = vmatprep.mubr.bf16.mxu0 %v1800
  %3936 = vmatmul.mubr.bf16.gmra.mxu0 %v1799
  %v3937 = vpop.f32.mrf.mxu0
  %v3938 = vadd.f32 %v2020, %v3937
  %v3939 = vpop.f32.mrf.mxu0
  %v3940 = vadd.f32 %v2024, %v3939
  %v3941 = vpop.f32.mrf.mxu0
  %v3942 = vadd.f32 %v2020, %v3941
  %v3943 = vpop.f32.mrf.mxu0
  %v3944 = vadd.f32 %v2024, %v3943
  %3945 = vmatprep.mubr.bf16.mxu0 %v1804
  %3946 = vmatmul.mubr.bf16.gmra.mxu0 %v1803
  %v3947 = vpop.f32.mrf.mxu0
  %v3948 = vadd.f32 %v2020, %v3947
  %v3949 = vpop.f32.mrf.mxu0
  %v3950 = vadd.f32 %v2024, %v3949
  %v3951 = vpop.f32.mrf.mxu0
  %v3952 = vadd.f32 %v2020, %v3951
  %v3953 = vpop.f32.mrf.mxu0
  %v3954 = vadd.f32 %v2024, %v3953
  %3955 = vdwg.mxu0
  %3956 = vmatprep.subr.bf16.mxu0 %v2750
  %3957 = vmatpush1.bf16.msra.mxu0 %v2749
  %3958 = vmatprep.subr.bf16.mxu0 %v2744
  %3959 = vmatpush1.bf16.msra.mxu0 %v2743
  %3960 = vmatprep.subr.bf16.mxu0 %v2738
  %3961 = vmatpush1.bf16.msra.mxu0 %v2737
  %3962 = vmatprep.subr.bf16.mxu0 %v2732
  %3963 = vmatpush1.bf16.msra.mxu0 %v2731
  %3964 = vmatprep.subr.bf16.mxu0 %v2726
  %3965 = vmatpush1.bf16.msra.mxu0 %v2725
  %3966 = vmatprep.subr.bf16.mxu0 %v2720
  %3967 = vmatpush1.bf16.msra.mxu0 %v2719
  %3968 = vmatprep.subr.bf16.mxu0 %v2714
  %3969 = vmatpush1.bf16.msra.mxu0 %v2713
  %3970 = vmatprep.subr.bf16.mxu0 %v2708
  %3971 = vmatpush1.bf16.msra.mxu0 %v2707
  %3972 = vmatprep.subr.bf16.mxu0 %v2798
  %3973 = vmatpush2.bf16.msra.mxu0 %v2797
  %3974 = vmatprep.subr.bf16.mxu0 %v2792
  %3975 = vmatpush2.bf16.msra.mxu0 %v2791
  %3976 = vmatprep.subr.bf16.mxu0 %v2786
  %3977 = vmatpush2.bf16.msra.mxu0 %v2785
  %3978 = vmatprep.subr.bf16.mxu0 %v2780
  %3979 = vmatpush2.bf16.msra.mxu0 %v2779
  %3980 = vmatprep.subr.bf16.mxu0 %v2774
  %3981 = vmatpush2.bf16.msra.mxu0 %v2773
  %3982 = vmatprep.subr.bf16.mxu0 %v2768
  %3983 = vmatpush2.bf16.msra.mxu0 %v2767
  %3984 = vmatprep.subr.bf16.mxu0 %v2762
  %3985 = vmatpush2.bf16.msra.mxu0 %v2761
  %3986 = vmatprep.subr.bf16.mxu0 %v2756
  %3987 = vmatpush2.bf16.msra.mxu0 %v2755
  %3988 = vmatprep.mubr.bf16.mxu0 %v1746
  %3989 = vmatmul.mubr.bf16.gmra.mxu0 %v1745
  %v3990 = vpop.f32.mrf.mxu0
  %v3991 = vadd.f32 %v3798, %v3990
  %v3992 = vpop.f32.mrf.mxu0
  %v3993 = vadd.f32 %v3800, %v3992
  %v3994 = vpop.f32.mrf.mxu0
  %v3995 = vadd.f32 %v3802, %v3994
  %v3996 = vpop.f32.mrf.mxu0
  %v3997 = vadd.f32 %v3804, %v3996
  %3998 = vmatprep.mubr.bf16.mxu0 %v1750
  %3999 = vmatmul.mubr.bf16.gmra.mxu0 %v1749
  %v4000 = vpop.f32.mrf.mxu0
  %v4001 = vadd.f32 %v3808, %v4000
  %v4002 = vpop.f32.mrf.mxu0
  %v4003 = vadd.f32 %v3810, %v4002
  %v4004 = vpop.f32.mrf.mxu0
  %v4005 = vadd.f32 %v3812, %v4004
  %v4006 = vpop.f32.mrf.mxu0
  %v4007 = vadd.f32 %v3814, %v4006
  %4008 = vmatprep.mubr.bf16.mxu0 %v1754
  %4009 = vmatmul.mubr.bf16.gmra.mxu0 %v1753
  %v4010 = vpop.f32.mrf.mxu0
  %v4011 = vadd.f32 %v3818, %v4010
  %v4012 = vpop.f32.mrf.mxu0
  %v4013 = vadd.f32 %v3820, %v4012
  %v4014 = vpop.f32.mrf.mxu0
  %v4015 = vadd.f32 %v3822, %v4014
  %v4016 = vpop.f32.mrf.mxu0
  %v4017 = vadd.f32 %v3824, %v4016
  %4018 = vmatprep.mubr.bf16.mxu0 %v1758
  %4019 = vmatmul.mubr.bf16.gmra.mxu0 %v1757
  %v4020 = vpop.f32.mrf.mxu0
  %v4021 = vadd.f32 %v3828, %v4020
  %v4022 = vpop.f32.mrf.mxu0
  %v4023 = vadd.f32 %v3830, %v4022
  %v4024 = vpop.f32.mrf.mxu0
  %v4025 = vadd.f32 %v3832, %v4024
  %v4026 = vpop.f32.mrf.mxu0
  %v4027 = vadd.f32 %v3834, %v4026
  %4028 = vmatprep.mubr.bf16.mxu0 %v1762
  %4029 = vmatmul.mubr.bf16.gmra.mxu0 %v1761
  %v4030 = vpop.f32.mrf.mxu0
  %v4031 = vadd.f32 %v3838, %v4030
  %v4032 = vpop.f32.mrf.mxu0
  %v4033 = vadd.f32 %v3840, %v4032
  %v4034 = vpop.f32.mrf.mxu0
  %v4035 = vadd.f32 %v3842, %v4034
  %v4036 = vpop.f32.mrf.mxu0
  %v4037 = vadd.f32 %v3844, %v4036
  %4038 = vmatprep.mubr.bf16.mxu0 %v1766
  %4039 = vmatmul.mubr.bf16.gmra.mxu0 %v1765
  %v4040 = vpop.f32.mrf.mxu0
  %v4041 = vadd.f32 %v3848, %v4040
  %v4042 = vpop.f32.mrf.mxu0
  %v4043 = vadd.f32 %v3850, %v4042
  %v4044 = vpop.f32.mrf.mxu0
  %v4045 = vadd.f32 %v3852, %v4044
  %v4046 = vpop.f32.mrf.mxu0
  %v4047 = vadd.f32 %v3854, %v4046
  %4048 = vmatprep.mubr.bf16.mxu0 %v1770
  %4049 = vmatmul.mubr.bf16.gmra.mxu0 %v1769
  %v4050 = vpop.f32.mrf.mxu0
  %v4051 = vadd.f32 %v3858, %v4050
  %v4052 = vpop.f32.mrf.mxu0
  %v4053 = vadd.f32 %v3860, %v4052
  %v4054 = vpop.f32.mrf.mxu0
  %v4055 = vadd.f32 %v3862, %v4054
  %v4056 = vpop.f32.mrf.mxu0
  %v4057 = vadd.f32 %v3864, %v4056
  %4058 = vmatprep.mubr.bf16.mxu0 %v1774
  %4059 = vmatmul.mubr.bf16.gmra.mxu0 %v1773
  %v4060 = vpop.f32.mrf.mxu0
  %v4061 = vadd.f32 %v3868, %v4060
  %v4062 = vpop.f32.mrf.mxu0
  %v4063 = vadd.f32 %v3870, %v4062
  %v4064 = vpop.f32.mrf.mxu0
  %v4065 = vadd.f32 %v3872, %v4064
  %v4066 = vpop.f32.mrf.mxu0
  %v4067 = vadd.f32 %v3874, %v4066
  %4068 = vmatprep.mubr.bf16.mxu0 %v1778
  %4069 = vmatmul.mubr.bf16.gmra.mxu0 %v1777
  %v4070 = vpop.f32.mrf.mxu0
  %v4071 = vadd.f32 %v3878, %v4070
  %v4072 = vpop.f32.mrf.mxu0
  %v4073 = vadd.f32 %v3880, %v4072
  %v4074 = vpop.f32.mrf.mxu0
  %v4075 = vadd.f32 %v3882, %v4074
  %v4076 = vpop.f32.mrf.mxu0
  %v4077 = vadd.f32 %v3884, %v4076
  %4078 = vmatprep.mubr.bf16.mxu0 %v1782
  %4079 = vmatmul.mubr.bf16.gmra.mxu0 %v1781
  %v4080 = vpop.f32.mrf.mxu0
  %v4081 = vadd.f32 %v3888, %v4080
  %v4082 = vpop.f32.mrf.mxu0
  %v4083 = vadd.f32 %v3890, %v4082
  %v4084 = vpop.f32.mrf.mxu0
  %v4085 = vadd.f32 %v3892, %v4084
  %v4086 = vpop.f32.mrf.mxu0
  %v4087 = vadd.f32 %v3894, %v4086
  %4088 = vmatprep.mubr.bf16.mxu0 %v1786
  %4089 = vmatmul.mubr.bf16.gmra.mxu0 %v1785
  %v4090 = vpop.f32.mrf.mxu0
  %v4091 = vadd.f32 %v3898, %v4090
  %v4092 = vpop.f32.mrf.mxu0
  %v4093 = vadd.f32 %v3900, %v4092
  %v4094 = vpop.f32.mrf.mxu0
  %v4095 = vadd.f32 %v3902, %v4094
  %v4096 = vpop.f32.mrf.mxu0
  %v4097 = vadd.f32 %v3904, %v4096
  %4098 = vmatprep.mubr.bf16.mxu0 %v1790
  %4099 = vmatmul.mubr.bf16.gmra.mxu0 %v1789
  %v4100 = vpop.f32.mrf.mxu0
  %v4101 = vadd.f32 %v3908, %v4100
  %v4102 = vpop.f32.mrf.mxu0
  %v4103 = vadd.f32 %v3910, %v4102
  %v4104 = vpop.f32.mrf.mxu0
  %v4105 = vadd.f32 %v3912, %v4104
  %v4106 = vpop.f32.mrf.mxu0
  %v4107 = vadd.f32 %v3914, %v4106
  %4108 = vmatprep.mubr.bf16.mxu0 %v1794
  %4109 = vmatmul.mubr.bf16.gmra.mxu0 %v1793
  %v4110 = vpop.f32.mrf.mxu0
  %v4111 = vadd.f32 %v3918, %v4110
  %v4112 = vpop.f32.mrf.mxu0
  %v4113 = vadd.f32 %v3920, %v4112
  %v4114 = vpop.f32.mrf.mxu0
  %v4115 = vadd.f32 %v3922, %v4114
  %v4116 = vpop.f32.mrf.mxu0
  %v4117 = vadd.f32 %v3924, %v4116
  %4118 = vmatprep.mubr.bf16.mxu0 %v1798
  %4119 = vmatmul.mubr.bf16.gmra.mxu0 %v1797
  %v4120 = vpop.f32.mrf.mxu0
  %v4121 = vadd.f32 %v3928, %v4120
  %v4122 = vpop.f32.mrf.mxu0
  %v4123 = vadd.f32 %v3930, %v4122
  %v4124 = vpop.f32.mrf.mxu0
  %v4125 = vadd.f32 %v3932, %v4124
  %v4126 = vpop.f32.mrf.mxu0
  %v4127 = vadd.f32 %v3934, %v4126
  %4128 = vmatprep.mubr.bf16.mxu0 %v1802
  %4129 = vmatmul.mubr.bf16.gmra.mxu0 %v1801
  %v4130 = vpop.f32.mrf.mxu0
  %v4131 = vadd.f32 %v3938, %v4130
  %v4132 = vpop.f32.mrf.mxu0
  %v4133 = vadd.f32 %v3940, %v4132
  %v4134 = vpop.f32.mrf.mxu0
  %v4135 = vadd.f32 %v3942, %v4134
  %v4136 = vpop.f32.mrf.mxu0
  %v4137 = vadd.f32 %v3944, %v4136
  %4138 = vmatprep.mubr.bf16.mxu0 %v1806
  %4139 = vmatmul.mubr.bf16.gmra.mxu0 %v1805
  %v4140 = vpop.f32.mrf.mxu0
  %v4141 = vadd.f32 %v3948, %v4140
  %v4142 = vpop.f32.mrf.mxu0
  %v4143 = vadd.f32 %v3950, %v4142
  %v4144 = vpop.f32.mrf.mxu0
  %v4145 = vadd.f32 %v3952, %v4144
  %v4146 = vpop.f32.mrf.mxu0
  %v4147 = vadd.f32 %v3954, %v4146
  %4148 = vdwg.mxu0
  %4149 = vst [vmem:[%s9] sm:$0xff] %v3219
  %4150 = vst [vmem:[%s9 + $0x8] sm:$0xff] %v3221
  %4151 = vst [vmem:[%s9 + $0x10] sm:$0xff] %v3605
  %4152 = vst [vmem:[%s9 + $0x18] sm:$0xff] %v3607
  %4153 = vst [vmem:[%s9 + $0x20] sm:$0xff] %v3991
  %4154 = vst [vmem:[%s9 + $0x28] sm:$0xff] %v3993
  %4155 = vst [vmem:[%s9 + $0x30] sm:$0xff] %v3223
  %4156 = vst [vmem:[%s9 + $0x38] sm:$0xff] %v3225
  %4157 = vst [vmem:[%s9 + $0x40] sm:$0xff] %v3609
  %4158 = vst [vmem:[%s9 + $0x48] sm:$0xff] %v3611
  %4159 = vst [vmem:[%s9 + $0x50] sm:$0xff] %v3995
  %4160 = vst [vmem:[%s9 + $0x58] sm:$0xff] %v3997
  %4161 = vst [vmem:[%s9 + $0x60] sm:$0xff] %v3229
  %4162 = vst [vmem:[%s9 + $0x68] sm:$0xff] %v3231
  %4163 = vst [vmem:[%s9 + $0x70] sm:$0xff] %v3615
  %4164 = vst [vmem:[%s9 + $0x78] sm:$0xff] %v3617
  %4165 = vst [vmem:[%s9 + $0x80] sm:$0xff] %v4001
  %4166 = vst [vmem:[%s9 + $0x88] sm:$0xff] %v4003
  %4167 = vst [vmem:[%s9 + $0x90] sm:$0xff] %v3233
  %4168 = vst [vmem:[%s9 + $0x98] sm:$0xff] %v3235
  %4169 = vst [vmem:[%s9 + $0xa0] sm:$0xff] %v3619
  %4170 = vst [vmem:[%s9 + $0xa8] sm:$0xff] %v3621
  %4171 = vst [vmem:[%s9 + $0xb0] sm:$0xff] %v4005
  %4172 = vst [vmem:[%s9 + $0xb8] sm:$0xff] %v4007
  %4173 = vst [vmem:[%s9 + $0xc0] sm:$0xff] %v3239
  %4174 = vst [vmem:[%s9 + $0xc8] sm:$0xff] %v3241
  %4175 = vst [vmem:[%s9 + $0xd0] sm:$0xff] %v3625
  %4176 = vst [vmem:[%s9 + $0xd8] sm:$0xff] %v3627
  %4177 = vst [vmem:[%s9 + $0xe0] sm:$0xff] %v4011
  %4178 = vst [vmem:[%s9 + $0xe8] sm:$0xff] %v4013
  %4179 = vst [vmem:[%s9 + $0xf0] sm:$0xff] %v3243
  %4180 = vst [vmem:[%s9 + $0xf8] sm:$0xff] %v3245
  %4181 = vst [vmem:[%s9 + $0x100] sm:$0xff] %v3629
  %4182 = vst [vmem:[%s9 + $0x108] sm:$0xff] %v3631
  %4183 = vst [vmem:[%s9 + $0x110] sm:$0xff] %v4015
  %4184 = vst [vmem:[%s9 + $0x118] sm:$0xff] %v4017
  %4185 = vst [vmem:[%s9 + $0x120] sm:$0xff] %v3249
  %4186 = vst [vmem:[%s9 + $0x128] sm:$0xff] %v3251
  %4187 = vst [vmem:[%s9 + $0x130] sm:$0xff] %v3635
  %4188 = vst [vmem:[%s9 + $0x138] sm:$0xff] %v3637
  %4189 = vst [vmem:[%s9 + $0x140] sm:$0xff] %v4021
  %4190 = vst [vmem:[%s9 + $0x148] sm:$0xff] %v4023
  %4191 = vst [vmem:[%s9 + $0x150] sm:$0xff] %v3253
  %4192 = vst [vmem:[%s9 + $0x158] sm:$0xff] %v3255
  %4193 = vst [vmem:[%s9 + $0x160] sm:$0xff] %v3639
  %4194 = vst [vmem:[%s9 + $0x168] sm:$0xff] %v3641
  %4195 = vst [vmem:[%s9 + $0x170] sm:$0xff] %v4025
  %4196 = vst [vmem:[%s9 + $0x178] sm:$0xff] %v4027
  %4197 = vst [vmem:[%s9 + $0x180] sm:$0xff] %v3259
  %4198 = vst [vmem:[%s9 + $0x188] sm:$0xff] %v3261
  %4199 = vst [vmem:[%s9 + $0x190] sm:$0xff] %v3645
  %4200 = vst [vmem:[%s9 + $0x198] sm:$0xff] %v3647
  %4201 = vst [vmem:[%s9 + $0x1a0] sm:$0xff] %v4031
  %4202 = vst [vmem:[%s9 + $0x1a8] sm:$0xff] %v4033
  %4203 = vst [vmem:[%s9 + $0x1b0] sm:$0xff] %v3263
  %4204 = vst [vmem:[%s9 + $0x1b8] sm:$0xff] %v3265
  %4205 = vst [vmem:[%s9 + $0x1c0] sm:$0xff] %v3649
  %4206 = vst [vmem:[%s9 + $0x1c8] sm:$0xff] %v3651
  %4207 = vst [vmem:[%s9 + $0x1d0] sm:$0xff] %v4035
  %4208 = vst [vmem:[%s9 + $0x1d8] sm:$0xff] %v4037
  %4209 = vst [vmem:[%s9 + $0x1e0] sm:$0xff] %v3269
  %4210 = vst [vmem:[%s9 + $0x1e8] sm:$0xff] %v3271
  %4211 = vst [vmem:[%s9 + $0x1f0] sm:$0xff] %v3655
  %4212 = vst [vmem:[%s9 + $0x1f8] sm:$0xff] %v3657
  %4213 = vst [vmem:[%s9 + $0x200] sm:$0xff] %v4041
  %4214 = vst [vmem:[%s9 + $0x208] sm:$0xff] %v4043
  %4215 = vst [vmem:[%s9 + $0x210] sm:$0xff] %v3273
  %4216 = vst [vmem:[%s9 + $0x218] sm:$0xff] %v3275
  %4217 = vst [vmem:[%s9 + $0x220] sm:$0xff] %v3659
  %4218 = vst [vmem:[%s9 + $0x228] sm:$0xff] %v3661
  %4219 = vst [vmem:[%s9 + $0x230] sm:$0xff] %v4045
  %4220 = vst [vmem:[%s9 + $0x238] sm:$0xff] %v4047
  %4221 = vst [vmem:[%s9 + $0x240] sm:$0xff] %v3279
  %4222 = vst [vmem:[%s9 + $0x248] sm:$0xff] %v3281
  %4223 = vst [vmem:[%s9 + $0x250] sm:$0xff] %v3665
  %4224 = vst [vmem:[%s9 + $0x258] sm:$0xff] %v3667
  %4225 = vst [vmem:[%s9 + $0x260] sm:$0xff] %v4051
  %4226 = vst [vmem:[%s9 + $0x268] sm:$0xff] %v4053
  %4227 = vst [vmem:[%s9 + $0x270] sm:$0xff] %v3283
  %4228 = vst [vmem:[%s9 + $0x278] sm:$0xff] %v3285
  %4229 = vst [vmem:[%s9 + $0x280] sm:$0xff] %v3669
  %4230 = vst [vmem:[%s9 + $0x288] sm:$0xff] %v3671
  %4231 = vst [vmem:[%s9 + $0x290] sm:$0xff] %v4055
  %4232 = vst [vmem:[%s9 + $0x298] sm:$0xff] %v4057
  %4233 = vst [vmem:[%s9 + $0x2a0] sm:$0xff] %v3289
  %4234 = vst [vmem:[%s9 + $0x2a8] sm:$0xff] %v3291
  %4235 = vst [vmem:[%s9 + $0x2b0] sm:$0xff] %v3675
  %4236 = vst [vmem:[%s9 + $0x2b8] sm:$0xff] %v3677
  %4237 = vst [vmem:[%s9 + $0x2c0] sm:$0xff] %v4061
  %4238 = vst [vmem:[%s9 + $0x2c8] sm:$0xff] %v4063
  %4239 = vst [vmem:[%s9 + $0x2d0] sm:$0xff] %v3293
  %4240 = vst [vmem:[%s9 + $0x2d8] sm:$0xff] %v3295
  %4241 = vst [vmem:[%s9 + $0x2e0] sm:$0xff] %v3679
  %4242 = vst [vmem:[%s9 + $0x2e8] sm:$0xff] %v3681
  %4243 = vst [vmem:[%s9 + $0x2f0] sm:$0xff] %v4065
  %4244 = vst [vmem:[%s9 + $0x2f8] sm:$0xff] %v4067
  %4245 = vst [vmem:[%s9 + $0x300] sm:$0xff] %v3299
  %4246 = vst [vmem:[%s9 + $0x308] sm:$0xff] %v3301
  %4247 = vst [vmem:[%s9 + $0x310] sm:$0xff] %v3685
  %4248 = vst [vmem:[%s9 + $0x318] sm:$0xff] %v3687
  %4249 = vst [vmem:[%s9 + $0x320] sm:$0xff] %v4071
  %4250 = vst [vmem:[%s9 + $0x328] sm:$0xff] %v4073
  %4251 = vst [vmem:[%s9 + $0x330] sm:$0xff] %v3303
  %4252 = vst [vmem:[%s9 + $0x338] sm:$0xff] %v3305
  %4253 = vst [vmem:[%s9 + $0x340] sm:$0xff] %v3689
  %4254 = vst [vmem:[%s9 + $0x348] sm:$0xff] %v3691
  %4255 = vst [vmem:[%s9 + $0x350] sm:$0xff] %v4075
  %4256 = vst [vmem:[%s9 + $0x358] sm:$0xff] %v4077
  %4257 = vst [vmem:[%s9 + $0x360] sm:$0xff] %v3309
  %4258 = vst [vmem:[%s9 + $0x368] sm:$0xff] %v3311
  %4259 = vst [vmem:[%s9 + $0x370] sm:$0xff] %v3695
  %4260 = vst [vmem:[%s9 + $0x378] sm:$0xff] %v3697
  %4261 = vst [vmem:[%s9 + $0x380] sm:$0xff] %v4081
  %4262 = vst [vmem:[%s9 + $0x388] sm:$0xff] %v4083
  %4263 = vst [vmem:[%s9 + $0x390] sm:$0xff] %v3313
  %4264 = vst [vmem:[%s9 + $0x398] sm:$0xff] %v3315
  %4265 = vst [vmem:[%s9 + $0x3a0] sm:$0xff] %v3699
  %4266 = vst [vmem:[%s9 + $0x3a8] sm:$0xff] %v3701
  %4267 = vst [vmem:[%s9 + $0x3b0] sm:$0xff] %v4085
  %4268 = vst [vmem:[%s9 + $0x3b8] sm:$0xff] %v4087
  %4269 = vst [vmem:[%s9 + $0x3c0] sm:$0xff] %v3319
  %4270 = vst [vmem:[%s9 + $0x3c8] sm:$0xff] %v3321
  %4271 = vst [vmem:[%s9 + $0x3d0] sm:$0xff] %v3705
  %4272 = vst [vmem:[%s9 + $0x3d8] sm:$0xff] %v3707
  %4273 = vst [vmem:[%s9 + $0x3e0] sm:$0xff] %v4091
  %4274 = vst [vmem:[%s9 + $0x3e8] sm:$0xff] %v4093
  %4275 = vst [vmem:[%s9 + $0x3f0] sm:$0xff] %v3323
  %4276 = vst [vmem:[%s9 + $0x3f8] sm:$0xff] %v3325
  %4277 = vst [vmem:[%s9 + $0x400] sm:$0xff] %v3709
  %4278 = vst [vmem:[%s9 + $0x408] sm:$0xff] %v3711
  %4279 = vst [vmem:[%s9 + $0x410] sm:$0xff] %v4095
  %4280 = vst [vmem:[%s9 + $0x418] sm:$0xff] %v4097
  %4281 = vst [vmem:[%s9 + $0x420] sm:$0xff] %v3329
  %4282 = vst [vmem:[%s9 + $0x428] sm:$0xff] %v3331
  %4283 = vst [vmem:[%s9 + $0x430] sm:$0xff] %v3715
  %4284 = vst [vmem:[%s9 + $0x438] sm:$0xff] %v3717
  %4285 = vst [vmem:[%s9 + $0x440] sm:$0xff] %v4101
  %4286 = vst [vmem:[%s9 + $0x448] sm:$0xff] %v4103
  %4287 = vst [vmem:[%s9 + $0x450] sm:$0xff] %v3333
  %4288 = vst [vmem:[%s9 + $0x458] sm:$0xff] %v3335
  %4289 = vst [vmem:[%s9 + $0x460] sm:$0xff] %v3719
  %4290 = vst [vmem:[%s9 + $0x468] sm:$0xff] %v3721
  %4291 = vst [vmem:[%s9 + $0x470] sm:$0xff] %v4105
  %4292 = vst [vmem:[%s9 + $0x478] sm:$0xff] %v4107
  %4293 = vst [vmem:[%s9 + $0x480] sm:$0xff] %v3339
  %4294 = vst [vmem:[%s9 + $0x488] sm:$0xff] %v3341
  %4295 = vst [vmem:[%s9 + $0x490] sm:$0xff] %v3725
  %4296 = vst [vmem:[%s9 + $0x498] sm:$0xff] %v3727
  %4297 = vst [vmem:[%s9 + $0x4a0] sm:$0xff] %v4111
  %4298 = vst [vmem:[%s9 + $0x4a8] sm:$0xff] %v4113
  %4299 = vst [vmem:[%s9 + $0x4b0] sm:$0xff] %v3343
  %4300 = vst [vmem:[%s9 + $0x4b8] sm:$0xff] %v3345
  %4301 = vst [vmem:[%s9 + $0x4c0] sm:$0xff] %v3729
  %4302 = vst [vmem:[%s9 + $0x4c8] sm:$0xff] %v3731
  %4303 = vst [vmem:[%s9 + $0x4d0] sm:$0xff] %v4115
  %4304 = vst [vmem:[%s9 + $0x4d8] sm:$0xff] %v4117
  %4305 = vst [vmem:[%s9 + $0x4e0] sm:$0xff] %v3349
  %4306 = vst [vmem:[%s9 + $0x4e8] sm:$0xff] %v3351
  %4307 = vst [vmem:[%s9 + $0x4f0] sm:$0xff] %v3735
  %4308 = vst [vmem:[%s9 + $0x4f8] sm:$0xff] %v3737
  %4309 = vst [vmem:[%s9 + $0x500] sm:$0xff] %v4121
  %4310 = vst [vmem:[%s9 + $0x508] sm:$0xff] %v4123
  %4311 = vst [vmem:[%s9 + $0x510] sm:$0xff] %v3353
  %4312 = vst [vmem:[%s9 + $0x518] sm:$0xff] %v3355
  %4313 = vst [vmem:[%s9 + $0x520] sm:$0xff] %v3739
  %4314 = vst [vmem:[%s9 + $0x528] sm:$0xff] %v3741
  %4315 = vst [vmem:[%s9 + $0x530] sm:$0xff] %v4125
  %4316 = vst [vmem:[%s9 + $0x538] sm:$0xff] %v4127
  %4317 = vst [vmem:[%s9 + $0x540] sm:$0xff] %v3359
  %4318 = vst [vmem:[%s9 + $0x548] sm:$0xff] %v3361
  %4319 = vst [vmem:[%s9 + $0x550] sm:$0xff] %v3745
  %4320 = vst [vmem:[%s9 + $0x558] sm:$0xff] %v3747
  %4321 = vst [vmem:[%s9 + $0x560] sm:$0xff] %v4131
  %4322 = vst [vmem:[%s9 + $0x568] sm:$0xff] %v4133
  %4323 = vst [vmem:[%s9 + $0x570] sm:$0xff] %v3363
  %4324 = vst [vmem:[%s9 + $0x578] sm:$0xff] %v3365
  %4325 = vst [vmem:[%s9 + $0x580] sm:$0xff] %v3749
  %4326 = vst [vmem:[%s9 + $0x588] sm:$0xff] %v3751
  %4327 = vst [vmem:[%s9 + $0x590] sm:$0xff] %v4135
  %4328 = vst [vmem:[%s9 + $0x598] sm:$0xff] %v4137
  %4329 = vst [vmem:[%s9 + $0x5a0] sm:$0xff] %v3369
  %4330 = vst [vmem:[%s9 + $0x5a8] sm:$0xff] %v3371
  %4331 = vst [vmem:[%s9 + $0x5b0] sm:$0xff] %v3755
  %4332 = vst [vmem:[%s9 + $0x5b8] sm:$0xff] %v3757
  %4333 = vst [vmem:[%s9 + $0x5c0] sm:$0xff] %v4141
  %4334 = vst [vmem:[%s9 + $0x5c8] sm:$0xff] %v4143
  %4335 = vst [vmem:[%s9 + $0x5d0] sm:$0xff] %v3373
  %4336 = vst [vmem:[%s9 + $0x5d8] sm:$0xff] %v3375
  %4337 = vst [vmem:[%s9 + $0x5e0] sm:$0xff] %v3759
  %4338 = vst [vmem:[%s9 + $0x5e8] sm:$0xff] %v3761
  %4339 = vst [vmem:[%s9 + $0x5f0] sm:$0xff] %v4145
  %4340 = vst [vmem:[%s9 + $0x5f8] sm:$0xff] %v4147
  // Predicated region
  $region38: #{semantic_decoder.1} parent=0 // pred_check
    _
  $region39: #{semantic_decoder.1} parent=0 // pred_check_branch
    %4342 = sbr.rel (0) target = $region41
  $region40: #{semantic_decoder.1} parent=0 // pred_region
    _
  $region41: #{semantic_decoder.1} parent=0 // pred_fallthru
    _
  // Predicated region
  $region42: #{semantic_decoder.1} parent=0 // pred_check
    _
  $region43: #{semantic_decoder.1} parent=0 // pred_check_branch
    %4344 = sbr.rel (0) target = $region45
  $region44: #{semantic_decoder.1} parent=0 // pred_region
    _
  $region45: #{semantic_decoder.1} parent=0 // pred_fallthru
    _

</llo_original>
